<compile_context>
chip_gen: v6e
topology: v6e:2x2x1
jax: 0.10.0
libtpu: 0.0.40
codegen_flags: <defaults>
</compile_context>

<pallas_src>
import functools
import random

import numpy as np
import jax
import jax.numpy as jnp
from jax.experimental import pallas as pl
from jax.experimental.pallas import tpu as pltpu

# op codes dispatched (vectorized) inside the kernel
_CODE_PASSTHROUGH = 0   # identity and real_jpeg (see TODO in the wrapper)
_CODE_LINEAR = 1        # blur or scale_crop (two separable per-image matmuls)
_CODE_NOISE = 2         # x + 0.01 * N(0,1), clamped to [0, 1]
_CODE_DEEPFAKE = 3      # overwrite a random box with U[0, 1)

_TB = 8                 # images per grid step (TB*C rows per tile; 8*3=24 is 8-divisible)


# --------------------------------------------------------------------------- #
# Host-side construction of the tiny (size x size) 1-D operators (numpy)
# --------------------------------------------------------------------------- #
def _gaussian_1d(sigma=1.0, ksize=3):
    xs = np.arange(ksize, dtype=np.float64) - (ksize - 1) / 2.0
    k = np.exp(-(xs ** 2) / (2.0 * sigma ** 2))
    return k / k.sum()


def _reflect_indices(idx, n):
    idx = np.where(idx < 0, -idx, idx)
    idx = np.where(idx >= n, 2 * (n - 1) - idx, idx)
    return idx


def _blur_1d_operator(n, sigma=1.0, ksize=3):
    """(n, n) operator: 1-D Gaussian blur with reflect padding (torchvision semantics)."""
    k = _gaussian_1d(sigma, ksize)
    half = (ksize - 1) // 2
    M = np.zeros((n, n), np.float64)
    for i in range(n):
        for t in range(ksize):
            j = i + t - half
            if j < 0:
                j = -j
            elif j >= n:
                j = 2 * (n - 1) - j
            M[i, j] += k[t]
    return M.astype(np.float32)


def _resize_1d_operator(out_size, in_size):
    """(out, in) PyTorch bilinear resize matrix, align_corners=False."""
    i = np.arange(out_size, dtype=np.float64)
    src = (i + 0.5) * (in_size / out_size) - 0.5
    src = np.maximum(src, 0.0)
    lo = np.minimum(np.floor(src).astype(np.int64), in_size - 1)
    hi = np.minimum(lo + 1, in_size - 1)
    frac = src - lo
    M = np.zeros((out_size, in_size), np.float64)
    M[np.arange(out_size), lo] += 1.0 - frac
    M[np.arange(out_size), hi] += frac
    return M.astype(np.float32)


def _scale_crop_1d_operator(scale, size):
    """(size, size) operator: bilinear resize to int(size*scale), then center-crop
    (scale >= 1) or reflect-pad (scale < 1) back to `size` (torch reference semantics)."""
    t = int(size * scale)
    R = _resize_1d_operator(t, size)
    if t >= size:
        start = (t - size) // 2
        return R[start:start + size]
    pad = size - t
    p_lo = pad // 2
    rows = _reflect_indices(np.arange(size) - p_lo, t)
    return R[rows]


# --------------------------------------------------------------------------- #
# The fused Pallas kernel (one grid step = TB images = TB*C channel-rows)
# --------------------------------------------------------------------------- #
def _mixed_noise_kernel(x_ref, code_ref, aux_ref, rowm_ref, colT_ref, o_ref, *, H, W):
    HW = H * W
    x = x_ref[...].astype(jnp.float32)          # (N, HW)  lane-dense channel-rows
    code = code_ref[...]                        # (N, 1)   int32 per-row op code
    aux = aux_ref[...].astype(jnp.float32)      # (N, HW)  noise / deepfake randoms
    n = x.shape[0]

    # ---- blur / scale_crop: two separable per-image matmuls on the MXU.
    # Computed for the whole block unconditionally (negligible vs. the block's DMA at
    # 16x16); rows whose op is not LINEAR are masked out by the final select below.
    x3 = x.reshape(n, H, W)
    t = jnp.einsum('nhq,nqj->nhj', x3, colT_ref[...].astype(jnp.float32),
                   preferred_element_type=jnp.float32)                   # col op
    y3 = jnp.einsum('nip,npj->nij', rowm_ref[...].astype(jnp.float32), t,
                    preferred_element_type=jnp.float32)                  # row op
    y_linear = y3.reshape(n, HW)

    # ---- noise: x + 0.01 * N(0,1), clamped to [0,1] (aux holds N(0,1) for these rows)
    y_noise = jnp.clip(x + jnp.float32(0.01) * aux, 0.0, 1.0)

    # ---- deepfake: aux holds U[0,1) inside the random box and -1.0 outside it
    y_deepfake = jnp.where(aux >= jnp.float32(0.0), aux, x)

    # ---- branch-free per-row select, single full-tile store
    out = x                                                      # identity / real_jpeg
    out = jnp.where(code == _CODE_LINEAR, y_linear, out)
    out = jnp.where(code == _CODE_NOISE, y_noise, out)
    out = jnp.where(code == _CODE_DEEPFAKE, y_deepfake, out)
    o_ref[...] = out.astype(o_ref.dtype)


@functools.partial(jax.jit, static_argnames=("tb",))
def _mixed_noise_apply(x, codes, boxes, rowm, colT, key, *, tb=_TB):
    """x: (B,C,H,W) f32; codes: (B,) int32; boxes: (B,4) int32 (top,left,h,w);
    rowm: (B*C,H,H) per-channel-row row operator; colT: (B*C,W,W) transposed col operator."""
    B, C, H, W = x.shape
    HW = H * W
    nblk = -(-B // tb)
    rows = nblk * tb * C
    blk_rows = tb * C

    # -- randomness outside the kernel (true torch.randn/torch.rand semantics; the
    #    TPU-only in-kernel PRNG primitives do not lower on every backend).
    k_n, k_u = jax.random.split(key)
    normal = jax.random.normal(k_n, (B, C, H, W), jnp.float32)
    unif = jax.random.uniform(k_u, (B, C, H, W), jnp.float32)

    # -- fold the deepfake box into the aux array: U[0,1) inside the box, -1.0 outside.
    rr = jnp.arange(H, dtype=jnp.int32)[None, :, None]
    cc = jnp.arange(W, dtype=jnp.int32)[None, None, :]
    top, left = boxes[:, 0][:, None, None], boxes[:, 1][:, None, None]
    bh, bw = boxes[:, 2][:, None, None], boxes[:, 3][:, None, None]
    in_box = (rr >= top) & (rr < top + bh) & (cc >= left) & (cc < left + bw)   # (B,H,W)
    df_aux = jnp.where(in_box[:, None], unif, jnp.float32(-1.0))               # (B,C,H,W)
    is_noise = (codes == _CODE_NOISE)[:, None, None, None]
    is_df = (codes == _CODE_DEEPFAKE)[:, None, None, None]
    aux = jnp.where(is_noise, normal, jnp.where(is_df, df_aux, jnp.float32(0.0)))

    # -- flatten to lane-dense channel-rows and pad the batch to a multiple of tb.
    x_rows = x.reshape(B * C, HW)
    aux_rows = aux.reshape(B * C, HW)
    code_rows = jnp.repeat(codes.astype(jnp.int32), C)[:, None]                # (B*C, 1)
    pad = rows - B * C
    if pad:
        x_rows = jnp.pad(x_rows, ((0, pad), (0, 0)))
        aux_rows = jnp.pad(aux_rows, ((0, pad), (0, 0)))
        code_rows = jnp.pad(code_rows, ((0, pad), (0, 0)))   # code 0 == passthrough
        rowm = jnp.pad(rowm, ((0, pad), (0, 0), (0, 0)))
        colT = jnp.pad(colT, ((0, pad), (0, 0), (0, 0)))

    kernel = functools.partial(_mixed_noise_kernel, H=H, W=W)
    out_rows = pl.pallas_call(
        kernel,
        out_shape=jax.ShapeDtypeStruct((rows, HW), x.dtype),
        grid=(nblk,),
        in_specs=[
            pl.BlockSpec((blk_rows, HW), lambda i: (i, 0)),       # x
            pl.BlockSpec((blk_rows, 1), lambda i: (i, 0)),        # per-row op code
            pl.BlockSpec((blk_rows, HW), lambda i: (i, 0)),       # aux randoms
            pl.BlockSpec((blk_rows, H, H), lambda i: (i, 0, 0)),  # row operators
            pl.BlockSpec((blk_rows, W, W), lambda i: (i, 0, 0)),  # col operators (T)
        ],
        out_specs=pl.BlockSpec((blk_rows, HW), lambda i: (i, 0)),
        compiler_params=pltpu.CompilerParams(
            # Independent batch blocks; on v7x use pltpu.CORE_PARALLEL here to shard the
            # batch axis across both TensorCores.
            dimension_semantics=("parallel",)),
    )(x_rows, code_rows, aux_rows, rowm, colT)
    return out_rows[:B * C].reshape(B, C, H, W)


# --------------------------------------------------------------------------- #
# Wrapper: per-image random op choice (host), one fused device call
# --------------------------------------------------------------------------- #
class MixedNoiseLayerPallas:
    """Mixed noise layer: randomly applies one of identity / real_jpeg / blur / noise /
    scale_crop / deepfake per image (MBRS-DF), with all image math in one Pallas kernel."""

    def __init__(self, jpeg_quality=(30, 70), image_size=(16, 16), seed=0):
        self.jpeg_quality = jpeg_quality
        self.image_size = image_size
        self.ops = ["identity", "real_jpeg", "blur", "noise", "scale_crop", "deepfake"]
        self.ops_probs = [0.2, 0.2, 0.2, 0.2, 0.15, 0.05]
        self.rng = random.Random(seed)
        H, W = image_size
        self._eye_h = np.eye(H, dtype=np.float32)
        self._eye_w = np.eye(W, dtype=np.float32)
        self._blur_h = _blur_1d_operator(H)
        self._blur_w = _blur_1d_operator(W)

    def __call__(self, x, key):
        B, C, H, W = x.shape
        assert (H, W) == tuple(self.image_size)
        codes = np.zeros((B,), np.int32)
        boxes = np.zeros((B, 4), np.int32)
        row_op = np.tile(self._eye_h, (B, 1, 1))      # (B, H, H) row operator
        col_op = np.tile(self._eye_w, (B, 1, 1))      # (B, W, W) col operator
        ops_list = []
        for b in range(B):
            op = self.rng.choices(self.ops, weights=self.ops_probs, k=1)[0]
            ops_list.append(op)
            if op in ("identity", "real_jpeg"):
                # TODO(synk): a real PIL JPEG encode/decode round-trip (lossy codec) has
                # no Pallas equivalent; real_jpeg is passed through unchanged.
                codes[b] = _CODE_PASSTHROUGH
            elif op == "blur":
                codes[b] = _CODE_LINEAR
                row_op[b], col_op[b] = self._blur_h, self._blur_w
            elif op == "noise":
                codes[b] = _CODE_NOISE
            elif op == "scale_crop":
                codes[b] = _CODE_LINEAR
                scale = self.rng.uniform(0.9, 1.1)
                row_op[b] = _scale_crop_1d_operator(scale, H)
                col_op[b] = _scale_crop_1d_operator(scale, W)
            elif op == "deepfake":
                codes[b] = _CODE_DEEPFAKE
                mh, mw = int(0.3 * H), int(0.3 * W)
                top = self.rng.randint(0, H - mh)
                left = self.rng.randint(0, W - mw)
                boxes[b] = (top, left, mh, mw)
        # Broadcast per-image operators over channels -> per channel-row (B*C, ., .),
        # matching the kernel's (B*C, H*W) row layout.  ~2 KiB/image/operator.
        rowm = np.repeat(row_op, C, axis=0)
        colT = np.repeat(np.ascontiguousarray(np.swapaxes(col_op, 1, 2)), C, axis=0)
        out = _mixed_noise_apply(x, jnp.asarray(codes), jnp.asarray(boxes),
                                 jnp.asarray(rowm), jnp.asarray(colT), key)
        return out, ops_list


# --------------------------------------------------------------------------- #
# Independent numpy reference for the blur branch (used only for the self-check)
# --------------------------------------------------------------------------- #
def _np_blur_reference(x):
    k = _gaussian_1d()
    w2 = np.outer(k, k)
    B, C, H, W = x.shape
    xp = np.pad(x, ((0, 0), (0, 0), (1, 1), (1, 1)), mode="reflect")
    out = np.zeros_like(x)
    for di in range(3):
        for dj in range(3):
            out += w2[di, dj] * xp[:, :, di:di + H, dj:dj + W]
    return out


if __name__ == "__main__":
    key = jax.random.PRNGKey(0)
    k_x, k_layer, k_dev = jax.random.split(key, 3)
    B, C, H, W = 16, 3, 16, 16
    x = jax.random.uniform(k_x, (B, C, H, W), jnp.float32)   # images in [0, 1]
    x_np = np.asarray(x).astype(np.float64)

    layer = MixedNoiseLayerPallas(image_size=(H, W), seed=0)

    def rows_of(mat):   # broadcast one (n, n) operator to every (B*C) channel-row
        return jnp.asarray(np.tile(np.asarray(mat, np.float32), (B * C, 1, 1)))

    eye_rows = rows_of(np.eye(H, dtype=np.float32))
    zero_boxes = jnp.zeros((B, 4), jnp.int32)

    def run(code, boxes, rowm, colT):
        codes = jnp.full((B,), code, jnp.int32)
        return jax.block_until_ready(_mixed_noise_apply(x, codes, boxes, rowm, colT, k_dev))

    # 1) pass-through (identity / real_jpeg): bit-exact copy
    y = run(_CODE_PASSTHROUGH, zero_boxes, eye_rows, eye_rows)
    assert np.array_equal(np.asarray(y), np.asarray(x))

    # 2) blur vs an independent 9-tap reflect-padded reference (default MXU precision)
    blur = _blur_1d_operator(H)
    y = run(_CODE_LINEAR, zero_boxes, rows_of(blur), rows_of(blur.T))
    np.testing.assert_allclose(np.asarray(y), _np_blur_reference(x_np), atol=2e-2, rtol=2e-2)

    # 3) scale_crop branch (up- and down-scale) vs direct separable application
    for scale in (1.08, 0.92):
        op_h = _scale_crop_1d_operator(scale, H)
        op_w = _scale_crop_1d_operator(scale, W)
        y = run(_CODE_LINEAR, zero_boxes, rows_of(op_h), rows_of(op_w.T))
        ref = np.einsum("ip,bcpq,jq->bcij",
                        op_h.astype(np.float64), x_np, op_w.astype(np.float64))
        np.testing.assert_allclose(np.asarray(y), ref, atol=2e-2, rtol=2e-2)

    # 4) noise branch: bounded perturbation, clamped to [0,1], actually random
    y = np.asarray(run(_CODE_NOISE, zero_boxes, eye_rows, eye_rows))
    d = y - np.asarray(x)
    assert y.min() >= 0.0 and y.max() <= 1.0
    assert np.abs(d).max() <= 0.1 and np.any(d != 0.0)

    # 5) deepfake branch: untouched outside the box, U[0,1) inside
    mh, mw = int(0.3 * H), int(0.3 * W)
    top, left = 3, 5
    boxes = jnp.asarray(np.tile(np.array([[top, left, mh, mw]], np.int32), (B, 1)))
    y = np.asarray(run(_CODE_DEEPFAKE, boxes, eye_rows, eye_rows))
    box_mask = np.zeros((B, C, H, W), bool)
    box_mask[:, :, top:top + mh, left:left + mw] = True
    assert np.array_equal(y[~box_mask], np.asarray(x)[~box_mask])
    assert y[box_mask].min() >= 0.0 and y[box_mask].max() < 1.0

    # 6) full mixed-noise layer (random per-image op choice, seeded), plus an odd batch
    #    size to exercise the batch-block padding path.
    out, ops_list = layer(x, k_layer)
    out = jax.block_until_ready(out)
    assert out.shape == (B, C, H, W) and out.dtype == jnp.float32
    assert len(ops_list) == B and all(op in layer.ops for op in ops_list)

    out2, ops2 = layer(x[:5], jax.random.PRNGKey(7))
    out2 = jax.block_until_ready(out2)
    assert out2.shape == (5, C, H, W) and len(ops2) == 5

    print("KERNEL_OK")
</pallas_src>

<mosaic_0001>
module attributes {stable_mosaic.version = 11 : i64} {
  func.func @_mixed_noise_kernel(%arg0: i32, %arg1: memref<24x256xf32, #tpu.memory_space<vmem>>, %arg2: memref<24x1xi32, #tpu.memory_space<vmem>>, %arg3: memref<24x256xf32, #tpu.memory_space<vmem>>, %arg4: memref<24x16x16xf32, #tpu.memory_space<vmem>>, %arg5: memref<24x16x16xf32, #tpu.memory_space<vmem>>, %arg6: memref<24x256xf32, #tpu.memory_space<vmem>>) attributes {dimension_semantics = [#tpu.dimension_semantics<parallel>], iteration_bounds = array<i64: 2>, scalar_prefetch = 0 : i64, scratch_operands = 0 : i64, tpu.core_type = #tpu.core_type<tc>, window_params = [{transform_indices = @transform_0, window_bounds = array<i64: 24, 256>}, {transform_indices = @transform_1, window_bounds = array<i64: 24, 1>}, {transform_indices = @transform_2, window_bounds = array<i64: 24, 256>}, {transform_indices = @transform_3, window_bounds = array<i64: 24, 16, 16>}, {transform_indices = @transform_4, window_bounds = array<i64: 24, 16, 16>}, {transform_indices = @transform_5, window_bounds = array<i64: 24, 256>}]} {
    %c0 = arith.constant 0 : index
    %c0_0 = arith.constant 0 : index
    %0 = vector.load %arg1[%c0, %c0_0] : memref<24x256xf32, #tpu.memory_space<vmem>>, vector<24x256xf32>
    %c0_1 = arith.constant 0 : index
    %c0_2 = arith.constant 0 : index
    %1 = vector.load %arg2[%c0_1, %c0_2] : memref<24x1xi32, #tpu.memory_space<vmem>>, vector<24x1xi32>
    %c0_3 = arith.constant 0 : index
    %c0_4 = arith.constant 0 : index
    %2 = vector.load %arg3[%c0_3, %c0_4] : memref<24x256xf32, #tpu.memory_space<vmem>>, vector<24x256xf32>
    %3 = vector.shape_cast %0 : vector<24x256xf32> to vector<24x16x16xf32>
    %c0_5 = arith.constant 0 : index
    %c0_6 = arith.constant 0 : index
    %c0_7 = arith.constant 0 : index
    %4 = vector.load %arg5[%c0_5, %c0_6, %c0_7] : memref<24x16x16xf32, #tpu.memory_space<vmem>>, vector<24x16x16xf32>
    "tpu.trace_start"() <{level = 10 : i32, message = "nhq,nqj->nhj"}> : () -> ()
    %cst = arith.constant dense<0.000000e+00> : vector<24x16x16xf32>
    %5 = tpu.matmul %3, %4, %cst {dimension_numbers = #tpu.dot_dimension_numbers<[2], [1], [1], [2], [0, 0, 0, 1, 1, 2], [0], [0]>} : vector<24x16x16xf32>, vector<24x16x16xf32>, vector<24x16x16xf32> -> vector<24x16x16xf32>
    "tpu.trace_stop"() : () -> ()
    %c0_8 = arith.constant 0 : index
    %c0_9 = arith.constant 0 : index
    %c0_10 = arith.constant 0 : index
    %6 = vector.load %arg4[%c0_8, %c0_9, %c0_10] : memref<24x16x16xf32, #tpu.memory_space<vmem>>, vector<24x16x16xf32>
    "tpu.trace_start"() <{level = 10 : i32, message = "nip,npj->nij"}> : () -> ()
    %cst_11 = arith.constant dense<0.000000e+00> : vector<24x16x16xf32>
    %7 = tpu.matmul %6, %5, %cst_11 {dimension_numbers = #tpu.dot_dimension_numbers<[2], [1], [1], [2], [0, 0, 0, 1, 1, 2], [0], [0]>} : vector<24x16x16xf32>, vector<24x16x16xf32>, vector<24x16x16xf32> -> vector<24x16x16xf32>
    "tpu.trace_stop"() : () -> ()
    %8 = vector.shape_cast %7 : vector<24x16x16xf32> to vector<24x256xf32>
    %cst_12 = arith.constant 0.00999999977 : f32
    %9 = vector.broadcast %cst_12 : f32 to vector<24x256xf32>
    %10 = arith.mulf %9, %2 : vector<24x256xf32>
    %11 = arith.addf %0, %10 : vector<24x256xf32>
    %cst_13 = arith.constant 0.000000e+00 : f32
    %cst_14 = arith.constant 1.000000e+00 : f32
    %12 = vector.broadcast %cst_13 : f32 to vector<24x256xf32>
    %13 = arith.maximumf %12, %11 : vector<24x256xf32>
    %14 = vector.broadcast %cst_14 : f32 to vector<24x256xf32>
    %15 = arith.minimumf %14, %13 : vector<24x256xf32>
    %cst_15 = arith.constant 0.000000e+00 : f32
    %16 = vector.broadcast %cst_15 : f32 to vector<24x256xf32>
    %17 = arith.cmpf oge, %2, %16 : vector<24x256xf32>
    %18 = arith.select %17, %2, %0 : vector<24x256xi1>, vector<24x256xf32>
    %c1_i32 = arith.constant 1 : i32
    %19 = vector.broadcast %c1_i32 : i32 to vector<24x1xi32>
    %20 = arith.cmpi eq, %1, %19 : vector<24x1xi32>
    %21 = vector.shape_cast %20 : vector<24x1xi1> to vector<24x1xi1>
    %22 = vector.broadcast %21 : vector<24x1xi1> to vector<24x256xi1>
    %23 = arith.select %22, %8, %0 : vector<24x256xi1>, vector<24x256xf32>
    %c2_i32 = arith.constant 2 : i32
    %24 = vector.broadcast %c2_i32 : i32 to vector<24x1xi32>
    %25 = arith.cmpi eq, %1, %24 : vector<24x1xi32>
    %26 = vector.shape_cast %25 : vector<24x1xi1> to vector<24x1xi1>
    %27 = vector.broadcast %26 : vector<24x1xi1> to vector<24x256xi1>
    %28 = arith.select %27, %15, %23 : vector<24x256xi1>, vector<24x256xf32>
    %c3_i32 = arith.constant 3 : i32
    %29 = vector.broadcast %c3_i32 : i32 to vector<24x1xi32>
    %30 = arith.cmpi eq, %1, %29 : vector<24x1xi32>
    %31 = vector.shape_cast %30 : vector<24x1xi1> to vector<24x1xi1>
    %32 = vector.broadcast %31 : vector<24x1xi1> to vector<24x256xi1>
    %33 = arith.select %32, %18, %28 : vector<24x256xi1>, vector<24x256xf32>
    %c0_16 = arith.constant 0 : index
    %c0_17 = arith.constant 0 : index
    %34 = vector.load %arg6[%c0_16, %c0_17] : memref<24x256xf32, #tpu.memory_space<vmem>>, vector<24x256xf32>
    tpu.vector_store %arg6[%c0_16, %c0_17], %33 {strides = array<i32>} : memref<24x256xf32, #tpu.memory_space<vmem>>, vector<24x256xf32>,
    return
  }
  func.func @transform_0(%arg0: i32) -> (i32, i32) {
    %c0_i32 = arith.constant 0 : i32
    %c0_i32_0 = arith.constant 0 : i32
    return %arg0, %c0_i32 : i32, i32
  }
  func.func @transform_1(%arg0: i32) -> (i32, i32) {
    %c0_i32 = arith.constant 0 : i32
    %c0_i32_0 = arith.constant 0 : i32
    return %arg0, %c0_i32 : i32, i32
  }
  func.func @transform_2(%arg0: i32) -> (i32, i32) {
    %c0_i32 = arith.constant 0 : i32
    %c0_i32_0 = arith.constant 0 : i32
    return %arg0, %c0_i32 : i32, i32
  }
  func.func @transform_3(%arg0: i32) -> (i32, i32, i32) {
    %c0_i32 = arith.constant 0 : i32
    %c0_i32_0 = arith.constant 0 : i32
    %c0_i32_1 = arith.constant 0 : i32
    return %arg0, %c0_i32, %c0_i32_0 : i32, i32, i32
  }
  func.func @transform_4(%arg0: i32) -> (i32, i32, i32) {
    %c0_i32 = arith.constant 0 : i32
    %c0_i32_0 = arith.constant 0 : i32
    %c0_i32_1 = arith.constant 0 : i32
    return %arg0, %c0_i32, %c0_i32_0 : i32, i32, i32
  }
  func.func @transform_5(%arg0: i32) -> (i32, i32) {
    %c0_i32 = arith.constant 0 : i32
    %c0_i32_0 = arith.constant 0 : i32
    return %arg0, %c0_i32 : i32, i32
  }
}

</mosaic_0001>

<llo_original>
// kernel: _mixed_noise_apply.3
$region0: #{_mixed_noise_apply.3}
  #allocation0 [shape = 'u32[]', space=smem, size = 0x4, offset = 0x4, fixed_abs, tag = 'smem constant byte address 0x4 - core index']
  #allocation1 [shape = 'u32[144,128]{1,0:T(1,128)}', space=vmem, size = 0x12000, scoped, tag = 'internal scratch']
  %s0 = inlined_call_operand.vmem [shape: f32[48,256], index: 0, kind: input, shape index: {}]
  %s1 = inlined_call_operand.vmem [shape: s32[48,1], index: 1, kind: input, shape index: {}]
  %s2 = inlined_call_operand.vmem [shape: f32[48,256], index: 2, kind: input, shape index: {}]
  %s3 = inlined_call_operand.vmem [shape: f32[48,16,16], index: 3, kind: input, shape index: {}]
  %s4 = inlined_call_operand.vmem [shape: f32[48,16,16], index: 4, kind: input, shape index: {}]
  %s5 = inlined_call_operand.vmem [shape: f32[48,256], index: 5, kind: output, shape index: {}]
  %s6 = sld [smem:[#allocation0]]
  $region53: #{_mixed_noise_apply.3} parent=0
    _
  %s8 = ssub.s32 1, %s6
  %s9 = scalar_select 0, %s8, %s6
  loop: start=0, step=1, limit=4
  $region2: #{_mixed_noise_apply.3} parent=0 // loop_pre_header
    _
  $region3: #{_mixed_noise_apply.3} parent=0 // loop_header
    %s11 = sphi 0, %s15
    %p12 = scmp.ge.s32.totalorder %s11, 4
    %s21 = sphi 0, %s23
    %s24 = sphi 0, %s21
    %s25 = sphi 0, %s24
    %s41 = sphi 0, %s25
    %s47 = sphi 0, %s49
    %s50 = sphi 0, %s47
    %s51 = sphi 0, %s50
    %s67 = sphi 0, %s51
    %s73 = sphi 0, %s75
    %s76 = sphi 0, %s73
    %s77 = sphi 0, %s76
    %s93 = sphi 0, %s77
    %s99 = sphi 0, %s101
    %s102 = sphi 0, %s99
    %s103 = sphi 0, %s102
    %s119 = sphi 0, %s103
    %s125 = sphi 0, %s127
    %s128 = sphi 0, %s125
    %s129 = sphi 0, %s128
    %s145 = sphi 0, %s129
    %s151 = sphi 0, %s153
    %s154 = sphi 0, %s151
    %s155 = sphi 0, %s154
    %s171 = sphi 0, %s155
  $region4: #{_mixed_noise_apply.3} parent=0 // loop_header_branch
    %14 = sbr.rel (%p12) target = $region8
  $region5: #{_mixed_noise_apply.3} parent=0 // loop_body
    %s16 = ssub.s32 %s11, 1
    %s17 = ssub.s32 %s11, 2
    %s18 = sadd.s32 %s11, 1
    %s19 = ssub.s32 %s11, %s18
    %p20 = scmp.eq.s32.totalorder %s19, 0
    %s22 = sadd.s32 %s21, 1
    %s23 = scalar_select %p20, %s21, %s22
    %p26 = pneg %p20
    %p27 = scmp.eq.s32.totalorder %s11, 1
    %p28 = por %p26, %p27
    %p29 = scmp.ne.s32.totalorder %s21, %s24
    %p30 = scmp.eq.s32.totalorder %s11, 0
    %p31 = por %p29, %p30
    %p32 = scmp.ne.s32.totalorder %s21, %s24
    %p33 = scmp.eq.s32.totalorder %s16, 1
    %p34 = por %p32, %p33
    %p35 = scmp.ne.s32.totalorder %s24, %s25
    %p36 = scmp.eq.s32.totalorder %s16, 0
    %p37 = por %p35, %p36
    %p38 = scmp.ne.s32.totalorder %s24, %s25
    %p39 = scmp.eq.s32.totalorder %s17, 1
    %p40 = por %p38, %p39
    %p42 = scmp.ne.s32.totalorder %s25, %s41
    %p43 = scmp.eq.s32.totalorder %s17, 0
    %p44 = por %p42, %p43
    %s45 = ssub.s32 %s11, %s18
    %p46 = scmp.eq.s32.totalorder %s45, 0
    %s48 = sadd.s32 %s47, 1
    %s49 = scalar_select %p46, %s47, %s48
    %p52 = pneg %p46
    %p53 = scmp.eq.s32.totalorder %s11, 1
    %p54 = por %p52, %p53
    %p55 = scmp.ne.s32.totalorder %s47, %s50
    %p56 = scmp.eq.s32.totalorder %s11, 0
    %p57 = por %p55, %p56
    %p58 = scmp.ne.s32.totalorder %s47, %s50
    %p59 = scmp.eq.s32.totalorder %s16, 1
    %p60 = por %p58, %p59
    %p61 = scmp.ne.s32.totalorder %s50, %s51
    %p62 = scmp.eq.s32.totalorder %s16, 0
    %p63 = por %p61, %p62
    %p64 = scmp.ne.s32.totalorder %s50, %s51
    %p65 = scmp.eq.s32.totalorder %s17, 1
    %p66 = por %p64, %p65
    %p68 = scmp.ne.s32.totalorder %s51, %s67
    %p69 = scmp.eq.s32.totalorder %s17, 0
    %p70 = por %p68, %p69
    %s71 = ssub.s32 %s11, %s18
    %p72 = scmp.eq.s32.totalorder %s71, 0
    %s74 = sadd.s32 %s73, 1
    %s75 = scalar_select %p72, %s73, %s74
    %p78 = pneg %p72
    %p79 = scmp.eq.s32.totalorder %s11, 1
    %p80 = por %p78, %p79
    %p81 = scmp.ne.s32.totalorder %s73, %s76
    %p82 = scmp.eq.s32.totalorder %s11, 0
    %p83 = por %p81, %p82
    %p84 = scmp.ne.s32.totalorder %s73, %s76
    %p85 = scmp.eq.s32.totalorder %s16, 1
    %p86 = por %p84, %p85
    %p87 = scmp.ne.s32.totalorder %s76, %s77
    %p88 = scmp.eq.s32.totalorder %s16, 0
    %p89 = por %p87, %p88
    %p90 = scmp.ne.s32.totalorder %s76, %s77
    %p91 = scmp.eq.s32.totalorder %s17, 1
    %p92 = por %p90, %p91
    %p94 = scmp.ne.s32.totalorder %s77, %s93
    %p95 = scmp.eq.s32.totalorder %s17, 0
    %p96 = por %p94, %p95
    %s97 = ssub.s32 %s11, %s18
    %p98 = scmp.eq.s32.totalorder %s97, 0
    %s100 = sadd.s32 %s99, 1
    %s101 = scalar_select %p98, %s99, %s100
    %p104 = pneg %p98
    %p105 = scmp.eq.s32.totalorder %s11, 1
    %p106 = por %p104, %p105
    %p107 = scmp.ne.s32.totalorder %s99, %s102
    %p108 = scmp.eq.s32.totalorder %s11, 0
    %p109 = por %p107, %p108
    %p110 = scmp.ne.s32.totalorder %s99, %s102
    %p111 = scmp.eq.s32.totalorder %s16, 1
    %p112 = por %p110, %p111
    %p113 = scmp.ne.s32.totalorder %s102, %s103
    %p114 = scmp.eq.s32.totalorder %s16, 0
    %p115 = por %p113, %p114
    %p116 = scmp.ne.s32.totalorder %s102, %s103
    %p117 = scmp.eq.s32.totalorder %s17, 1
    %p118 = por %p116, %p117
    %p120 = scmp.ne.s32.totalorder %s103, %s119
    %p121 = scmp.eq.s32.totalorder %s17, 0
    %p122 = por %p120, %p121
    %s123 = ssub.s32 %s11, %s18
    %p124 = scmp.eq.s32.totalorder %s123, 0
    %s126 = sadd.s32 %s125, 1
    %s127 = scalar_select %p124, %s125, %s126
    %p130 = pneg %p124
    %p131 = scmp.eq.s32.totalorder %s11, 1
    %p132 = por %p130, %p131
    %p133 = scmp.ne.s32.totalorder %s125, %s128
    %p134 = scmp.eq.s32.totalorder %s11, 0
    %p135 = por %p133, %p134
    %p136 = scmp.ne.s32.totalorder %s125, %s128
    %p137 = scmp.eq.s32.totalorder %s16, 1
    %p138 = por %p136, %p137
    %p139 = scmp.ne.s32.totalorder %s128, %s129
    %p140 = scmp.eq.s32.totalorder %s16, 0
    %p141 = por %p139, %p140
    %p142 = scmp.ne.s32.totalorder %s128, %s129
    %p143 = scmp.eq.s32.totalorder %s17, 1
    %p144 = por %p142, %p143
    %p146 = scmp.ne.s32.totalorder %s129, %s145
    %p147 = scmp.eq.s32.totalorder %s17, 0
    %p148 = por %p146, %p147
    %s149 = ssub.s32 %s11, %s18
    %p150 = scmp.eq.s32.totalorder %s149, 0
    %s152 = sadd.s32 %s151, 1
    %s153 = scalar_select %p150, %s151, %s152
    %p156 = pneg %p150
    %p157 = scmp.eq.s32.totalorder %s11, 1
    %p158 = por %p156, %p157
    %p159 = scmp.ne.s32.totalorder %s151, %s154
    %p160 = scmp.eq.s32.totalorder %s11, 0
    %p161 = por %p159, %p160
    %p162 = scmp.ne.s32.totalorder %s151, %s154
    %p163 = scmp.eq.s32.totalorder %s16, 1
    %p164 = por %p162, %p163
    %p165 = scmp.ne.s32.totalorder %s154, %s155
    %p166 = scmp.eq.s32.totalorder %s16, 0
    %p167 = por %p165, %p166
    %p168 = scmp.ne.s32.totalorder %s154, %s155
    %p169 = scmp.eq.s32.totalorder %s17, 1
    %p170 = por %p168, %p169
    %p172 = scmp.ne.s32.totalorder %s155, %s171
    %p173 = scmp.eq.s32.totalorder %s17, 0
    %p174 = por %p172, %p173
    %p175 = scmp.le.s32.totalorder 1, %s11
    %p176 = scmp.lt.s32.totalorder %s11, 3
    %p177 = pnand %p175, %p176
    %p178 = pneg %p177
    // Predicated region
    $region9: #{_mixed_noise_apply.3} parent=5 // pred_check
      _
    $region10: #{_mixed_noise_apply.3} parent=5 // pred_check_branch
      %180 = sbr.rel (%p177) target = $region12
    $region11: #{_mixed_noise_apply.3} parent=5 // pred_region
      %s181 = ssub.s32 %s11, 1
    $region12: #{_mixed_noise_apply.3} parent=5 // pred_fallthru
      _
    %p182 = scmp.lt.s32.totalorder %s11, 2
    // Predicated region
    $region13: #{_mixed_noise_apply.3} parent=5 // pred_check
      %p183 = pneg %p182
    $region14: #{_mixed_noise_apply.3} parent=5 // pred_check_branch
      %185 = sbr.rel (%p183) target = $region16
    $region15: #{_mixed_noise_apply.3} parent=5 // pred_region
      // Predicated region
      $region17: #{_mixed_noise_apply.3} parent=15 // pred_check
        %p186 = pneg %p31
      $region18: #{_mixed_noise_apply.3} parent=15 // pred_check_branch
        %188 = sbr.rel (%p186) target = $region20
      $region19: #{_mixed_noise_apply.3} parent=15 // pred_region
        %s189 = smul.u32 3, %s11
        %p190 = scmp.lt.s32.totalorder %s189, 5
        %s191 = scalar_select %p190, %s189, 5
        %s192 = smul.addr %s191, 2
        %s193 = smul.addr %s192, 8
        %s194 = scalar_lea.vmem %s0, %s193
        %s195 = smul.u32 3, %s11
      $region20: #{_mixed_noise_apply.3} parent=15 // pred_fallthru
        _
      // Predicated region
      $region21: #{_mixed_noise_apply.3} parent=15 // pred_check
        %p196 = pneg %p57
      $region22: #{_mixed_noise_apply.3} parent=15 // pred_check_branch
        %198 = sbr.rel (%p196) target = $region24
      $region23: #{_mixed_noise_apply.3} parent=15 // pred_region
        %s199 = smul.u32 3, %s11
        %p200 = scmp.lt.s32.totalorder %s199, 5
        %s201 = scalar_select %p200, %s199, 5
        %s202 = smul.addr %s201, 8
        %s203 = scalar_lea.vmem %s1, %s202
        %s204 = smul.u32 3, %s11
      $region24: #{_mixed_noise_apply.3} parent=15 // pred_fallthru
        _
      // Predicated region
      $region25: #{_mixed_noise_apply.3} parent=15 // pred_check
        %p205 = pneg %p83
      $region26: #{_mixed_noise_apply.3} parent=15 // pred_check_branch
        %207 = sbr.rel (%p205) target = $region28
      $region27: #{_mixed_noise_apply.3} parent=15 // pred_region
        %s208 = smul.u32 3, %s11
        %p209 = scmp.lt.s32.totalorder %s208, 5
        %s210 = scalar_select %p209, %s208, 5
        %s211 = smul.addr %s210, 2
        %s212 = smul.addr %s211, 8
        %s213 = scalar_lea.vmem %s2, %s212
        %s214 = smul.u32 3, %s11
      $region28: #{_mixed_noise_apply.3} parent=15 // pred_fallthru
        _
      // Predicated region
      $region29: #{_mixed_noise_apply.3} parent=15 // pred_check
        %p215 = pneg %p109
      $region30: #{_mixed_noise_apply.3} parent=15 // pred_check_branch
        %217 = sbr.rel (%p215) target = $region32
      $region31: #{_mixed_noise_apply.3} parent=15 // pred_region
        %s218 = smul.u32 24, %s11
        %p219 = scmp.lt.s32.totalorder %s218, 47
        %s220 = scalar_select %p219, %s218, 47
        %s221 = smul.addr %s220, 2
        %s222 = smul.addr %s221, 8
        %s223 = scalar_lea.vmem %s3, %s222
        %s224 = smul.u32 24, %s11
      $region32: #{_mixed_noise_apply.3} parent=15 // pred_fallthru
        _
      // Predicated region
      $region33: #{_mixed_noise_apply.3} parent=15 // pred_check
        %p225 = pneg %p135
      $region34: #{_mixed_noise_apply.3} parent=15 // pred_check_branch
        %227 = sbr.rel (%p225) target = $region36
      $region35: #{_mixed_noise_apply.3} parent=15 // pred_region
        %s228 = smul.u32 24, %s11
        %p229 = scmp.lt.s32.totalorder %s228, 47
        %s230 = scalar_select %p229, %s228, 47
        %s231 = smul.addr %s230, 2
        %s232 = smul.addr %s231, 8
        %s233 = scalar_lea.vmem %s4, %s232
        %s234 = smul.u32 24, %s11
      $region36: #{_mixed_noise_apply.3} parent=15 // pred_fallthru
        _
    $region16: #{_mixed_noise_apply.3} parent=5 // pred_fallthru
      _
    %p235 = scmp.le.s32.totalorder 1, %s11
    %p236 = scmp.lt.s32.totalorder %s11, 3
    %p237 = pnand %p235, %p236
    %p238 = pneg %p237
    // Predicated region
    $region37: #{_mixed_noise_apply.3} parent=5 // pred_check
      _
    $region38: #{_mixed_noise_apply.3} parent=5 // pred_check_branch
      %240 = sbr.rel (%p237) target = $region40
    $region39: #{_mixed_noise_apply.3} parent=5 // pred_region
      %s241 = ssub.s32 %s11, 1
      %s242 = smul.u32 3, %s16
      %p243 = scmp.lt.s32.totalorder %s242, 5
      %s244 = scalar_select %p243, %s242, 5
      %s245 = smul.addr %s244, 2
      %s246 = smul.addr %s245, 8
      %s247 = scalar_lea.vmem %s0, %s246
      %p248 = pneg %p37
      %p249 = pneg %p34
      %s250 = smul.u32 3, %s16
      %p251 = scmp.lt.s32.totalorder %s250, 5
      %s252 = scalar_select %p251, %s250, 5
      %s253 = smul.addr %s252, 8
      %s254 = scalar_lea.vmem %s1, %s253
      %p255 = pneg %p63
      %p256 = pneg %p60
      %s257 = smul.u32 3, %s16
      %p258 = scmp.lt.s32.totalorder %s257, 5
      %s259 = scalar_select %p258, %s257, 5
      %s260 = smul.addr %s259, 2
      %s261 = smul.addr %s260, 8
      %s262 = scalar_lea.vmem %s2, %s261
      %p263 = pneg %p89
      %p264 = pneg %p86
      %s265 = smul.u32 24, %s16
      %p266 = scmp.lt.s32.totalorder %s265, 47
      %s267 = scalar_select %p266, %s265, 47
      %s268 = smul.addr %s267, 2
      %s269 = smul.addr %s268, 8
      %s270 = scalar_lea.vmem %s3, %s269
      %p271 = pneg %p115
      %p272 = pneg %p112
      %s273 = smul.u32 24, %s16
      %p274 = scmp.lt.s32.totalorder %s273, 47
      %s275 = scalar_select %p274, %s273, 47
      %s276 = smul.addr %s275, 2
      %s277 = smul.addr %s276, 8
      %s278 = scalar_lea.vmem %s4, %s277
      %p279 = pneg %p141
      %p280 = pneg %p138
      %p281 = pneg %p167
      %p282 = pneg %p164
      %s283 = smul.u32 3, %s16
      %p284 = scmp.lt.s32.totalorder %s283, 5
      %s285 = scalar_select %p284, %s283, 5
      %s286 = smul.addr %s285, 2
      %s287 = smul.addr %s286, 8
      %s288 = scalar_lea.vmem %s5, %s287
      %s289 = smul.u32 3, %s16
      %p290 = scmp.lt.s32.totalorder %s289, 5
      %s291 = scalar_select %p290, %s289, 5
      %s292 = smul.addr %s291, 2
      %s293 = smul.addr %s292, 8
      %s294 = scalar_lea.vmem %s0, %s293
      %s295 = smul.u32 3, %s16
      %s296 = smul.u32 3, %s16
      %p297 = scmp.lt.s32.totalorder %s296, 5
      %s298 = scalar_select %p297, %s296, 5
      %s299 = smul.addr %s298, 8
      %s300 = scalar_lea.vmem %s1, %s299
      %s301 = smul.u32 3, %s16
      %s302 = smul.u32 3, %s16
      %p303 = scmp.lt.s32.totalorder %s302, 5
      %s304 = scalar_select %p303, %s302, 5
      %s305 = smul.addr %s304, 2
      %s306 = smul.addr %s305, 8
      %s307 = scalar_lea.vmem %s2, %s306
      %s308 = smul.u32 3, %s16
      %s309 = smul.u32 24, %s16
      %p310 = scmp.lt.s32.totalorder %s309, 47
      %s311 = scalar_select %p310, %s309, 47
      %s312 = smul.addr %s311, 2
      %s313 = smul.addr %s312, 8
      %s314 = scalar_lea.vmem %s3, %s313
      %s315 = smul.u32 24, %s16
      %s316 = smul.u32 24, %s16
      %p317 = scmp.lt.s32.totalorder %s316, 47
      %s318 = scalar_select %p317, %s316, 47
      %s319 = smul.addr %s318, 2
      %s320 = smul.addr %s319, 8
      %s321 = scalar_lea.vmem %s4, %s320
      %s322 = smul.u32 24, %s16
      %s323 = smul.u32 3, %s16
      %p324 = scmp.lt.s32.totalorder %s323, 5
      %s325 = scalar_select %p324, %s323, 5
      %s326 = smul.addr %s325, 2
      %s327 = smul.addr %s326, 8
      %s328 = scalar_lea.vmem %s5, %s327
      %s329 = smul.u32 3, %s16
      %v330 = vld [vmem:[%s294] sm:$0xff]
      %v331 = vld [vmem:[%s294 + $0x8] sm:$0xff]
      %v332 = vld [vmem:[%s294 + $0x10] sm:$0xff]
      %v333 = vld [vmem:[%s294 + $0x18] sm:$0xff]
      %v334 = vld [vmem:[%s294 + $0x20] sm:$0xff]
      %v335 = vld [vmem:[%s294 + $0x28] sm:$0xff]
      %v336 = vld [vmem:[%s300] sm:$0xff]
      %v337 = vld [vmem:[%s300 + $0x8] sm:$0xff]
      %v338 = vld [vmem:[%s300 + $0x10] sm:$0xff]
      %v339 = vld [vmem:[%s307] sm:$0xff]
      %v340 = vld [vmem:[%s307 + $0x8] sm:$0xff]
      %v341 = vld [vmem:[%s307 + $0x10] sm:$0xff]
      %v342 = vld [vmem:[%s307 + $0x18] sm:$0xff]
      %v343 = vld [vmem:[%s307 + $0x20] sm:$0xff]
      %v344 = vld [vmem:[%s307 + $0x28] sm:$0xff]
      %348 = vrot.lane.b32.xlu0 %v330, 112
      %v349 = vpop.permute.xlu0 %348
      %350 = vrot.lane.b32.xlu0 %v332, 112
      %v351 = vpop.permute.xlu0 %350
      %352 = vrot.lane.b32.xlu0 %v334, 112
      %v353 = vpop.permute.xlu0 %352
      %357 = vrot.lane.b32.xlu0 %v330, 96
      %v358 = vpop.permute.xlu0 %357
      %359 = vrot.lane.b32.xlu0 %v332, 96
      %v360 = vpop.permute.xlu0 %359
      %361 = vrot.lane.b32.xlu0 %v334, 96
      %v362 = vpop.permute.xlu0 %361
      %366 = vrot.lane.b32.xlu0 %v330, 80
      %v367 = vpop.permute.xlu0 %366
      %368 = vrot.lane.b32.xlu0 %v332, 80
      %v369 = vpop.permute.xlu0 %368
      %370 = vrot.lane.b32.xlu0 %v334, 80
      %v371 = vpop.permute.xlu0 %370
      %375 = vrot.lane.b32.xlu0 %v330, 64
      %v376 = vpop.permute.xlu0 %375
      %377 = vrot.lane.b32.xlu0 %v332, 64
      %v378 = vpop.permute.xlu0 %377
      %379 = vrot.lane.b32.xlu0 %v334, 64
      %v380 = vpop.permute.xlu0 %379
      %384 = vrot.lane.b32.xlu0 %v330, 48
      %v385 = vpop.permute.xlu0 %384
      %386 = vrot.lane.b32.xlu0 %v332, 48
      %v387 = vpop.permute.xlu0 %386
      %388 = vrot.lane.b32.xlu0 %v334, 48
      %v389 = vpop.permute.xlu0 %388
      %393 = vrot.lane.b32.xlu0 %v330, 32
      %v394 = vpop.permute.xlu0 %393
      %395 = vrot.lane.b32.xlu0 %v332, 32
      %v396 = vpop.permute.xlu0 %395
      %397 = vrot.lane.b32.xlu0 %v334, 32
      %v398 = vpop.permute.xlu0 %397
      %402 = vrot.lane.b32.xlu0 %v330, 16
      %v403 = vpop.permute.xlu0 %402
      %404 = vrot.lane.b32.xlu0 %v332, 16
      %v405 = vpop.permute.xlu0 %404
      %406 = vrot.lane.b32.xlu0 %v334, 16
      %v407 = vpop.permute.xlu0 %406
      %414 = vrot.lane.b32.xlu0 %v331, 112
      %v415 = vpop.permute.xlu0 %414
      %416 = vrot.lane.b32.xlu0 %v333, 112
      %v417 = vpop.permute.xlu0 %416
      %418 = vrot.lane.b32.xlu0 %v335, 112
      %v419 = vpop.permute.xlu0 %418
      %423 = vrot.lane.b32.xlu0 %v331, 96
      %v424 = vpop.permute.xlu0 %423
      %425 = vrot.lane.b32.xlu0 %v333, 96
      %v426 = vpop.permute.xlu0 %425
      %427 = vrot.lane.b32.xlu0 %v335, 96
      %v428 = vpop.permute.xlu0 %427
      %432 = vrot.lane.b32.xlu0 %v331, 80
      %v433 = vpop.permute.xlu0 %432
      %434 = vrot.lane.b32.xlu0 %v333, 80
      %v435 = vpop.permute.xlu0 %434
      %436 = vrot.lane.b32.xlu0 %v335, 80
      %v437 = vpop.permute.xlu0 %436
      %441 = vrot.lane.b32.xlu0 %v331, 64
      %v442 = vpop.permute.xlu0 %441
      %443 = vrot.lane.b32.xlu0 %v333, 64
      %v444 = vpop.permute.xlu0 %443
      %445 = vrot.lane.b32.xlu0 %v335, 64
      %v446 = vpop.permute.xlu0 %445
      %450 = vrot.lane.b32.xlu0 %v331, 48
      %v451 = vpop.permute.xlu0 %450
      %452 = vrot.lane.b32.xlu0 %v333, 48
      %v453 = vpop.permute.xlu0 %452
      %454 = vrot.lane.b32.xlu0 %v335, 48
      %v455 = vpop.permute.xlu0 %454
      %459 = vrot.lane.b32.xlu0 %v331, 32
      %v460 = vpop.permute.xlu0 %459
      %461 = vrot.lane.b32.xlu0 %v333, 32
      %v462 = vpop.permute.xlu0 %461
      %463 = vrot.lane.b32.xlu0 %v335, 32
      %v464 = vpop.permute.xlu0 %463
      %468 = vrot.lane.b32.xlu0 %v331, 16
      %v469 = vpop.permute.xlu0 %468
      %470 = vrot.lane.b32.xlu0 %v333, 16
      %v471 = vpop.permute.xlu0 %470
      %472 = vrot.lane.b32.xlu0 %v335, 16
      %v473 = vpop.permute.xlu0 %472
      %v477 = vcombine.low %v330, %v358
      %v478 = vcombine.high %v330, %v358
      %v480 = vunpack.c.l.s4 1983009808
      %v481 = vunpack.c.0.s8 %v480
      %v482 = vlaneseq
      %v483 = vshrl.u32 %v482, 7
      %v484 = vsub.s32 %v481, %v483
      %v485 = vrot.slane %v477, %v484
      %v487 = vunpack.c.l.s4 1983009808
      %v488 = vunpack.c.0.s8 %v487
      %v489 = vlaneseq
      %v490 = vshrl.u32 %v489, 7
      %v491 = vsub.s32 %v488, %v490
      %v492 = vrot.slane %v478, %v491
      %v493 = vcombine.low %v349, %v367
      %v494 = vcombine.high %v349, %v367
      %v496 = vunpack.c.l.s4 1983009808
      %v497 = vunpack.c.0.s8 %v496
      %v498 = vlaneseq
      %v499 = vshrl.u32 %v498, 7
      %v500 = vsub.s32 %v497, %v499
      %v501 = vrot.slane %v493, %v500
      %v503 = vunpack.c.l.s4 1983009808
      %v504 = vunpack.c.0.s8 %v503
      %v505 = vlaneseq
      %v506 = vshrl.u32 %v505, 7
      %v507 = vsub.s32 %v504, %v506
      %v508 = vrot.slane %v494, %v507
      %v509 = vcombine.low %v376, %v394
      %v510 = vcombine.high %v376, %v394
      %v512 = vunpack.c.l.s4 1983009808
      %v513 = vunpack.c.0.s8 %v512
      %v514 = vlaneseq
      %v515 = vshrl.u32 %v514, 7
      %v516 = vsub.s32 %v513, %v515
      %v517 = vrot.slane %v509, %v516
      %v519 = vunpack.c.l.s4 1983009808
      %v520 = vunpack.c.0.s8 %v519
      %v521 = vlaneseq
      %v522 = vshrl.u32 %v521, 7
      %v523 = vsub.s32 %v520, %v522
      %v524 = vrot.slane %v510, %v523
      %v525 = vcombine.low %v385, %v403
      %v526 = vcombine.high %v385, %v403
      %v528 = vunpack.c.l.s4 1983009808
      %v529 = vunpack.c.0.s8 %v528
      %v530 = vlaneseq
      %v531 = vshrl.u32 %v530, 7
      %v532 = vsub.s32 %v529, %v531
      %v533 = vrot.slane %v525, %v532
      %v535 = vunpack.c.l.s4 1983009808
      %v536 = vunpack.c.0.s8 %v535
      %v537 = vlaneseq
      %v538 = vshrl.u32 %v537, 7
      %v539 = vsub.s32 %v536, %v538
      %v540 = vrot.slane %v526, %v539
      %v541 = vcombine.low %v485, %v501
      %v542 = vcombine.high %v485, %v501
      %v544 = vunpack.c.l.s4 1934713408
      %v545 = vunpack.c.0.s8 %v544
      %v546 = vlaneseq
      %v547 = vshrl.u32 %v546, 7
      %v548 = vsub.s32 %v545, %v547
      %v549 = vrot.slane %v541, %v548
      %v551 = vunpack.c.l.s4 1934713408
      %v552 = vunpack.c.0.s8 %v551
      %v553 = vlaneseq
      %v554 = vshrl.u32 %v553, 7
      %v555 = vsub.s32 %v552, %v554
      %v556 = vrot.slane %v542, %v555
      %v557 = vcombine.low %v492, %v508
      %v558 = vcombine.high %v492, %v508
      %v560 = vunpack.c.l.s4 1934713408
      %v561 = vunpack.c.0.s8 %v560
      %v562 = vlaneseq
      %v563 = vshrl.u32 %v562, 7
      %v564 = vsub.s32 %v561, %v563
      %v565 = vrot.slane %v557, %v564
      %v567 = vunpack.c.l.s4 1934713408
      %v568 = vunpack.c.0.s8 %v567
      %v569 = vlaneseq
      %v570 = vshrl.u32 %v569, 7
      %v571 = vsub.s32 %v568, %v570
      %v572 = vrot.slane %v558, %v571
      %v573 = vcombine.low %v517, %v533
      %v574 = vcombine.high %v517, %v533
      %v576 = vunpack.c.l.s4 1934713408
      %v577 = vunpack.c.0.s8 %v576
      %v578 = vlaneseq
      %v579 = vshrl.u32 %v578, 7
      %v580 = vsub.s32 %v577, %v579
      %v581 = vrot.slane %v573, %v580
      %v583 = vunpack.c.l.s4 1934713408
      %v584 = vunpack.c.0.s8 %v583
      %v585 = vlaneseq
      %v586 = vshrl.u32 %v585, 7
      %v587 = vsub.s32 %v584, %v586
      %v588 = vrot.slane %v574, %v587
      %v589 = vcombine.low %v524, %v540
      %v590 = vcombine.high %v524, %v540
      %v592 = vunpack.c.l.s4 1934713408
      %v593 = vunpack.c.0.s8 %v592
      %v594 = vlaneseq
      %v595 = vshrl.u32 %v594, 7
      %v596 = vsub.s32 %v593, %v595
      %v597 = vrot.slane %v589, %v596
      %v599 = vunpack.c.l.s4 1934713408
      %v600 = vunpack.c.0.s8 %v599
      %v601 = vlaneseq
      %v602 = vshrl.u32 %v601, 7
      %v603 = vsub.s32 %v600, %v602
      %v604 = vrot.slane %v590, %v603
      %v605 = vcombine.low %v549, %v581
      %v606 = vcombine.high %v549, %v581
      %v607 = vcombine.low %v556, %v588
      %v608 = vcombine.high %v556, %v588
      %v609 = vcombine.low %v565, %v597
      %v610 = vcombine.high %v565, %v597
      %v611 = vcombine.low %v572, %v604
      %v612 = vcombine.high %v572, %v604
      %v613 = vcombine.low %v331, %v424
      %v614 = vcombine.high %v331, %v424
      %v616 = vunpack.c.l.s4 1983009808
      %v617 = vunpack.c.0.s8 %v616
      %v618 = vlaneseq
      %v619 = vshrl.u32 %v618, 7
      %v620 = vsub.s32 %v617, %v619
      %v621 = vrot.slane %v613, %v620
      %v623 = vunpack.c.l.s4 1983009808
      %v624 = vunpack.c.0.s8 %v623
      %v625 = vlaneseq
      %v626 = vshrl.u32 %v625, 7
      %v627 = vsub.s32 %v624, %v626
      %v628 = vrot.slane %v614, %v627
      %v629 = vcombine.low %v415, %v433
      %v630 = vcombine.high %v415, %v433
      %v632 = vunpack.c.l.s4 1983009808
      %v633 = vunpack.c.0.s8 %v632
      %v634 = vlaneseq
      %v635 = vshrl.u32 %v634, 7
      %v636 = vsub.s32 %v633, %v635
      %v637 = vrot.slane %v629, %v636
      %v639 = vunpack.c.l.s4 1983009808
      %v640 = vunpack.c.0.s8 %v639
      %v641 = vlaneseq
      %v642 = vshrl.u32 %v641, 7
      %v643 = vsub.s32 %v640, %v642
      %v644 = vrot.slane %v630, %v643
      %v645 = vcombine.low %v442, %v460
      %v646 = vcombine.high %v442, %v460
      %v648 = vunpack.c.l.s4 1983009808
      %v649 = vunpack.c.0.s8 %v648
      %v650 = vlaneseq
      %v651 = vshrl.u32 %v650, 7
      %v652 = vsub.s32 %v649, %v651
      %v653 = vrot.slane %v645, %v652
      %v655 = vunpack.c.l.s4 1983009808
      %v656 = vunpack.c.0.s8 %v655
      %v657 = vlaneseq
      %v658 = vshrl.u32 %v657, 7
      %v659 = vsub.s32 %v656, %v658
      %v660 = vrot.slane %v646, %v659
      %v661 = vcombine.low %v451, %v469
      %v662 = vcombine.high %v451, %v469
      %v664 = vunpack.c.l.s4 1983009808
      %v665 = vunpack.c.0.s8 %v664
      %v666 = vlaneseq
      %v667 = vshrl.u32 %v666, 7
      %v668 = vsub.s32 %v665, %v667
      %v669 = vrot.slane %v661, %v668
      %v671 = vunpack.c.l.s4 1983009808
      %v672 = vunpack.c.0.s8 %v671
      %v673 = vlaneseq
      %v674 = vshrl.u32 %v673, 7
      %v675 = vsub.s32 %v672, %v674
      %v676 = vrot.slane %v662, %v675
      %v677 = vcombine.low %v621, %v637
      %v678 = vcombine.high %v621, %v637
      %v680 = vunpack.c.l.s4 1934713408
      %v681 = vunpack.c.0.s8 %v680
      %v682 = vlaneseq
      %v683 = vshrl.u32 %v682, 7
      %v684 = vsub.s32 %v681, %v683
      %v685 = vrot.slane %v677, %v684
      %v687 = vunpack.c.l.s4 1934713408
      %v688 = vunpack.c.0.s8 %v687
      %v689 = vlaneseq
      %v690 = vshrl.u32 %v689, 7
      %v691 = vsub.s32 %v688, %v690
      %v692 = vrot.slane %v678, %v691
      %v693 = vcombine.low %v628, %v644
      %v694 = vcombine.high %v628, %v644
      %v696 = vunpack.c.l.s4 1934713408
      %v697 = vunpack.c.0.s8 %v696
      %v698 = vlaneseq
      %v699 = vshrl.u32 %v698, 7
      %v700 = vsub.s32 %v697, %v699
      %v701 = vrot.slane %v693, %v700
      %v703 = vunpack.c.l.s4 1934713408
      %v704 = vunpack.c.0.s8 %v703
      %v705 = vlaneseq
      %v706 = vshrl.u32 %v705, 7
      %v707 = vsub.s32 %v704, %v706
      %v708 = vrot.slane %v694, %v707
      %v709 = vcombine.low %v653, %v669
      %v710 = vcombine.high %v653, %v669
      %v712 = vunpack.c.l.s4 1934713408
      %v713 = vunpack.c.0.s8 %v712
      %v714 = vlaneseq
      %v715 = vshrl.u32 %v714, 7
      %v716 = vsub.s32 %v713, %v715
      %v717 = vrot.slane %v709, %v716
      %v719 = vunpack.c.l.s4 1934713408
      %v720 = vunpack.c.0.s8 %v719
      %v721 = vlaneseq
      %v722 = vshrl.u32 %v721, 7
      %v723 = vsub.s32 %v720, %v722
      %v724 = vrot.slane %v710, %v723
      %v725 = vcombine.low %v660, %v676
      %v726 = vcombine.high %v660, %v676
      %v728 = vunpack.c.l.s4 1934713408
      %v729 = vunpack.c.0.s8 %v728
      %v730 = vlaneseq
      %v731 = vshrl.u32 %v730, 7
      %v732 = vsub.s32 %v729, %v731
      %v733 = vrot.slane %v725, %v732
      %v735 = vunpack.c.l.s4 1934713408
      %v736 = vunpack.c.0.s8 %v735
      %v737 = vlaneseq
      %v738 = vshrl.u32 %v737, 7
      %v739 = vsub.s32 %v736, %v738
      %v740 = vrot.slane %v726, %v739
      %v741 = vcombine.low %v685, %v717
      %v742 = vcombine.high %v685, %v717
      %v743 = vcombine.low %v692, %v724
      %v744 = vcombine.high %v692, %v724
      %v745 = vcombine.low %v701, %v733
      %v746 = vcombine.high %v701, %v733
      %v747 = vcombine.low %v708, %v740
      %v748 = vcombine.high %v708, %v740
      %v749 = vcombine.low %v332, %v360
      %v750 = vcombine.high %v332, %v360
      %v752 = vunpack.c.l.s4 1983009808
      %v753 = vunpack.c.0.s8 %v752
      %v754 = vlaneseq
      %v755 = vshrl.u32 %v754, 7
      %v756 = vsub.s32 %v753, %v755
      %v757 = vrot.slane %v749, %v756
      %v759 = vunpack.c.l.s4 1983009808
      %v760 = vunpack.c.0.s8 %v759
      %v761 = vlaneseq
      %v762 = vshrl.u32 %v761, 7
      %v763 = vsub.s32 %v760, %v762
      %v764 = vrot.slane %v750, %v763
      %v765 = vcombine.low %v351, %v369
      %v766 = vcombine.high %v351, %v369
      %v768 = vunpack.c.l.s4 1983009808
      %v769 = vunpack.c.0.s8 %v768
      %v770 = vlaneseq
      %v771 = vshrl.u32 %v770, 7
      %v772 = vsub.s32 %v769, %v771
      %v773 = vrot.slane %v765, %v772
      %v775 = vunpack.c.l.s4 1983009808
      %v776 = vunpack.c.0.s8 %v775
      %v777 = vlaneseq
      %v778 = vshrl.u32 %v777, 7
      %v779 = vsub.s32 %v776, %v778
      %v780 = vrot.slane %v766, %v779
      %v781 = vcombine.low %v378, %v396
      %v782 = vcombine.high %v378, %v396
      %v784 = vunpack.c.l.s4 1983009808
      %v785 = vunpack.c.0.s8 %v784
      %v786 = vlaneseq
      %v787 = vshrl.u32 %v786, 7
      %v788 = vsub.s32 %v785, %v787
      %v789 = vrot.slane %v781, %v788
      %v791 = vunpack.c.l.s4 1983009808
      %v792 = vunpack.c.0.s8 %v791
      %v793 = vlaneseq
      %v794 = vshrl.u32 %v793, 7
      %v795 = vsub.s32 %v792, %v794
      %v796 = vrot.slane %v782, %v795
      %v797 = vcombine.low %v387, %v405
      %v798 = vcombine.high %v387, %v405
      %v800 = vunpack.c.l.s4 1983009808
      %v801 = vunpack.c.0.s8 %v800
      %v802 = vlaneseq
      %v803 = vshrl.u32 %v802, 7
      %v804 = vsub.s32 %v801, %v803
      %v805 = vrot.slane %v797, %v804
      %v807 = vunpack.c.l.s4 1983009808
      %v808 = vunpack.c.0.s8 %v807
      %v809 = vlaneseq
      %v810 = vshrl.u32 %v809, 7
      %v811 = vsub.s32 %v808, %v810
      %v812 = vrot.slane %v798, %v811
      %v813 = vcombine.low %v757, %v773
      %v814 = vcombine.high %v757, %v773
      %v816 = vunpack.c.l.s4 1934713408
      %v817 = vunpack.c.0.s8 %v816
      %v818 = vlaneseq
      %v819 = vshrl.u32 %v818, 7
      %v820 = vsub.s32 %v817, %v819
      %v821 = vrot.slane %v813, %v820
      %v823 = vunpack.c.l.s4 1934713408
      %v824 = vunpack.c.0.s8 %v823
      %v825 = vlaneseq
      %v826 = vshrl.u32 %v825, 7
      %v827 = vsub.s32 %v824, %v826
      %v828 = vrot.slane %v814, %v827
      %v829 = vcombine.low %v764, %v780
      %v830 = vcombine.high %v764, %v780
      %v832 = vunpack.c.l.s4 1934713408
      %v833 = vunpack.c.0.s8 %v832
      %v834 = vlaneseq
      %v835 = vshrl.u32 %v834, 7
      %v836 = vsub.s32 %v833, %v835
      %v837 = vrot.slane %v829, %v836
      %v839 = vunpack.c.l.s4 1934713408
      %v840 = vunpack.c.0.s8 %v839
      %v841 = vlaneseq
      %v842 = vshrl.u32 %v841, 7
      %v843 = vsub.s32 %v840, %v842
      %v844 = vrot.slane %v830, %v843
      %v845 = vcombine.low %v789, %v805
      %v846 = vcombine.high %v789, %v805
      %v848 = vunpack.c.l.s4 1934713408
      %v849 = vunpack.c.0.s8 %v848
      %v850 = vlaneseq
      %v851 = vshrl.u32 %v850, 7
      %v852 = vsub.s32 %v849, %v851
      %v853 = vrot.slane %v845, %v852
      %v855 = vunpack.c.l.s4 1934713408
      %v856 = vunpack.c.0.s8 %v855
      %v857 = vlaneseq
      %v858 = vshrl.u32 %v857, 7
      %v859 = vsub.s32 %v856, %v858
      %v860 = vrot.slane %v846, %v859
      %v861 = vcombine.low %v796, %v812
      %v862 = vcombine.high %v796, %v812
      %v864 = vunpack.c.l.s4 1934713408
      %v865 = vunpack.c.0.s8 %v864
      %v866 = vlaneseq
      %v867 = vshrl.u32 %v866, 7
      %v868 = vsub.s32 %v865, %v867
      %v869 = vrot.slane %v861, %v868
      %v871 = vunpack.c.l.s4 1934713408
      %v872 = vunpack.c.0.s8 %v871
      %v873 = vlaneseq
      %v874 = vshrl.u32 %v873, 7
      %v875 = vsub.s32 %v872, %v874
      %v876 = vrot.slane %v862, %v875
      %v877 = vcombine.low %v821, %v853
      %v878 = vcombine.high %v821, %v853
      %v879 = vcombine.low %v828, %v860
      %v880 = vcombine.high %v828, %v860
      %v881 = vcombine.low %v837, %v869
      %v882 = vcombine.high %v837, %v869
      %v883 = vcombine.low %v844, %v876
      %v884 = vcombine.high %v844, %v876
      %v885 = vcombine.low %v333, %v426
      %v886 = vcombine.high %v333, %v426
      %v888 = vunpack.c.l.s4 1983009808
      %v889 = vunpack.c.0.s8 %v888
      %v890 = vlaneseq
      %v891 = vshrl.u32 %v890, 7
      %v892 = vsub.s32 %v889, %v891
      %v893 = vrot.slane %v885, %v892
      %v895 = vunpack.c.l.s4 1983009808
      %v896 = vunpack.c.0.s8 %v895
      %v897 = vlaneseq
      %v898 = vshrl.u32 %v897, 7
      %v899 = vsub.s32 %v896, %v898
      %v900 = vrot.slane %v886, %v899
      %v901 = vcombine.low %v417, %v435
      %v902 = vcombine.high %v417, %v435
      %v904 = vunpack.c.l.s4 1983009808
      %v905 = vunpack.c.0.s8 %v904
      %v906 = vlaneseq
      %v907 = vshrl.u32 %v906, 7
      %v908 = vsub.s32 %v905, %v907
      %v909 = vrot.slane %v901, %v908
      %v911 = vunpack.c.l.s4 1983009808
      %v912 = vunpack.c.0.s8 %v911
      %v913 = vlaneseq
      %v914 = vshrl.u32 %v913, 7
      %v915 = vsub.s32 %v912, %v914
      %v916 = vrot.slane %v902, %v915
      %v917 = vcombine.low %v444, %v462
      %v918 = vcombine.high %v444, %v462
      %v920 = vunpack.c.l.s4 1983009808
      %v921 = vunpack.c.0.s8 %v920
      %v922 = vlaneseq
      %v923 = vshrl.u32 %v922, 7
      %v924 = vsub.s32 %v921, %v923
      %v925 = vrot.slane %v917, %v924
      %v927 = vunpack.c.l.s4 1983009808
      %v928 = vunpack.c.0.s8 %v927
      %v929 = vlaneseq
      %v930 = vshrl.u32 %v929, 7
      %v931 = vsub.s32 %v928, %v930
      %v932 = vrot.slane %v918, %v931
      %v933 = vcombine.low %v453, %v471
      %v934 = vcombine.high %v453, %v471
      %v936 = vunpack.c.l.s4 1983009808
      %v937 = vunpack.c.0.s8 %v936
      %v938 = vlaneseq
      %v939 = vshrl.u32 %v938, 7
      %v940 = vsub.s32 %v937, %v939
      %v941 = vrot.slane %v933, %v940
      %v943 = vunpack.c.l.s4 1983009808
      %v944 = vunpack.c.0.s8 %v943
      %v945 = vlaneseq
      %v946 = vshrl.u32 %v945, 7
      %v947 = vsub.s32 %v944, %v946
      %v948 = vrot.slane %v934, %v947
      %v949 = vcombine.low %v893, %v909
      %v950 = vcombine.high %v893, %v909
      %v952 = vunpack.c.l.s4 1934713408
      %v953 = vunpack.c.0.s8 %v952
      %v954 = vlaneseq
      %v955 = vshrl.u32 %v954, 7
      %v956 = vsub.s32 %v953, %v955
      %v957 = vrot.slane %v949, %v956
      %v959 = vunpack.c.l.s4 1934713408
      %v960 = vunpack.c.0.s8 %v959
      %v961 = vlaneseq
      %v962 = vshrl.u32 %v961, 7
      %v963 = vsub.s32 %v960, %v962
      %v964 = vrot.slane %v950, %v963
      %v965 = vcombine.low %v900, %v916
      %v966 = vcombine.high %v900, %v916
      %v968 = vunpack.c.l.s4 1934713408
      %v969 = vunpack.c.0.s8 %v968
      %v970 = vlaneseq
      %v971 = vshrl.u32 %v970, 7
      %v972 = vsub.s32 %v969, %v971
      %v973 = vrot.slane %v965, %v972
      %v975 = vunpack.c.l.s4 1934713408
      %v976 = vunpack.c.0.s8 %v975
      %v977 = vlaneseq
      %v978 = vshrl.u32 %v977, 7
      %v979 = vsub.s32 %v976, %v978
      %v980 = vrot.slane %v966, %v979
      %v981 = vcombine.low %v925, %v941
      %v982 = vcombine.high %v925, %v941
      %v984 = vunpack.c.l.s4 1934713408
      %v985 = vunpack.c.0.s8 %v984
      %v986 = vlaneseq
      %v987 = vshrl.u32 %v986, 7
      %v988 = vsub.s32 %v985, %v987
      %v989 = vrot.slane %v981, %v988
      %v991 = vunpack.c.l.s4 1934713408
      %v992 = vunpack.c.0.s8 %v991
      %v993 = vlaneseq
      %v994 = vshrl.u32 %v993, 7
      %v995 = vsub.s32 %v992, %v994
      %v996 = vrot.slane %v982, %v995
      %v997 = vcombine.low %v932, %v948
      %v998 = vcombine.high %v932, %v948
      %v1000 = vunpack.c.l.s4 1934713408
      %v1001 = vunpack.c.0.s8 %v1000
      %v1002 = vlaneseq
      %v1003 = vshrl.u32 %v1002, 7
      %v1004 = vsub.s32 %v1001, %v1003
      %v1005 = vrot.slane %v997, %v1004
      %v1007 = vunpack.c.l.s4 1934713408
      %v1008 = vunpack.c.0.s8 %v1007
      %v1009 = vlaneseq
      %v1010 = vshrl.u32 %v1009, 7
      %v1011 = vsub.s32 %v1008, %v1010
      %v1012 = vrot.slane %v998, %v1011
      %v1013 = vcombine.low %v957, %v989
      %v1014 = vcombine.high %v957, %v989
      %v1015 = vcombine.low %v964, %v996
      %v1016 = vcombine.high %v964, %v996
      %v1017 = vcombine.low %v973, %v1005
      %v1018 = vcombine.high %v973, %v1005
      %v1019 = vcombine.low %v980, %v1012
      %v1020 = vcombine.high %v980, %v1012
      %v1021 = vcombine.low %v334, %v362
      %v1022 = vcombine.high %v334, %v362
      %v1024 = vunpack.c.l.s4 1983009808
      %v1025 = vunpack.c.0.s8 %v1024
      %v1026 = vlaneseq
      %v1027 = vshrl.u32 %v1026, 7
      %v1028 = vsub.s32 %v1025, %v1027
      %v1029 = vrot.slane %v1021, %v1028
      %v1031 = vunpack.c.l.s4 1983009808
      %v1032 = vunpack.c.0.s8 %v1031
      %v1033 = vlaneseq
      %v1034 = vshrl.u32 %v1033, 7
      %v1035 = vsub.s32 %v1032, %v1034
      %v1036 = vrot.slane %v1022, %v1035
      %v1037 = vcombine.low %v353, %v371
      %v1038 = vcombine.high %v353, %v371
      %v1040 = vunpack.c.l.s4 1983009808
      %v1041 = vunpack.c.0.s8 %v1040
      %v1042 = vlaneseq
      %v1043 = vshrl.u32 %v1042, 7
      %v1044 = vsub.s32 %v1041, %v1043
      %v1045 = vrot.slane %v1037, %v1044
      %v1047 = vunpack.c.l.s4 1983009808
      %v1048 = vunpack.c.0.s8 %v1047
      %v1049 = vlaneseq
      %v1050 = vshrl.u32 %v1049, 7
      %v1051 = vsub.s32 %v1048, %v1050
      %v1052 = vrot.slane %v1038, %v1051
      %v1053 = vcombine.low %v380, %v398
      %v1054 = vcombine.high %v380, %v398
      %v1056 = vunpack.c.l.s4 1983009808
      %v1057 = vunpack.c.0.s8 %v1056
      %v1058 = vlaneseq
      %v1059 = vshrl.u32 %v1058, 7
      %v1060 = vsub.s32 %v1057, %v1059
      %v1061 = vrot.slane %v1053, %v1060
      %v1063 = vunpack.c.l.s4 1983009808
      %v1064 = vunpack.c.0.s8 %v1063
      %v1065 = vlaneseq
      %v1066 = vshrl.u32 %v1065, 7
      %v1067 = vsub.s32 %v1064, %v1066
      %v1068 = vrot.slane %v1054, %v1067
      %v1069 = vcombine.low %v389, %v407
      %v1070 = vcombine.high %v389, %v407
      %v1072 = vunpack.c.l.s4 1983009808
      %v1073 = vunpack.c.0.s8 %v1072
      %v1074 = vlaneseq
      %v1075 = vshrl.u32 %v1074, 7
      %v1076 = vsub.s32 %v1073, %v1075
      %v1077 = vrot.slane %v1069, %v1076
      %v1079 = vunpack.c.l.s4 1983009808
      %v1080 = vunpack.c.0.s8 %v1079
      %v1081 = vlaneseq
      %v1082 = vshrl.u32 %v1081, 7
      %v1083 = vsub.s32 %v1080, %v1082
      %v1084 = vrot.slane %v1070, %v1083
      %v1085 = vcombine.low %v1029, %v1045
      %v1086 = vcombine.high %v1029, %v1045
      %v1088 = vunpack.c.l.s4 1934713408
      %v1089 = vunpack.c.0.s8 %v1088
      %v1090 = vlaneseq
      %v1091 = vshrl.u32 %v1090, 7
      %v1092 = vsub.s32 %v1089, %v1091
      %v1093 = vrot.slane %v1085, %v1092
      %v1095 = vunpack.c.l.s4 1934713408
      %v1096 = vunpack.c.0.s8 %v1095
      %v1097 = vlaneseq
      %v1098 = vshrl.u32 %v1097, 7
      %v1099 = vsub.s32 %v1096, %v1098
      %v1100 = vrot.slane %v1086, %v1099
      %v1101 = vcombine.low %v1036, %v1052
      %v1102 = vcombine.high %v1036, %v1052
      %v1104 = vunpack.c.l.s4 1934713408
      %v1105 = vunpack.c.0.s8 %v1104
      %v1106 = vlaneseq
      %v1107 = vshrl.u32 %v1106, 7
      %v1108 = vsub.s32 %v1105, %v1107
      %v1109 = vrot.slane %v1101, %v1108
      %v1111 = vunpack.c.l.s4 1934713408
      %v1112 = vunpack.c.0.s8 %v1111
      %v1113 = vlaneseq
      %v1114 = vshrl.u32 %v1113, 7
      %v1115 = vsub.s32 %v1112, %v1114
      %v1116 = vrot.slane %v1102, %v1115
      %v1117 = vcombine.low %v1061, %v1077
      %v1118 = vcombine.high %v1061, %v1077
      %v1120 = vunpack.c.l.s4 1934713408
      %v1121 = vunpack.c.0.s8 %v1120
      %v1122 = vlaneseq
      %v1123 = vshrl.u32 %v1122, 7
      %v1124 = vsub.s32 %v1121, %v1123
      %v1125 = vrot.slane %v1117, %v1124
      %v1127 = vunpack.c.l.s4 1934713408
      %v1128 = vunpack.c.0.s8 %v1127
      %v1129 = vlaneseq
      %v1130 = vshrl.u32 %v1129, 7
      %v1131 = vsub.s32 %v1128, %v1130
      %v1132 = vrot.slane %v1118, %v1131
      %v1133 = vcombine.low %v1068, %v1084
      %v1134 = vcombine.high %v1068, %v1084
      %v1136 = vunpack.c.l.s4 1934713408
      %v1137 = vunpack.c.0.s8 %v1136
      %v1138 = vlaneseq
      %v1139 = vshrl.u32 %v1138, 7
      %v1140 = vsub.s32 %v1137, %v1139
      %v1141 = vrot.slane %v1133, %v1140
      %v1143 = vunpack.c.l.s4 1934713408
      %v1144 = vunpack.c.0.s8 %v1143
      %v1145 = vlaneseq
      %v1146 = vshrl.u32 %v1145, 7
      %v1147 = vsub.s32 %v1144, %v1146
      %v1148 = vrot.slane %v1134, %v1147
      %v1149 = vcombine.low %v1093, %v1125
      %v1150 = vcombine.high %v1093, %v1125
      %v1151 = vcombine.low %v1100, %v1132
      %v1152 = vcombine.high %v1100, %v1132
      %v1153 = vcombine.low %v1109, %v1141
      %v1154 = vcombine.high %v1109, %v1141
      %v1155 = vcombine.low %v1116, %v1148
      %v1156 = vcombine.high %v1116, %v1148
      %v1157 = vcombine.low %v335, %v428
      %v1158 = vcombine.high %v335, %v428
      %v1160 = vunpack.c.l.s4 1983009808
      %v1161 = vunpack.c.0.s8 %v1160
      %v1162 = vlaneseq
      %v1163 = vshrl.u32 %v1162, 7
      %v1164 = vsub.s32 %v1161, %v1163
      %v1165 = vrot.slane %v1157, %v1164
      %v1167 = vunpack.c.l.s4 1983009808
      %v1168 = vunpack.c.0.s8 %v1167
      %v1169 = vlaneseq
      %v1170 = vshrl.u32 %v1169, 7
      %v1171 = vsub.s32 %v1168, %v1170
      %v1172 = vrot.slane %v1158, %v1171
      %v1173 = vcombine.low %v419, %v437
      %v1174 = vcombine.high %v419, %v437
      %v1176 = vunpack.c.l.s4 1983009808
      %v1177 = vunpack.c.0.s8 %v1176
      %v1178 = vlaneseq
      %v1179 = vshrl.u32 %v1178, 7
      %v1180 = vsub.s32 %v1177, %v1179
      %v1181 = vrot.slane %v1173, %v1180
      %v1183 = vunpack.c.l.s4 1983009808
      %v1184 = vunpack.c.0.s8 %v1183
      %v1185 = vlaneseq
      %v1186 = vshrl.u32 %v1185, 7
      %v1187 = vsub.s32 %v1184, %v1186
      %v1188 = vrot.slane %v1174, %v1187
      %v1189 = vcombine.low %v446, %v464
      %v1190 = vcombine.high %v446, %v464
      %v1192 = vunpack.c.l.s4 1983009808
      %v1193 = vunpack.c.0.s8 %v1192
      %v1194 = vlaneseq
      %v1195 = vshrl.u32 %v1194, 7
      %v1196 = vsub.s32 %v1193, %v1195
      %v1197 = vrot.slane %v1189, %v1196
      %v1199 = vunpack.c.l.s4 1983009808
      %v1200 = vunpack.c.0.s8 %v1199
      %v1201 = vlaneseq
      %v1202 = vshrl.u32 %v1201, 7
      %v1203 = vsub.s32 %v1200, %v1202
      %v1204 = vrot.slane %v1190, %v1203
      %v1205 = vcombine.low %v455, %v473
      %v1206 = vcombine.high %v455, %v473
      %v1208 = vunpack.c.l.s4 1983009808
      %v1209 = vunpack.c.0.s8 %v1208
      %v1210 = vlaneseq
      %v1211 = vshrl.u32 %v1210, 7
      %v1212 = vsub.s32 %v1209, %v1211
      %v1213 = vrot.slane %v1205, %v1212
      %v1215 = vunpack.c.l.s4 1983009808
      %v1216 = vunpack.c.0.s8 %v1215
      %v1217 = vlaneseq
      %v1218 = vshrl.u32 %v1217, 7
      %v1219 = vsub.s32 %v1216, %v1218
      %v1220 = vrot.slane %v1206, %v1219
      %v1221 = vcombine.low %v1165, %v1181
      %v1222 = vcombine.high %v1165, %v1181
      %v1224 = vunpack.c.l.s4 1934713408
      %v1225 = vunpack.c.0.s8 %v1224
      %v1226 = vlaneseq
      %v1227 = vshrl.u32 %v1226, 7
      %v1228 = vsub.s32 %v1225, %v1227
      %v1229 = vrot.slane %v1221, %v1228
      %v1231 = vunpack.c.l.s4 1934713408
      %v1232 = vunpack.c.0.s8 %v1231
      %v1233 = vlaneseq
      %v1234 = vshrl.u32 %v1233, 7
      %v1235 = vsub.s32 %v1232, %v1234
      %v1236 = vrot.slane %v1222, %v1235
      %v1237 = vcombine.low %v1172, %v1188
      %v1238 = vcombine.high %v1172, %v1188
      %v1240 = vunpack.c.l.s4 1934713408
      %v1241 = vunpack.c.0.s8 %v1240
      %v1242 = vlaneseq
      %v1243 = vshrl.u32 %v1242, 7
      %v1244 = vsub.s32 %v1241, %v1243
      %v1245 = vrot.slane %v1237, %v1244
      %v1247 = vunpack.c.l.s4 1934713408
      %v1248 = vunpack.c.0.s8 %v1247
      %v1249 = vlaneseq
      %v1250 = vshrl.u32 %v1249, 7
      %v1251 = vsub.s32 %v1248, %v1250
      %v1252 = vrot.slane %v1238, %v1251
      %v1253 = vcombine.low %v1197, %v1213
      %v1254 = vcombine.high %v1197, %v1213
      %v1256 = vunpack.c.l.s4 1934713408
      %v1257 = vunpack.c.0.s8 %v1256
      %v1258 = vlaneseq
      %v1259 = vshrl.u32 %v1258, 7
      %v1260 = vsub.s32 %v1257, %v1259
      %v1261 = vrot.slane %v1253, %v1260
      %v1263 = vunpack.c.l.s4 1934713408
      %v1264 = vunpack.c.0.s8 %v1263
      %v1265 = vlaneseq
      %v1266 = vshrl.u32 %v1265, 7
      %v1267 = vsub.s32 %v1264, %v1266
      %v1268 = vrot.slane %v1254, %v1267
      %v1269 = vcombine.low %v1204, %v1220
      %v1270 = vcombine.high %v1204, %v1220
      %v1272 = vunpack.c.l.s4 1934713408
      %v1273 = vunpack.c.0.s8 %v1272
      %v1274 = vlaneseq
      %v1275 = vshrl.u32 %v1274, 7
      %v1276 = vsub.s32 %v1273, %v1275
      %v1277 = vrot.slane %v1269, %v1276
      %v1279 = vunpack.c.l.s4 1934713408
      %v1280 = vunpack.c.0.s8 %v1279
      %v1281 = vlaneseq
      %v1282 = vshrl.u32 %v1281, 7
      %v1283 = vsub.s32 %v1280, %v1282
      %v1284 = vrot.slane %v1270, %v1283
      %v1285 = vcombine.low %v1229, %v1261
      %v1286 = vcombine.high %v1229, %v1261
      %v1287 = vcombine.low %v1236, %v1268
      %v1288 = vcombine.high %v1236, %v1268
      %v1289 = vcombine.low %v1245, %v1277
      %v1290 = vcombine.high %v1245, %v1277
      %v1291 = vcombine.low %v1252, %v1284
      %v1292 = vcombine.high %v1252, %v1284
      %v1293 = vld [vmem:[%s321] sm:$0xff]
      %v1294 = vld [vmem:[%s321 + $0x8] sm:$0xff]
      %v1295 = vld [vmem:[%s321 + $0x10] sm:$0xff]
      %v1296 = vld [vmem:[%s321 + $0x18] sm:$0xff]
      %v1297 = vld [vmem:[%s321 + $0x20] sm:$0xff]
      %v1298 = vld [vmem:[%s321 + $0x28] sm:$0xff]
      %v1299 = vld [vmem:[%s321 + $0x30] sm:$0xff]
      %v1300 = vld [vmem:[%s321 + $0x38] sm:$0xff]
      %v1301 = vld [vmem:[%s321 + $0x40] sm:$0xff]
      %v1302 = vld [vmem:[%s321 + $0x48] sm:$0xff]
      %v1303 = vld [vmem:[%s321 + $0x50] sm:$0xff]
      %v1304 = vld [vmem:[%s321 + $0x58] sm:$0xff]
      %v1305 = vld [vmem:[%s321 + $0x60] sm:$0xff]
      %v1306 = vld [vmem:[%s321 + $0x68] sm:$0xff]
      %v1307 = vld [vmem:[%s321 + $0x70] sm:$0xff]
      %v1308 = vld [vmem:[%s321 + $0x78] sm:$0xff]
      %v1309 = vld [vmem:[%s321 + $0x80] sm:$0xff]
      %v1310 = vld [vmem:[%s321 + $0x88] sm:$0xff]
      %v1311 = vld [vmem:[%s321 + $0x90] sm:$0xff]
      %v1312 = vld [vmem:[%s321 + $0x98] sm:$0xff]
      %v1313 = vld [vmem:[%s321 + $0xa0] sm:$0xff]
      %v1314 = vld [vmem:[%s321 + $0xa8] sm:$0xff]
      %v1315 = vld [vmem:[%s321 + $0xb0] sm:$0xff]
      %v1316 = vld [vmem:[%s321 + $0xb8] sm:$0xff]
      %v1317 = vld [vmem:[%s321 + $0xc0] sm:$0xff]
      %v1318 = vld [vmem:[%s321 + $0xc8] sm:$0xff]
      %v1319 = vld [vmem:[%s321 + $0xd0] sm:$0xff]
      %v1320 = vld [vmem:[%s321 + $0xd8] sm:$0xff]
      %v1321 = vld [vmem:[%s321 + $0xe0] sm:$0xff]
      %v1322 = vld [vmem:[%s321 + $0xe8] sm:$0xff]
      %v1323 = vld [vmem:[%s321 + $0xf0] sm:$0xff]
      %v1324 = vld [vmem:[%s321 + $0xf8] sm:$0xff]
      %v1325 = vld [vmem:[%s321 + $0x100] sm:$0xff]
      %v1326 = vld [vmem:[%s321 + $0x108] sm:$0xff]
      %v1327 = vld [vmem:[%s321 + $0x110] sm:$0xff]
      %v1328 = vld [vmem:[%s321 + $0x118] sm:$0xff]
      %v1329 = vld [vmem:[%s321 + $0x120] sm:$0xff]
      %v1330 = vld [vmem:[%s321 + $0x128] sm:$0xff]
      %v1331 = vld [vmem:[%s321 + $0x130] sm:$0xff]
      %v1332 = vld [vmem:[%s321 + $0x138] sm:$0xff]
      %v1333 = vld [vmem:[%s321 + $0x140] sm:$0xff]
      %v1334 = vld [vmem:[%s321 + $0x148] sm:$0xff]
      %v1335 = vld [vmem:[%s321 + $0x150] sm:$0xff]
      %v1336 = vld [vmem:[%s321 + $0x158] sm:$0xff]
      %v1337 = vld [vmem:[%s321 + $0x160] sm:$0xff]
      %v1338 = vld [vmem:[%s321 + $0x168] sm:$0xff]
      %v1339 = vld [vmem:[%s321 + $0x170] sm:$0xff]
      %v1340 = vld [vmem:[%s321 + $0x178] sm:$0xff]
      %vm1341 = vcmask 130048
      %v1343 = vsel %vm1341, %v605, 0
      %v1346 = vsel %vm1341, %v741, 0
      %1348 = vmatprep.subr.mxu0 0.0
      %1349 = vmatpush1.msra.mxu0 0.0
      %1350 = vmatprep.subr.mxu0 0.0
      %1351 = vmatpush1.msra.mxu0 0.0
      %1352 = vmatprep.subr.mxu0 0.0
      %1353 = vmatpush1.msra.mxu0 0.0
      %1354 = vmatprep.subr.mxu0 0.0
      %1355 = vmatpush1.msra.mxu0 0.0
      %1356 = vmatprep.subr.mxu0 0.0
      %1357 = vmatpush1.msra.mxu0 0.0
      %1358 = vmatprep.subr.mxu0 0.0
      %1359 = vmatpush1.msra.mxu0 0.0
      %1360 = vmatprep.subr.mxu0 0.0
      %1361 = vmatpush1.msra.mxu0 0.0
      %1362 = vmatprep.subr.mxu0 0.0
      %1363 = vmatpush1.msra.mxu0 0.0
      %1364 = vmatprep.subr.mxu0 0.0
      %1365 = vmatpush1.msra.mxu0 0.0
      %1366 = vmatprep.subr.mxu0 0.0
      %1367 = vmatpush1.msra.mxu0 0.0
      %1368 = vmatprep.subr.mxu0 0.0
      %1369 = vmatpush1.msra.mxu0 0.0
      %1370 = vmatprep.subr.mxu0 0.0
      %1371 = vmatpush1.msra.mxu0 0.0
      %1372 = vmatprep.subr.mxu0 0.0
      %1373 = vmatpush1.msra.mxu0 0.0
      %1374 = vmatprep.subr.mxu0 0.0
      %1375 = vmatpush1.msra.mxu0 0.0
      %1376 = vmatprep.subr.mxu0 0.0
      %1377 = vmatpush1.msra.mxu0 %v1294
      %1378 = vmatprep.subr.mxu0 0.0
      %1379 = vmatpush1.msra.mxu0 %v1293
      %1380 = vmatprep.subr.mxu0 0.0
      %1381 = vmatpush2.msra.mxu0 0.0
      %1382 = vmatprep.subr.mxu0 0.0
      %1383 = vmatpush2.msra.mxu0 0.0
      %1384 = vmatprep.subr.mxu0 0.0
      %1385 = vmatpush2.msra.mxu0 0.0
      %1386 = vmatprep.subr.mxu0 0.0
      %1387 = vmatpush2.msra.mxu0 0.0
      %1388 = vmatprep.subr.mxu0 0.0
      %1389 = vmatpush2.msra.mxu0 0.0
      %1390 = vmatprep.subr.mxu0 0.0
      %1391 = vmatpush2.msra.mxu0 0.0
      %1392 = vmatprep.subr.mxu0 0.0
      %1393 = vmatpush2.msra.mxu0 0.0
      %1394 = vmatprep.subr.mxu0 0.0
      %1395 = vmatpush2.msra.mxu0 0.0
      %1396 = vmatprep.subr.mxu0 0.0
      %1397 = vmatpush2.msra.mxu0 0.0
      %1398 = vmatprep.subr.mxu0 0.0
      %1399 = vmatpush2.msra.mxu0 0.0
      %1400 = vmatprep.subr.mxu0 0.0
      %1401 = vmatpush2.msra.mxu0 0.0
      %1402 = vmatprep.subr.mxu0 0.0
      %1403 = vmatpush2.msra.mxu0 0.0
      %1404 = vmatprep.subr.mxu0 0.0
      %1405 = vmatpush2.msra.mxu0 0.0
      %1406 = vmatprep.subr.mxu0 0.0
      %1407 = vmatpush2.msra.mxu0 0.0
      %1408 = vmatprep.subr.mxu0 0.0
      %1409 = vmatpush2.msra.mxu0 0.0
      %1410 = vmatprep.subr.mxu0 0.0
      %1411 = vmatpush2.msra.mxu0 0.0
      %1412 = vmatprep.mubr.f32.mxu0 0.0
      %1413 = vmatmul.mubr.f32.gmra.mxu0 %v1343
      %v1414 = vpop.f32.mrf.mxu0
      %v1415 = vadd.f32 0.0, %v1414
      %v1416 = vpop.f32.mrf.mxu0
      %1417 = vmatprep.mubr.f32.mxu0 0.0
      %1418 = vmatmul.mubr.f32.gmra.mxu0 %v1346
      %v1419 = vpop.f32.mrf.mxu0
      %v1420 = vadd.f32 0.0, %v1419
      %v1421 = vpop.f32.mrf.mxu0
      %1422 = vdwg.mxu0
      %v1424 = vsel %vm1341, %v606, 0
      %v1427 = vsel %vm1341, %v742, 0
      %1429 = vmatprep.subr.mxu0 0.0
      %1430 = vmatpush1.msra.mxu0 0.0
      %1431 = vmatprep.subr.mxu0 0.0
      %1432 = vmatpush1.msra.mxu0 0.0
      %1433 = vmatprep.subr.mxu0 0.0
      %1434 = vmatpush1.msra.mxu0 0.0
      %1435 = vmatprep.subr.mxu0 0.0
      %1436 = vmatpush1.msra.mxu0 0.0
      %1437 = vmatprep.subr.mxu0 0.0
      %1438 = vmatpush1.msra.mxu0 0.0
      %1439 = vmatprep.subr.mxu0 0.0
      %1440 = vmatpush1.msra.mxu0 0.0
      %1441 = vmatprep.subr.mxu0 0.0
      %1442 = vmatpush1.msra.mxu0 0.0
      %1443 = vmatprep.subr.mxu0 0.0
      %1444 = vmatpush1.msra.mxu0 0.0
      %1445 = vmatprep.subr.mxu0 0.0
      %1446 = vmatpush1.msra.mxu0 0.0
      %1447 = vmatprep.subr.mxu0 0.0
      %1448 = vmatpush1.msra.mxu0 0.0
      %1449 = vmatprep.subr.mxu0 0.0
      %1450 = vmatpush1.msra.mxu0 0.0
      %1451 = vmatprep.subr.mxu0 0.0
      %1452 = vmatpush1.msra.mxu0 0.0
      %1453 = vmatprep.subr.mxu0 0.0
      %1454 = vmatpush1.msra.mxu0 0.0
      %1455 = vmatprep.subr.mxu0 0.0
      %1456 = vmatpush1.msra.mxu0 0.0
      %1457 = vmatprep.subr.mxu0 0.0
      %1458 = vmatpush1.msra.mxu0 %v1296
      %1459 = vmatprep.subr.mxu0 0.0
      %1460 = vmatpush1.msra.mxu0 %v1295
      %1461 = vmatprep.subr.mxu0 0.0
      %1462 = vmatpush2.msra.mxu0 0.0
      %1463 = vmatprep.subr.mxu0 0.0
      %1464 = vmatpush2.msra.mxu0 0.0
      %1465 = vmatprep.subr.mxu0 0.0
      %1466 = vmatpush2.msra.mxu0 0.0
      %1467 = vmatprep.subr.mxu0 0.0
      %1468 = vmatpush2.msra.mxu0 0.0
      %1469 = vmatprep.subr.mxu0 0.0
      %1470 = vmatpush2.msra.mxu0 0.0
      %1471 = vmatprep.subr.mxu0 0.0
      %1472 = vmatpush2.msra.mxu0 0.0
      %1473 = vmatprep.subr.mxu0 0.0
      %1474 = vmatpush2.msra.mxu0 0.0
      %1475 = vmatprep.subr.mxu0 0.0
      %1476 = vmatpush2.msra.mxu0 0.0
      %1477 = vmatprep.subr.mxu0 0.0
      %1478 = vmatpush2.msra.mxu0 0.0
      %1479 = vmatprep.subr.mxu0 0.0
      %1480 = vmatpush2.msra.mxu0 0.0
      %1481 = vmatprep.subr.mxu0 0.0
      %1482 = vmatpush2.msra.mxu0 0.0
      %1483 = vmatprep.subr.mxu0 0.0
      %1484 = vmatpush2.msra.mxu0 0.0
      %1485 = vmatprep.subr.mxu0 0.0
      %1486 = vmatpush2.msra.mxu0 0.0
      %1487 = vmatprep.subr.mxu0 0.0
      %1488 = vmatpush2.msra.mxu0 0.0
      %1489 = vmatprep.subr.mxu0 0.0
      %1490 = vmatpush2.msra.mxu0 0.0
      %1491 = vmatprep.subr.mxu0 0.0
      %1492 = vmatpush2.msra.mxu0 0.0
      %1493 = vmatprep.mubr.f32.mxu0 0.0
      %1494 = vmatmul.mubr.f32.gmra.mxu0 %v1424
      %v1495 = vpop.f32.mrf.mxu0
      %v1496 = vadd.f32 0.0, %v1495
      %v1497 = vpop.f32.mrf.mxu0
      %1498 = vmatprep.mubr.f32.mxu0 0.0
      %1499 = vmatmul.mubr.f32.gmra.mxu0 %v1427
      %v1500 = vpop.f32.mrf.mxu0
      %v1501 = vadd.f32 0.0, %v1500
      %v1502 = vpop.f32.mrf.mxu0
      %1503 = vdwg.mxu0
      %v1505 = vsel %vm1341, %v607, 0
      %v1508 = vsel %vm1341, %v743, 0
      %1510 = vmatprep.subr.mxu0 0.0
      %1511 = vmatpush1.msra.mxu0 0.0
      %1512 = vmatprep.subr.mxu0 0.0
      %1513 = vmatpush1.msra.mxu0 0.0
      %1514 = vmatprep.subr.mxu0 0.0
      %1515 = vmatpush1.msra.mxu0 0.0
      %1516 = vmatprep.subr.mxu0 0.0
      %1517 = vmatpush1.msra.mxu0 0.0
      %1518 = vmatprep.subr.mxu0 0.0
      %1519 = vmatpush1.msra.mxu0 0.0
      %1520 = vmatprep.subr.mxu0 0.0
      %1521 = vmatpush1.msra.mxu0 0.0
      %1522 = vmatprep.subr.mxu0 0.0
      %1523 = vmatpush1.msra.mxu0 0.0
      %1524 = vmatprep.subr.mxu0 0.0
      %1525 = vmatpush1.msra.mxu0 0.0
      %1526 = vmatprep.subr.mxu0 0.0
      %1527 = vmatpush1.msra.mxu0 0.0
      %1528 = vmatprep.subr.mxu0 0.0
      %1529 = vmatpush1.msra.mxu0 0.0
      %1530 = vmatprep.subr.mxu0 0.0
      %1531 = vmatpush1.msra.mxu0 0.0
      %1532 = vmatprep.subr.mxu0 0.0
      %1533 = vmatpush1.msra.mxu0 0.0
      %1534 = vmatprep.subr.mxu0 0.0
      %1535 = vmatpush1.msra.mxu0 0.0
      %1536 = vmatprep.subr.mxu0 0.0
      %1537 = vmatpush1.msra.mxu0 0.0
      %1538 = vmatprep.subr.mxu0 0.0
      %1539 = vmatpush1.msra.mxu0 %v1298
      %1540 = vmatprep.subr.mxu0 0.0
      %1541 = vmatpush1.msra.mxu0 %v1297
      %1542 = vmatprep.subr.mxu0 0.0
      %1543 = vmatpush2.msra.mxu0 0.0
      %1544 = vmatprep.subr.mxu0 0.0
      %1545 = vmatpush2.msra.mxu0 0.0
      %1546 = vmatprep.subr.mxu0 0.0
      %1547 = vmatpush2.msra.mxu0 0.0
      %1548 = vmatprep.subr.mxu0 0.0
      %1549 = vmatpush2.msra.mxu0 0.0
      %1550 = vmatprep.subr.mxu0 0.0
      %1551 = vmatpush2.msra.mxu0 0.0
      %1552 = vmatprep.subr.mxu0 0.0
      %1553 = vmatpush2.msra.mxu0 0.0
      %1554 = vmatprep.subr.mxu0 0.0
      %1555 = vmatpush2.msra.mxu0 0.0
      %1556 = vmatprep.subr.mxu0 0.0
      %1557 = vmatpush2.msra.mxu0 0.0
      %1558 = vmatprep.subr.mxu0 0.0
      %1559 = vmatpush2.msra.mxu0 0.0
      %1560 = vmatprep.subr.mxu0 0.0
      %1561 = vmatpush2.msra.mxu0 0.0
      %1562 = vmatprep.subr.mxu0 0.0
      %1563 = vmatpush2.msra.mxu0 0.0
      %1564 = vmatprep.subr.mxu0 0.0
      %1565 = vmatpush2.msra.mxu0 0.0
      %1566 = vmatprep.subr.mxu0 0.0
      %1567 = vmatpush2.msra.mxu0 0.0
      %1568 = vmatprep.subr.mxu0 0.0
      %1569 = vmatpush2.msra.mxu0 0.0
      %1570 = vmatprep.subr.mxu0 0.0
      %1571 = vmatpush2.msra.mxu0 0.0
      %1572 = vmatprep.subr.mxu0 0.0
      %1573 = vmatpush2.msra.mxu0 0.0
      %1574 = vmatprep.mubr.f32.mxu0 0.0
      %1575 = vmatmul.mubr.f32.gmra.mxu0 %v1505
      %v1576 = vpop.f32.mrf.mxu0
      %v1577 = vadd.f32 0.0, %v1576
      %v1578 = vpop.f32.mrf.mxu0
      %1579 = vmatprep.mubr.f32.mxu0 0.0
      %1580 = vmatmul.mubr.f32.gmra.mxu0 %v1508
      %v1581 = vpop.f32.mrf.mxu0
      %v1582 = vadd.f32 0.0, %v1581
      %v1583 = vpop.f32.mrf.mxu0
      %1584 = vdwg.mxu0
      %v1586 = vsel %vm1341, %v608, 0
      %v1589 = vsel %vm1341, %v744, 0
      %1591 = vmatprep.subr.mxu0 0.0
      %1592 = vmatpush1.msra.mxu0 0.0
      %1593 = vmatprep.subr.mxu0 0.0
      %1594 = vmatpush1.msra.mxu0 0.0
      %1595 = vmatprep.subr.mxu0 0.0
      %1596 = vmatpush1.msra.mxu0 0.0
      %1597 = vmatprep.subr.mxu0 0.0
      %1598 = vmatpush1.msra.mxu0 0.0
      %1599 = vmatprep.subr.mxu0 0.0
      %1600 = vmatpush1.msra.mxu0 0.0
      %1601 = vmatprep.subr.mxu0 0.0
      %1602 = vmatpush1.msra.mxu0 0.0
      %1603 = vmatprep.subr.mxu0 0.0
      %1604 = vmatpush1.msra.mxu0 0.0
      %1605 = vmatprep.subr.mxu0 0.0
      %1606 = vmatpush1.msra.mxu0 0.0
      %1607 = vmatprep.subr.mxu0 0.0
      %1608 = vmatpush1.msra.mxu0 0.0
      %1609 = vmatprep.subr.mxu0 0.0
      %1610 = vmatpush1.msra.mxu0 0.0
      %1611 = vmatprep.subr.mxu0 0.0
      %1612 = vmatpush1.msra.mxu0 0.0
      %1613 = vmatprep.subr.mxu0 0.0
      %1614 = vmatpush1.msra.mxu0 0.0
      %1615 = vmatprep.subr.mxu0 0.0
      %1616 = vmatpush1.msra.mxu0 0.0
      %1617 = vmatprep.subr.mxu0 0.0
      %1618 = vmatpush1.msra.mxu0 0.0
      %1619 = vmatprep.subr.mxu0 0.0
      %1620 = vmatpush1.msra.mxu0 %v1300
      %1621 = vmatprep.subr.mxu0 0.0
      %1622 = vmatpush1.msra.mxu0 %v1299
      %1623 = vmatprep.subr.mxu0 0.0
      %1624 = vmatpush2.msra.mxu0 0.0
      %1625 = vmatprep.subr.mxu0 0.0
      %1626 = vmatpush2.msra.mxu0 0.0
      %1627 = vmatprep.subr.mxu0 0.0
      %1628 = vmatpush2.msra.mxu0 0.0
      %1629 = vmatprep.subr.mxu0 0.0
      %1630 = vmatpush2.msra.mxu0 0.0
      %1631 = vmatprep.subr.mxu0 0.0
      %1632 = vmatpush2.msra.mxu0 0.0
      %1633 = vmatprep.subr.mxu0 0.0
      %1634 = vmatpush2.msra.mxu0 0.0
      %1635 = vmatprep.subr.mxu0 0.0
      %1636 = vmatpush2.msra.mxu0 0.0
      %1637 = vmatprep.subr.mxu0 0.0
      %1638 = vmatpush2.msra.mxu0 0.0
      %1639 = vmatprep.subr.mxu0 0.0
      %1640 = vmatpush2.msra.mxu0 0.0
      %1641 = vmatprep.subr.mxu0 0.0
      %1642 = vmatpush2.msra.mxu0 0.0
      %1643 = vmatprep.subr.mxu0 0.0
      %1644 = vmatpush2.msra.mxu0 0.0
      %1645 = vmatprep.subr.mxu0 0.0
      %1646 = vmatpush2.msra.mxu0 0.0
      %1647 = vmatprep.subr.mxu0 0.0
      %1648 = vmatpush2.msra.mxu0 0.0
      %1649 = vmatprep.subr.mxu0 0.0
      %1650 = vmatpush2.msra.mxu0 0.0
      %1651 = vmatprep.subr.mxu0 0.0
      %1652 = vmatpush2.msra.mxu0 0.0
      %1653 = vmatprep.subr.mxu0 0.0
      %1654 = vmatpush2.msra.mxu0 0.0
      %1655 = vmatprep.mubr.f32.mxu0 0.0
      %1656 = vmatmul.mubr.f32.gmra.mxu0 %v1586
      %v1657 = vpop.f32.mrf.mxu0
      %v1658 = vadd.f32 0.0, %v1657
      %v1659 = vpop.f32.mrf.mxu0
      %1660 = vmatprep.mubr.f32.mxu0 0.0
      %1661 = vmatmul.mubr.f32.gmra.mxu0 %v1589
      %v1662 = vpop.f32.mrf.mxu0
      %v1663 = vadd.f32 0.0, %v1662
      %v1664 = vpop.f32.mrf.mxu0
      %1665 = vdwg.mxu0
      %v1667 = vsel %vm1341, %v609, 0
      %v1670 = vsel %vm1341, %v745, 0
      %1672 = vmatprep.subr.mxu0 0.0
      %1673 = vmatpush1.msra.mxu0 0.0
      %1674 = vmatprep.subr.mxu0 0.0
      %1675 = vmatpush1.msra.mxu0 0.0
      %1676 = vmatprep.subr.mxu0 0.0
      %1677 = vmatpush1.msra.mxu0 0.0
      %1678 = vmatprep.subr.mxu0 0.0
      %1679 = vmatpush1.msra.mxu0 0.0
      %1680 = vmatprep.subr.mxu0 0.0
      %1681 = vmatpush1.msra.mxu0 0.0
      %1682 = vmatprep.subr.mxu0 0.0
      %1683 = vmatpush1.msra.mxu0 0.0
      %1684 = vmatprep.subr.mxu0 0.0
      %1685 = vmatpush1.msra.mxu0 0.0
      %1686 = vmatprep.subr.mxu0 0.0
      %1687 = vmatpush1.msra.mxu0 0.0
      %1688 = vmatprep.subr.mxu0 0.0
      %1689 = vmatpush1.msra.mxu0 0.0
      %1690 = vmatprep.subr.mxu0 0.0
      %1691 = vmatpush1.msra.mxu0 0.0
      %1692 = vmatprep.subr.mxu0 0.0
      %1693 = vmatpush1.msra.mxu0 0.0
      %1694 = vmatprep.subr.mxu0 0.0
      %1695 = vmatpush1.msra.mxu0 0.0
      %1696 = vmatprep.subr.mxu0 0.0
      %1697 = vmatpush1.msra.mxu0 0.0
      %1698 = vmatprep.subr.mxu0 0.0
      %1699 = vmatpush1.msra.mxu0 0.0
      %1700 = vmatprep.subr.mxu0 0.0
      %1701 = vmatpush1.msra.mxu0 %v1302
      %1702 = vmatprep.subr.mxu0 0.0
      %1703 = vmatpush1.msra.mxu0 %v1301
      %1704 = vmatprep.subr.mxu0 0.0
      %1705 = vmatpush2.msra.mxu0 0.0
      %1706 = vmatprep.subr.mxu0 0.0
      %1707 = vmatpush2.msra.mxu0 0.0
      %1708 = vmatprep.subr.mxu0 0.0
      %1709 = vmatpush2.msra.mxu0 0.0
      %1710 = vmatprep.subr.mxu0 0.0
      %1711 = vmatpush2.msra.mxu0 0.0
      %1712 = vmatprep.subr.mxu0 0.0
      %1713 = vmatpush2.msra.mxu0 0.0
      %1714 = vmatprep.subr.mxu0 0.0
      %1715 = vmatpush2.msra.mxu0 0.0
      %1716 = vmatprep.subr.mxu0 0.0
      %1717 = vmatpush2.msra.mxu0 0.0
      %1718 = vmatprep.subr.mxu0 0.0
      %1719 = vmatpush2.msra.mxu0 0.0
      %1720 = vmatprep.subr.mxu0 0.0
      %1721 = vmatpush2.msra.mxu0 0.0
      %1722 = vmatprep.subr.mxu0 0.0
      %1723 = vmatpush2.msra.mxu0 0.0
      %1724 = vmatprep.subr.mxu0 0.0
      %1725 = vmatpush2.msra.mxu0 0.0
      %1726 = vmatprep.subr.mxu0 0.0
      %1727 = vmatpush2.msra.mxu0 0.0
      %1728 = vmatprep.subr.mxu0 0.0
      %1729 = vmatpush2.msra.mxu0 0.0
      %1730 = vmatprep.subr.mxu0 0.0
      %1731 = vmatpush2.msra.mxu0 0.0
      %1732 = vmatprep.subr.mxu0 0.0
      %1733 = vmatpush2.msra.mxu0 0.0
      %1734 = vmatprep.subr.mxu0 0.0
      %1735 = vmatpush2.msra.mxu0 0.0
      %1736 = vmatprep.mubr.f32.mxu0 0.0
      %1737 = vmatmul.mubr.f32.gmra.mxu0 %v1667
      %v1738 = vpop.f32.mrf.mxu0
      %v1739 = vadd.f32 0.0, %v1738
      %v1740 = vpop.f32.mrf.mxu0
      %1741 = vmatprep.mubr.f32.mxu0 0.0
      %1742 = vmatmul.mubr.f32.gmra.mxu0 %v1670
      %v1743 = vpop.f32.mrf.mxu0
      %v1744 = vadd.f32 0.0, %v1743
      %v1745 = vpop.f32.mrf.mxu0
      %1746 = vdwg.mxu0
      %v1748 = vsel %vm1341, %v610, 0
      %v1751 = vsel %vm1341, %v746, 0
      %1753 = vmatprep.subr.mxu0 0.0
      %1754 = vmatpush1.msra.mxu0 0.0
      %1755 = vmatprep.subr.mxu0 0.0
      %1756 = vmatpush1.msra.mxu0 0.0
      %1757 = vmatprep.subr.mxu0 0.0
      %1758 = vmatpush1.msra.mxu0 0.0
      %1759 = vmatprep.subr.mxu0 0.0
      %1760 = vmatpush1.msra.mxu0 0.0
      %1761 = vmatprep.subr.mxu0 0.0
      %1762 = vmatpush1.msra.mxu0 0.0
      %1763 = vmatprep.subr.mxu0 0.0
      %1764 = vmatpush1.msra.mxu0 0.0
      %1765 = vmatprep.subr.mxu0 0.0
      %1766 = vmatpush1.msra.mxu0 0.0
      %1767 = vmatprep.subr.mxu0 0.0
      %1768 = vmatpush1.msra.mxu0 0.0
      %1769 = vmatprep.subr.mxu0 0.0
      %1770 = vmatpush1.msra.mxu0 0.0
      %1771 = vmatprep.subr.mxu0 0.0
      %1772 = vmatpush1.msra.mxu0 0.0
      %1773 = vmatprep.subr.mxu0 0.0
      %1774 = vmatpush1.msra.mxu0 0.0
      %1775 = vmatprep.subr.mxu0 0.0
      %1776 = vmatpush1.msra.mxu0 0.0
      %1777 = vmatprep.subr.mxu0 0.0
      %1778 = vmatpush1.msra.mxu0 0.0
      %1779 = vmatprep.subr.mxu0 0.0
      %1780 = vmatpush1.msra.mxu0 0.0
      %1781 = vmatprep.subr.mxu0 0.0
      %1782 = vmatpush1.msra.mxu0 %v1304
      %1783 = vmatprep.subr.mxu0 0.0
      %1784 = vmatpush1.msra.mxu0 %v1303
      %1785 = vmatprep.subr.mxu0 0.0
      %1786 = vmatpush2.msra.mxu0 0.0
      %1787 = vmatprep.subr.mxu0 0.0
      %1788 = vmatpush2.msra.mxu0 0.0
      %1789 = vmatprep.subr.mxu0 0.0
      %1790 = vmatpush2.msra.mxu0 0.0
      %1791 = vmatprep.subr.mxu0 0.0
      %1792 = vmatpush2.msra.mxu0 0.0
      %1793 = vmatprep.subr.mxu0 0.0
      %1794 = vmatpush2.msra.mxu0 0.0
      %1795 = vmatprep.subr.mxu0 0.0
      %1796 = vmatpush2.msra.mxu0 0.0
      %1797 = vmatprep.subr.mxu0 0.0
      %1798 = vmatpush2.msra.mxu0 0.0
      %1799 = vmatprep.subr.mxu0 0.0
      %1800 = vmatpush2.msra.mxu0 0.0
      %1801 = vmatprep.subr.mxu0 0.0
      %1802 = vmatpush2.msra.mxu0 0.0
      %1803 = vmatprep.subr.mxu0 0.0
      %1804 = vmatpush2.msra.mxu0 0.0
      %1805 = vmatprep.subr.mxu0 0.0
      %1806 = vmatpush2.msra.mxu0 0.0
      %1807 = vmatprep.subr.mxu0 0.0
      %1808 = vmatpush2.msra.mxu0 0.0
      %1809 = vmatprep.subr.mxu0 0.0
      %1810 = vmatpush2.msra.mxu0 0.0
      %1811 = vmatprep.subr.mxu0 0.0
      %1812 = vmatpush2.msra.mxu0 0.0
      %1813 = vmatprep.subr.mxu0 0.0
      %1814 = vmatpush2.msra.mxu0 0.0
      %1815 = vmatprep.subr.mxu0 0.0
      %1816 = vmatpush2.msra.mxu0 0.0
      %1817 = vmatprep.mubr.f32.mxu0 0.0
      %1818 = vmatmul.mubr.f32.gmra.mxu0 %v1748
      %v1819 = vpop.f32.mrf.mxu0
      %v1820 = vadd.f32 0.0, %v1819
      %v1821 = vpop.f32.mrf.mxu0
      %1822 = vmatprep.mubr.f32.mxu0 0.0
      %1823 = vmatmul.mubr.f32.gmra.mxu0 %v1751
      %v1824 = vpop.f32.mrf.mxu0
      %v1825 = vadd.f32 0.0, %v1824
      %v1826 = vpop.f32.mrf.mxu0
      %1827 = vdwg.mxu0
      %v1829 = vsel %vm1341, %v611, 0
      %v1832 = vsel %vm1341, %v747, 0
      %1834 = vmatprep.subr.mxu0 0.0
      %1835 = vmatpush1.msra.mxu0 0.0
      %1836 = vmatprep.subr.mxu0 0.0
      %1837 = vmatpush1.msra.mxu0 0.0
      %1838 = vmatprep.subr.mxu0 0.0
      %1839 = vmatpush1.msra.mxu0 0.0
      %1840 = vmatprep.subr.mxu0 0.0
      %1841 = vmatpush1.msra.mxu0 0.0
      %1842 = vmatprep.subr.mxu0 0.0
      %1843 = vmatpush1.msra.mxu0 0.0
      %1844 = vmatprep.subr.mxu0 0.0
      %1845 = vmatpush1.msra.mxu0 0.0
      %1846 = vmatprep.subr.mxu0 0.0
      %1847 = vmatpush1.msra.mxu0 0.0
      %1848 = vmatprep.subr.mxu0 0.0
      %1849 = vmatpush1.msra.mxu0 0.0
      %1850 = vmatprep.subr.mxu0 0.0
      %1851 = vmatpush1.msra.mxu0 0.0
      %1852 = vmatprep.subr.mxu0 0.0
      %1853 = vmatpush1.msra.mxu0 0.0
      %1854 = vmatprep.subr.mxu0 0.0
      %1855 = vmatpush1.msra.mxu0 0.0
      %1856 = vmatprep.subr.mxu0 0.0
      %1857 = vmatpush1.msra.mxu0 0.0
      %1858 = vmatprep.subr.mxu0 0.0
      %1859 = vmatpush1.msra.mxu0 0.0
      %1860 = vmatprep.subr.mxu0 0.0
      %1861 = vmatpush1.msra.mxu0 0.0
      %1862 = vmatprep.subr.mxu0 0.0
      %1863 = vmatpush1.msra.mxu0 %v1306
      %1864 = vmatprep.subr.mxu0 0.0
      %1865 = vmatpush1.msra.mxu0 %v1305
      %1866 = vmatprep.subr.mxu0 0.0
      %1867 = vmatpush2.msra.mxu0 0.0
      %1868 = vmatprep.subr.mxu0 0.0
      %1869 = vmatpush2.msra.mxu0 0.0
      %1870 = vmatprep.subr.mxu0 0.0
      %1871 = vmatpush2.msra.mxu0 0.0
      %1872 = vmatprep.subr.mxu0 0.0
      %1873 = vmatpush2.msra.mxu0 0.0
      %1874 = vmatprep.subr.mxu0 0.0
      %1875 = vmatpush2.msra.mxu0 0.0
      %1876 = vmatprep.subr.mxu0 0.0
      %1877 = vmatpush2.msra.mxu0 0.0
      %1878 = vmatprep.subr.mxu0 0.0
      %1879 = vmatpush2.msra.mxu0 0.0
      %1880 = vmatprep.subr.mxu0 0.0
      %1881 = vmatpush2.msra.mxu0 0.0
      %1882 = vmatprep.subr.mxu0 0.0
      %1883 = vmatpush2.msra.mxu0 0.0
      %1884 = vmatprep.subr.mxu0 0.0
      %1885 = vmatpush2.msra.mxu0 0.0
      %1886 = vmatprep.subr.mxu0 0.0
      %1887 = vmatpush2.msra.mxu0 0.0
      %1888 = vmatprep.subr.mxu0 0.0
      %1889 = vmatpush2.msra.mxu0 0.0
      %1890 = vmatprep.subr.mxu0 0.0
      %1891 = vmatpush2.msra.mxu0 0.0
      %1892 = vmatprep.subr.mxu0 0.0
      %1893 = vmatpush2.msra.mxu0 0.0
      %1894 = vmatprep.subr.mxu0 0.0
      %1895 = vmatpush2.msra.mxu0 0.0
      %1896 = vmatprep.subr.mxu0 0.0
      %1897 = vmatpush2.msra.mxu0 0.0
      %1898 = vmatprep.mubr.f32.mxu0 0.0
      %1899 = vmatmul.mubr.f32.gmra.mxu0 %v1829
      %v1900 = vpop.f32.mrf.mxu0
      %v1901 = vadd.f32 0.0, %v1900
      %v1902 = vpop.f32.mrf.mxu0
      %1903 = vmatprep.mubr.f32.mxu0 0.0
      %1904 = vmatmul.mubr.f32.gmra.mxu0 %v1832
      %v1905 = vpop.f32.mrf.mxu0
      %v1906 = vadd.f32 0.0, %v1905
      %v1907 = vpop.f32.mrf.mxu0
      %1908 = vdwg.mxu0
      %v1910 = vsel %vm1341, %v612, 0
      %v1913 = vsel %vm1341, %v748, 0
      %1915 = vmatprep.subr.mxu0 0.0
      %1916 = vmatpush1.msra.mxu0 0.0
      %1917 = vmatprep.subr.mxu0 0.0
      %1918 = vmatpush1.msra.mxu0 0.0
      %1919 = vmatprep.subr.mxu0 0.0
      %1920 = vmatpush1.msra.mxu0 0.0
      %1921 = vmatprep.subr.mxu0 0.0
      %1922 = vmatpush1.msra.mxu0 0.0
      %1923 = vmatprep.subr.mxu0 0.0
      %1924 = vmatpush1.msra.mxu0 0.0
      %1925 = vmatprep.subr.mxu0 0.0
      %1926 = vmatpush1.msra.mxu0 0.0
      %1927 = vmatprep.subr.mxu0 0.0
      %1928 = vmatpush1.msra.mxu0 0.0
      %1929 = vmatprep.subr.mxu0 0.0
      %1930 = vmatpush1.msra.mxu0 0.0
      %1931 = vmatprep.subr.mxu0 0.0
      %1932 = vmatpush1.msra.mxu0 0.0
      %1933 = vmatprep.subr.mxu0 0.0
      %1934 = vmatpush1.msra.mxu0 0.0
      %1935 = vmatprep.subr.mxu0 0.0
      %1936 = vmatpush1.msra.mxu0 0.0
      %1937 = vmatprep.subr.mxu0 0.0
      %1938 = vmatpush1.msra.mxu0 0.0
      %1939 = vmatprep.subr.mxu0 0.0
      %1940 = vmatpush1.msra.mxu0 0.0
      %1941 = vmatprep.subr.mxu0 0.0
      %1942 = vmatpush1.msra.mxu0 0.0
      %1943 = vmatprep.subr.mxu0 0.0
      %1944 = vmatpush1.msra.mxu0 %v1308
      %1945 = vmatprep.subr.mxu0 0.0
      %1946 = vmatpush1.msra.mxu0 %v1307
      %1947 = vmatprep.subr.mxu0 0.0
      %1948 = vmatpush2.msra.mxu0 0.0
      %1949 = vmatprep.subr.mxu0 0.0
      %1950 = vmatpush2.msra.mxu0 0.0
      %1951 = vmatprep.subr.mxu0 0.0
      %1952 = vmatpush2.msra.mxu0 0.0
      %1953 = vmatprep.subr.mxu0 0.0
      %1954 = vmatpush2.msra.mxu0 0.0
      %1955 = vmatprep.subr.mxu0 0.0
      %1956 = vmatpush2.msra.mxu0 0.0
      %1957 = vmatprep.subr.mxu0 0.0
      %1958 = vmatpush2.msra.mxu0 0.0
      %1959 = vmatprep.subr.mxu0 0.0
      %1960 = vmatpush2.msra.mxu0 0.0
      %1961 = vmatprep.subr.mxu0 0.0
      %1962 = vmatpush2.msra.mxu0 0.0
      %1963 = vmatprep.subr.mxu0 0.0
      %1964 = vmatpush2.msra.mxu0 0.0
      %1965 = vmatprep.subr.mxu0 0.0
      %1966 = vmatpush2.msra.mxu0 0.0
      %1967 = vmatprep.subr.mxu0 0.0
      %1968 = vmatpush2.msra.mxu0 0.0
      %1969 = vmatprep.subr.mxu0 0.0
      %1970 = vmatpush2.msra.mxu0 0.0
      %1971 = vmatprep.subr.mxu0 0.0
      %1972 = vmatpush2.msra.mxu0 0.0
      %1973 = vmatprep.subr.mxu0 0.0
      %1974 = vmatpush2.msra.mxu0 0.0
      %1975 = vmatprep.subr.mxu0 0.0
      %1976 = vmatpush2.msra.mxu0 0.0
      %1977 = vmatprep.subr.mxu0 0.0
      %1978 = vmatpush2.msra.mxu0 0.0
      %1979 = vmatprep.mubr.f32.mxu0 0.0
      %1980 = vmatmul.mubr.f32.gmra.mxu0 %v1910
      %v1981 = vpop.f32.mrf.mxu0
      %v1982 = vadd.f32 0.0, %v1981
      %v1983 = vpop.f32.mrf.mxu0
      %1984 = vmatprep.mubr.f32.mxu0 0.0
      %1985 = vmatmul.mubr.f32.gmra.mxu0 %v1913
      %v1986 = vpop.f32.mrf.mxu0
      %v1987 = vadd.f32 0.0, %v1986
      %v1988 = vpop.f32.mrf.mxu0
      %1989 = vdwg.mxu0
      %v1991 = vsel %vm1341, %v877, 0
      %v1994 = vsel %vm1341, %v1013, 0
      %1996 = vmatprep.subr.mxu0 0.0
      %1997 = vmatpush1.msra.mxu0 0.0
      %1998 = vmatprep.subr.mxu0 0.0
      %1999 = vmatpush1.msra.mxu0 0.0
      %2000 = vmatprep.subr.mxu0 0.0
      %2001 = vmatpush1.msra.mxu0 0.0
      %2002 = vmatprep.subr.mxu0 0.0
      %2003 = vmatpush1.msra.mxu0 0.0
      %2004 = vmatprep.subr.mxu0 0.0
      %2005 = vmatpush1.msra.mxu0 0.0
      %2006 = vmatprep.subr.mxu0 0.0
      %2007 = vmatpush1.msra.mxu0 0.0
      %2008 = vmatprep.subr.mxu0 0.0
      %2009 = vmatpush1.msra.mxu0 0.0
      %2010 = vmatprep.subr.mxu0 0.0
      %2011 = vmatpush1.msra.mxu0 0.0
      %2012 = vmatprep.subr.mxu0 0.0
      %2013 = vmatpush1.msra.mxu0 0.0
      %2014 = vmatprep.subr.mxu0 0.0
      %2015 = vmatpush1.msra.mxu0 0.0
      %2016 = vmatprep.subr.mxu0 0.0
      %2017 = vmatpush1.msra.mxu0 0.0
      %2018 = vmatprep.subr.mxu0 0.0
      %2019 = vmatpush1.msra.mxu0 0.0
      %2020 = vmatprep.subr.mxu0 0.0
      %2021 = vmatpush1.msra.mxu0 0.0
      %2022 = vmatprep.subr.mxu0 0.0
      %2023 = vmatpush1.msra.mxu0 0.0
      %2024 = vmatprep.subr.mxu0 0.0
      %2025 = vmatpush1.msra.mxu0 %v1310
      %2026 = vmatprep.subr.mxu0 0.0
      %2027 = vmatpush1.msra.mxu0 %v1309
      %2028 = vmatprep.subr.mxu0 0.0
      %2029 = vmatpush2.msra.mxu0 0.0
      %2030 = vmatprep.subr.mxu0 0.0
      %2031 = vmatpush2.msra.mxu0 0.0
      %2032 = vmatprep.subr.mxu0 0.0
      %2033 = vmatpush2.msra.mxu0 0.0
      %2034 = vmatprep.subr.mxu0 0.0
      %2035 = vmatpush2.msra.mxu0 0.0
      %2036 = vmatprep.subr.mxu0 0.0
      %2037 = vmatpush2.msra.mxu0 0.0
      %2038 = vmatprep.subr.mxu0 0.0
      %2039 = vmatpush2.msra.mxu0 0.0
      %2040 = vmatprep.subr.mxu0 0.0
      %2041 = vmatpush2.msra.mxu0 0.0
      %2042 = vmatprep.subr.mxu0 0.0
      %2043 = vmatpush2.msra.mxu0 0.0
      %2044 = vmatprep.subr.mxu0 0.0
      %2045 = vmatpush2.msra.mxu0 0.0
      %2046 = vmatprep.subr.mxu0 0.0
      %2047 = vmatpush2.msra.mxu0 0.0
      %2048 = vmatprep.subr.mxu0 0.0
      %2049 = vmatpush2.msra.mxu0 0.0
      %2050 = vmatprep.subr.mxu0 0.0
      %2051 = vmatpush2.msra.mxu0 0.0
      %2052 = vmatprep.subr.mxu0 0.0
      %2053 = vmatpush2.msra.mxu0 0.0
      %2054 = vmatprep.subr.mxu0 0.0
      %2055 = vmatpush2.msra.mxu0 0.0
      %2056 = vmatprep.subr.mxu0 0.0
      %2057 = vmatpush2.msra.mxu0 0.0
      %2058 = vmatprep.subr.mxu0 0.0
      %2059 = vmatpush2.msra.mxu0 0.0
      %2060 = vmatprep.mubr.f32.mxu0 0.0
      %2061 = vmatmul.mubr.f32.gmra.mxu0 %v1991
      %v2062 = vpop.f32.mrf.mxu0
      %v2063 = vadd.f32 0.0, %v2062
      %v2064 = vpop.f32.mrf.mxu0
      %2065 = vmatprep.mubr.f32.mxu0 0.0
      %2066 = vmatmul.mubr.f32.gmra.mxu0 %v1994
      %v2067 = vpop.f32.mrf.mxu0
      %v2068 = vadd.f32 0.0, %v2067
      %v2069 = vpop.f32.mrf.mxu0
      %2070 = vdwg.mxu0
      %v2072 = vsel %vm1341, %v878, 0
      %v2075 = vsel %vm1341, %v1014, 0
      %2077 = vmatprep.subr.mxu0 0.0
      %2078 = vmatpush1.msra.mxu0 0.0
      %2079 = vmatprep.subr.mxu0 0.0
      %2080 = vmatpush1.msra.mxu0 0.0
      %2081 = vmatprep.subr.mxu0 0.0
      %2082 = vmatpush1.msra.mxu0 0.0
      %2083 = vmatprep.subr.mxu0 0.0
      %2084 = vmatpush1.msra.mxu0 0.0
      %2085 = vmatprep.subr.mxu0 0.0
      %2086 = vmatpush1.msra.mxu0 0.0
      %2087 = vmatprep.subr.mxu0 0.0
      %2088 = vmatpush1.msra.mxu0 0.0
      %2089 = vmatprep.subr.mxu0 0.0
      %2090 = vmatpush1.msra.mxu0 0.0
      %2091 = vmatprep.subr.mxu0 0.0
      %2092 = vmatpush1.msra.mxu0 0.0
      %2093 = vmatprep.subr.mxu0 0.0
      %2094 = vmatpush1.msra.mxu0 0.0
      %2095 = vmatprep.subr.mxu0 0.0
      %2096 = vmatpush1.msra.mxu0 0.0
      %2097 = vmatprep.subr.mxu0 0.0
      %2098 = vmatpush1.msra.mxu0 0.0
      %2099 = vmatprep.subr.mxu0 0.0
      %2100 = vmatpush1.msra.mxu0 0.0
      %2101 = vmatprep.subr.mxu0 0.0
      %2102 = vmatpush1.msra.mxu0 0.0
      %2103 = vmatprep.subr.mxu0 0.0
      %2104 = vmatpush1.msra.mxu0 0.0
      %2105 = vmatprep.subr.mxu0 0.0
      %2106 = vmatpush1.msra.mxu0 %v1312
      %2107 = vmatprep.subr.mxu0 0.0
      %2108 = vmatpush1.msra.mxu0 %v1311
      %2109 = vmatprep.subr.mxu0 0.0
      %2110 = vmatpush2.msra.mxu0 0.0
      %2111 = vmatprep.subr.mxu0 0.0
      %2112 = vmatpush2.msra.mxu0 0.0
      %2113 = vmatprep.subr.mxu0 0.0
      %2114 = vmatpush2.msra.mxu0 0.0
      %2115 = vmatprep.subr.mxu0 0.0
      %2116 = vmatpush2.msra.mxu0 0.0
      %2117 = vmatprep.subr.mxu0 0.0
      %2118 = vmatpush2.msra.mxu0 0.0
      %2119 = vmatprep.subr.mxu0 0.0
      %2120 = vmatpush2.msra.mxu0 0.0
      %2121 = vmatprep.subr.mxu0 0.0
      %2122 = vmatpush2.msra.mxu0 0.0
      %2123 = vmatprep.subr.mxu0 0.0
      %2124 = vmatpush2.msra.mxu0 0.0
      %2125 = vmatprep.subr.mxu0 0.0
      %2126 = vmatpush2.msra.mxu0 0.0
      %2127 = vmatprep.subr.mxu0 0.0
      %2128 = vmatpush2.msra.mxu0 0.0
      %2129 = vmatprep.subr.mxu0 0.0
      %2130 = vmatpush2.msra.mxu0 0.0
      %2131 = vmatprep.subr.mxu0 0.0
      %2132 = vmatpush2.msra.mxu0 0.0
      %2133 = vmatprep.subr.mxu0 0.0
      %2134 = vmatpush2.msra.mxu0 0.0
      %2135 = vmatprep.subr.mxu0 0.0
      %2136 = vmatpush2.msra.mxu0 0.0
      %2137 = vmatprep.subr.mxu0 0.0
      %2138 = vmatpush2.msra.mxu0 0.0
      %2139 = vmatprep.subr.mxu0 0.0
      %2140 = vmatpush2.msra.mxu0 0.0
      %2141 = vmatprep.mubr.f32.mxu0 0.0
      %2142 = vmatmul.mubr.f32.gmra.mxu0 %v2072
      %v2143 = vpop.f32.mrf.mxu0
      %v2144 = vadd.f32 0.0, %v2143
      %v2145 = vpop.f32.mrf.mxu0
      %2146 = vmatprep.mubr.f32.mxu0 0.0
      %2147 = vmatmul.mubr.f32.gmra.mxu0 %v2075
      %v2148 = vpop.f32.mrf.mxu0
      %v2149 = vadd.f32 0.0, %v2148
      %v2150 = vpop.f32.mrf.mxu0
      %2151 = vdwg.mxu0
      %v2153 = vsel %vm1341, %v879, 0
      %v2156 = vsel %vm1341, %v1015, 0
      %2158 = vmatprep.subr.mxu0 0.0
      %2159 = vmatpush1.msra.mxu0 0.0
      %2160 = vmatprep.subr.mxu0 0.0
      %2161 = vmatpush1.msra.mxu0 0.0
      %2162 = vmatprep.subr.mxu0 0.0
      %2163 = vmatpush1.msra.mxu0 0.0
      %2164 = vmatprep.subr.mxu0 0.0
      %2165 = vmatpush1.msra.mxu0 0.0
      %2166 = vmatprep.subr.mxu0 0.0
      %2167 = vmatpush1.msra.mxu0 0.0
      %2168 = vmatprep.subr.mxu0 0.0
      %2169 = vmatpush1.msra.mxu0 0.0
      %2170 = vmatprep.subr.mxu0 0.0
      %2171 = vmatpush1.msra.mxu0 0.0
      %2172 = vmatprep.subr.mxu0 0.0
      %2173 = vmatpush1.msra.mxu0 0.0
      %2174 = vmatprep.subr.mxu0 0.0
      %2175 = vmatpush1.msra.mxu0 0.0
      %2176 = vmatprep.subr.mxu0 0.0
      %2177 = vmatpush1.msra.mxu0 0.0
      %2178 = vmatprep.subr.mxu0 0.0
      %2179 = vmatpush1.msra.mxu0 0.0
      %2180 = vmatprep.subr.mxu0 0.0
      %2181 = vmatpush1.msra.mxu0 0.0
      %2182 = vmatprep.subr.mxu0 0.0
      %2183 = vmatpush1.msra.mxu0 0.0
      %2184 = vmatprep.subr.mxu0 0.0
      %2185 = vmatpush1.msra.mxu0 0.0
      %2186 = vmatprep.subr.mxu0 0.0
      %2187 = vmatpush1.msra.mxu0 %v1314
      %2188 = vmatprep.subr.mxu0 0.0
      %2189 = vmatpush1.msra.mxu0 %v1313
      %2190 = vmatprep.subr.mxu0 0.0
      %2191 = vmatpush2.msra.mxu0 0.0
      %2192 = vmatprep.subr.mxu0 0.0
      %2193 = vmatpush2.msra.mxu0 0.0
      %2194 = vmatprep.subr.mxu0 0.0
      %2195 = vmatpush2.msra.mxu0 0.0
      %2196 = vmatprep.subr.mxu0 0.0
      %2197 = vmatpush2.msra.mxu0 0.0
      %2198 = vmatprep.subr.mxu0 0.0
      %2199 = vmatpush2.msra.mxu0 0.0
      %2200 = vmatprep.subr.mxu0 0.0
      %2201 = vmatpush2.msra.mxu0 0.0
      %2202 = vmatprep.subr.mxu0 0.0
      %2203 = vmatpush2.msra.mxu0 0.0
      %2204 = vmatprep.subr.mxu0 0.0
      %2205 = vmatpush2.msra.mxu0 0.0
      %2206 = vmatprep.subr.mxu0 0.0
      %2207 = vmatpush2.msra.mxu0 0.0
      %2208 = vmatprep.subr.mxu0 0.0
      %2209 = vmatpush2.msra.mxu0 0.0
      %2210 = vmatprep.subr.mxu0 0.0
      %2211 = vmatpush2.msra.mxu0 0.0
      %2212 = vmatprep.subr.mxu0 0.0
      %2213 = vmatpush2.msra.mxu0 0.0
      %2214 = vmatprep.subr.mxu0 0.0
      %2215 = vmatpush2.msra.mxu0 0.0
      %2216 = vmatprep.subr.mxu0 0.0
      %2217 = vmatpush2.msra.mxu0 0.0
      %2218 = vmatprep.subr.mxu0 0.0
      %2219 = vmatpush2.msra.mxu0 0.0
      %2220 = vmatprep.subr.mxu0 0.0
      %2221 = vmatpush2.msra.mxu0 0.0
      %2222 = vmatprep.mubr.f32.mxu0 0.0
      %2223 = vmatmul.mubr.f32.gmra.mxu0 %v2153
      %v2224 = vpop.f32.mrf.mxu0
      %v2225 = vadd.f32 0.0, %v2224
      %v2226 = vpop.f32.mrf.mxu0
      %2227 = vmatprep.mubr.f32.mxu0 0.0
      %2228 = vmatmul.mubr.f32.gmra.mxu0 %v2156
      %v2229 = vpop.f32.mrf.mxu0
      %v2230 = vadd.f32 0.0, %v2229
      %v2231 = vpop.f32.mrf.mxu0
      %2232 = vdwg.mxu0
      %v2234 = vsel %vm1341, %v880, 0
      %v2237 = vsel %vm1341, %v1016, 0
      %2239 = vmatprep.subr.mxu0 0.0
      %2240 = vmatpush1.msra.mxu0 0.0
      %2241 = vmatprep.subr.mxu0 0.0
      %2242 = vmatpush1.msra.mxu0 0.0
      %2243 = vmatprep.subr.mxu0 0.0
      %2244 = vmatpush1.msra.mxu0 0.0
      %2245 = vmatprep.subr.mxu0 0.0
      %2246 = vmatpush1.msra.mxu0 0.0
      %2247 = vmatprep.subr.mxu0 0.0
      %2248 = vmatpush1.msra.mxu0 0.0
      %2249 = vmatprep.subr.mxu0 0.0
      %2250 = vmatpush1.msra.mxu0 0.0
      %2251 = vmatprep.subr.mxu0 0.0
      %2252 = vmatpush1.msra.mxu0 0.0
      %2253 = vmatprep.subr.mxu0 0.0
      %2254 = vmatpush1.msra.mxu0 0.0
      %2255 = vmatprep.subr.mxu0 0.0
      %2256 = vmatpush1.msra.mxu0 0.0
      %2257 = vmatprep.subr.mxu0 0.0
      %2258 = vmatpush1.msra.mxu0 0.0
      %2259 = vmatprep.subr.mxu0 0.0
      %2260 = vmatpush1.msra.mxu0 0.0
      %2261 = vmatprep.subr.mxu0 0.0
      %2262 = vmatpush1.msra.mxu0 0.0
      %2263 = vmatprep.subr.mxu0 0.0
      %2264 = vmatpush1.msra.mxu0 0.0
      %2265 = vmatprep.subr.mxu0 0.0
      %2266 = vmatpush1.msra.mxu0 0.0
      %2267 = vmatprep.subr.mxu0 0.0
      %2268 = vmatpush1.msra.mxu0 %v1316
      %2269 = vmatprep.subr.mxu0 0.0
      %2270 = vmatpush1.msra.mxu0 %v1315
      %2271 = vmatprep.subr.mxu0 0.0
      %2272 = vmatpush2.msra.mxu0 0.0
      %2273 = vmatprep.subr.mxu0 0.0
      %2274 = vmatpush2.msra.mxu0 0.0
      %2275 = vmatprep.subr.mxu0 0.0
      %2276 = vmatpush2.msra.mxu0 0.0
      %2277 = vmatprep.subr.mxu0 0.0
      %2278 = vmatpush2.msra.mxu0 0.0
      %2279 = vmatprep.subr.mxu0 0.0
      %2280 = vmatpush2.msra.mxu0 0.0
      %2281 = vmatprep.subr.mxu0 0.0
      %2282 = vmatpush2.msra.mxu0 0.0
      %2283 = vmatprep.subr.mxu0 0.0
      %2284 = vmatpush2.msra.mxu0 0.0
      %2285 = vmatprep.subr.mxu0 0.0
      %2286 = vmatpush2.msra.mxu0 0.0
      %2287 = vmatprep.subr.mxu0 0.0
      %2288 = vmatpush2.msra.mxu0 0.0
      %2289 = vmatprep.subr.mxu0 0.0
      %2290 = vmatpush2.msra.mxu0 0.0
      %2291 = vmatprep.subr.mxu0 0.0
      %2292 = vmatpush2.msra.mxu0 0.0
      %2293 = vmatprep.subr.mxu0 0.0
      %2294 = vmatpush2.msra.mxu0 0.0
      %2295 = vmatprep.subr.mxu0 0.0
      %2296 = vmatpush2.msra.mxu0 0.0
      %2297 = vmatprep.subr.mxu0 0.0
      %2298 = vmatpush2.msra.mxu0 0.0
      %2299 = vmatprep.subr.mxu0 0.0
      %2300 = vmatpush2.msra.mxu0 0.0
      %2301 = vmatprep.subr.mxu0 0.0
      %2302 = vmatpush2.msra.mxu0 0.0
      %2303 = vmatprep.mubr.f32.mxu0 0.0
      %2304 = vmatmul.mubr.f32.gmra.mxu0 %v2234
      %v2305 = vpop.f32.mrf.mxu0
      %v2306 = vadd.f32 0.0, %v2305
      %v2307 = vpop.f32.mrf.mxu0
      %2308 = vmatprep.mubr.f32.mxu0 0.0
      %2309 = vmatmul.mubr.f32.gmra.mxu0 %v2237
      %v2310 = vpop.f32.mrf.mxu0
      %v2311 = vadd.f32 0.0, %v2310
      %v2312 = vpop.f32.mrf.mxu0
      %2313 = vdwg.mxu0
      %v2315 = vsel %vm1341, %v881, 0
      %v2318 = vsel %vm1341, %v1017, 0
      %2320 = vmatprep.subr.mxu0 0.0
      %2321 = vmatpush1.msra.mxu0 0.0
      %2322 = vmatprep.subr.mxu0 0.0
      %2323 = vmatpush1.msra.mxu0 0.0
      %2324 = vmatprep.subr.mxu0 0.0
      %2325 = vmatpush1.msra.mxu0 0.0
      %2326 = vmatprep.subr.mxu0 0.0
      %2327 = vmatpush1.msra.mxu0 0.0
      %2328 = vmatprep.subr.mxu0 0.0
      %2329 = vmatpush1.msra.mxu0 0.0
      %2330 = vmatprep.subr.mxu0 0.0
      %2331 = vmatpush1.msra.mxu0 0.0
      %2332 = vmatprep.subr.mxu0 0.0
      %2333 = vmatpush1.msra.mxu0 0.0
      %2334 = vmatprep.subr.mxu0 0.0
      %2335 = vmatpush1.msra.mxu0 0.0
      %2336 = vmatprep.subr.mxu0 0.0
      %2337 = vmatpush1.msra.mxu0 0.0
      %2338 = vmatprep.subr.mxu0 0.0
      %2339 = vmatpush1.msra.mxu0 0.0
      %2340 = vmatprep.subr.mxu0 0.0
      %2341 = vmatpush1.msra.mxu0 0.0
      %2342 = vmatprep.subr.mxu0 0.0
      %2343 = vmatpush1.msra.mxu0 0.0
      %2344 = vmatprep.subr.mxu0 0.0
      %2345 = vmatpush1.msra.mxu0 0.0
      %2346 = vmatprep.subr.mxu0 0.0
      %2347 = vmatpush1.msra.mxu0 0.0
      %2348 = vmatprep.subr.mxu0 0.0
      %2349 = vmatpush1.msra.mxu0 %v1318
      %2350 = vmatprep.subr.mxu0 0.0
      %2351 = vmatpush1.msra.mxu0 %v1317
      %2352 = vmatprep.subr.mxu0 0.0
      %2353 = vmatpush2.msra.mxu0 0.0
      %2354 = vmatprep.subr.mxu0 0.0
      %2355 = vmatpush2.msra.mxu0 0.0
      %2356 = vmatprep.subr.mxu0 0.0
      %2357 = vmatpush2.msra.mxu0 0.0
      %2358 = vmatprep.subr.mxu0 0.0
      %2359 = vmatpush2.msra.mxu0 0.0
      %2360 = vmatprep.subr.mxu0 0.0
      %2361 = vmatpush2.msra.mxu0 0.0
      %2362 = vmatprep.subr.mxu0 0.0
      %2363 = vmatpush2.msra.mxu0 0.0
      %2364 = vmatprep.subr.mxu0 0.0
      %2365 = vmatpush2.msra.mxu0 0.0
      %2366 = vmatprep.subr.mxu0 0.0
      %2367 = vmatpush2.msra.mxu0 0.0
      %2368 = vmatprep.subr.mxu0 0.0
      %2369 = vmatpush2.msra.mxu0 0.0
      %2370 = vmatprep.subr.mxu0 0.0
      %2371 = vmatpush2.msra.mxu0 0.0
      %2372 = vmatprep.subr.mxu0 0.0
      %2373 = vmatpush2.msra.mxu0 0.0
      %2374 = vmatprep.subr.mxu0 0.0
      %2375 = vmatpush2.msra.mxu0 0.0
      %2376 = vmatprep.subr.mxu0 0.0
      %2377 = vmatpush2.msra.mxu0 0.0
      %2378 = vmatprep.subr.mxu0 0.0
      %2379 = vmatpush2.msra.mxu0 0.0
      %2380 = vmatprep.subr.mxu0 0.0
      %2381 = vmatpush2.msra.mxu0 0.0
      %2382 = vmatprep.subr.mxu0 0.0
      %2383 = vmatpush2.msra.mxu0 0.0
      %2384 = vmatprep.mubr.f32.mxu0 0.0
      %2385 = vmatmul.mubr.f32.gmra.mxu0 %v2315
      %v2386 = vpop.f32.mrf.mxu0
      %v2387 = vadd.f32 0.0, %v2386
      %v2388 = vpop.f32.mrf.mxu0
      %2389 = vmatprep.mubr.f32.mxu0 0.0
      %2390 = vmatmul.mubr.f32.gmra.mxu0 %v2318
      %v2391 = vpop.f32.mrf.mxu0
      %v2392 = vadd.f32 0.0, %v2391
      %v2393 = vpop.f32.mrf.mxu0
      %2394 = vdwg.mxu0
      %v2396 = vsel %vm1341, %v882, 0
      %v2399 = vsel %vm1341, %v1018, 0
      %2401 = vmatprep.subr.mxu0 0.0
      %2402 = vmatpush1.msra.mxu0 0.0
      %2403 = vmatprep.subr.mxu0 0.0
      %2404 = vmatpush1.msra.mxu0 0.0
      %2405 = vmatprep.subr.mxu0 0.0
      %2406 = vmatpush1.msra.mxu0 0.0
      %2407 = vmatprep.subr.mxu0 0.0
      %2408 = vmatpush1.msra.mxu0 0.0
      %2409 = vmatprep.subr.mxu0 0.0
      %2410 = vmatpush1.msra.mxu0 0.0
      %2411 = vmatprep.subr.mxu0 0.0
      %2412 = vmatpush1.msra.mxu0 0.0
      %2413 = vmatprep.subr.mxu0 0.0
      %2414 = vmatpush1.msra.mxu0 0.0
      %2415 = vmatprep.subr.mxu0 0.0
      %2416 = vmatpush1.msra.mxu0 0.0
      %2417 = vmatprep.subr.mxu0 0.0
      %2418 = vmatpush1.msra.mxu0 0.0
      %2419 = vmatprep.subr.mxu0 0.0
      %2420 = vmatpush1.msra.mxu0 0.0
      %2421 = vmatprep.subr.mxu0 0.0
      %2422 = vmatpush1.msra.mxu0 0.0
      %2423 = vmatprep.subr.mxu0 0.0
      %2424 = vmatpush1.msra.mxu0 0.0
      %2425 = vmatprep.subr.mxu0 0.0
      %2426 = vmatpush1.msra.mxu0 0.0
      %2427 = vmatprep.subr.mxu0 0.0
      %2428 = vmatpush1.msra.mxu0 0.0
      %2429 = vmatprep.subr.mxu0 0.0
      %2430 = vmatpush1.msra.mxu0 %v1320
      %2431 = vmatprep.subr.mxu0 0.0
      %2432 = vmatpush1.msra.mxu0 %v1319
      %2433 = vmatprep.subr.mxu0 0.0
      %2434 = vmatpush2.msra.mxu0 0.0
      %2435 = vmatprep.subr.mxu0 0.0
      %2436 = vmatpush2.msra.mxu0 0.0
      %2437 = vmatprep.subr.mxu0 0.0
      %2438 = vmatpush2.msra.mxu0 0.0
      %2439 = vmatprep.subr.mxu0 0.0
      %2440 = vmatpush2.msra.mxu0 0.0
      %2441 = vmatprep.subr.mxu0 0.0
      %2442 = vmatpush2.msra.mxu0 0.0
      %2443 = vmatprep.subr.mxu0 0.0
      %2444 = vmatpush2.msra.mxu0 0.0
      %2445 = vmatprep.subr.mxu0 0.0
      %2446 = vmatpush2.msra.mxu0 0.0
      %2447 = vmatprep.subr.mxu0 0.0
      %2448 = vmatpush2.msra.mxu0 0.0
      %2449 = vmatprep.subr.mxu0 0.0
      %2450 = vmatpush2.msra.mxu0 0.0
      %2451 = vmatprep.subr.mxu0 0.0
      %2452 = vmatpush2.msra.mxu0 0.0
      %2453 = vmatprep.subr.mxu0 0.0
      %2454 = vmatpush2.msra.mxu0 0.0
      %2455 = vmatprep.subr.mxu0 0.0
      %2456 = vmatpush2.msra.mxu0 0.0
      %2457 = vmatprep.subr.mxu0 0.0
      %2458 = vmatpush2.msra.mxu0 0.0
      %2459 = vmatprep.subr.mxu0 0.0
      %2460 = vmatpush2.msra.mxu0 0.0
      %2461 = vmatprep.subr.mxu0 0.0
      %2462 = vmatpush2.msra.mxu0 0.0
      %2463 = vmatprep.subr.mxu0 0.0
      %2464 = vmatpush2.msra.mxu0 0.0
      %2465 = vmatprep.mubr.f32.mxu0 0.0
      %2466 = vmatmul.mubr.f32.gmra.mxu0 %v2396
      %v2467 = vpop.f32.mrf.mxu0
      %v2468 = vadd.f32 0.0, %v2467
      %v2469 = vpop.f32.mrf.mxu0
      %2470 = vmatprep.mubr.f32.mxu0 0.0
      %2471 = vmatmul.mubr.f32.gmra.mxu0 %v2399
      %v2472 = vpop.f32.mrf.mxu0
      %v2473 = vadd.f32 0.0, %v2472
      %v2474 = vpop.f32.mrf.mxu0
      %2475 = vdwg.mxu0
      %v2477 = vsel %vm1341, %v883, 0
      %v2480 = vsel %vm1341, %v1019, 0
      %2482 = vmatprep.subr.mxu0 0.0
      %2483 = vmatpush1.msra.mxu0 0.0
      %2484 = vmatprep.subr.mxu0 0.0
      %2485 = vmatpush1.msra.mxu0 0.0
      %2486 = vmatprep.subr.mxu0 0.0
      %2487 = vmatpush1.msra.mxu0 0.0
      %2488 = vmatprep.subr.mxu0 0.0
      %2489 = vmatpush1.msra.mxu0 0.0
      %2490 = vmatprep.subr.mxu0 0.0
      %2491 = vmatpush1.msra.mxu0 0.0
      %2492 = vmatprep.subr.mxu0 0.0
      %2493 = vmatpush1.msra.mxu0 0.0
      %2494 = vmatprep.subr.mxu0 0.0
      %2495 = vmatpush1.msra.mxu0 0.0
      %2496 = vmatprep.subr.mxu0 0.0
      %2497 = vmatpush1.msra.mxu0 0.0
      %2498 = vmatprep.subr.mxu0 0.0
      %2499 = vmatpush1.msra.mxu0 0.0
      %2500 = vmatprep.subr.mxu0 0.0
      %2501 = vmatpush1.msra.mxu0 0.0
      %2502 = vmatprep.subr.mxu0 0.0
      %2503 = vmatpush1.msra.mxu0 0.0
      %2504 = vmatprep.subr.mxu0 0.0
      %2505 = vmatpush1.msra.mxu0 0.0
      %2506 = vmatprep.subr.mxu0 0.0
      %2507 = vmatpush1.msra.mxu0 0.0
      %2508 = vmatprep.subr.mxu0 0.0
      %2509 = vmatpush1.msra.mxu0 0.0
      %2510 = vmatprep.subr.mxu0 0.0
      %2511 = vmatpush1.msra.mxu0 %v1322
      %2512 = vmatprep.subr.mxu0 0.0
      %2513 = vmatpush1.msra.mxu0 %v1321
      %2514 = vmatprep.subr.mxu0 0.0
      %2515 = vmatpush2.msra.mxu0 0.0
      %2516 = vmatprep.subr.mxu0 0.0
      %2517 = vmatpush2.msra.mxu0 0.0
      %2518 = vmatprep.subr.mxu0 0.0
      %2519 = vmatpush2.msra.mxu0 0.0
      %2520 = vmatprep.subr.mxu0 0.0
      %2521 = vmatpush2.msra.mxu0 0.0
      %2522 = vmatprep.subr.mxu0 0.0
      %2523 = vmatpush2.msra.mxu0 0.0
      %2524 = vmatprep.subr.mxu0 0.0
      %2525 = vmatpush2.msra.mxu0 0.0
      %2526 = vmatprep.subr.mxu0 0.0
      %2527 = vmatpush2.msra.mxu0 0.0
      %2528 = vmatprep.subr.mxu0 0.0
      %2529 = vmatpush2.msra.mxu0 0.0
      %2530 = vmatprep.subr.mxu0 0.0
      %2531 = vmatpush2.msra.mxu0 0.0
      %2532 = vmatprep.subr.mxu0 0.0
      %2533 = vmatpush2.msra.mxu0 0.0
      %2534 = vmatprep.subr.mxu0 0.0
      %2535 = vmatpush2.msra.mxu0 0.0
      %2536 = vmatprep.subr.mxu0 0.0
      %2537 = vmatpush2.msra.mxu0 0.0
      %2538 = vmatprep.subr.mxu0 0.0
      %2539 = vmatpush2.msra.mxu0 0.0
      %2540 = vmatprep.subr.mxu0 0.0
      %2541 = vmatpush2.msra.mxu0 0.0
      %2542 = vmatprep.subr.mxu0 0.0
      %2543 = vmatpush2.msra.mxu0 0.0
      %2544 = vmatprep.subr.mxu0 0.0
      %2545 = vmatpush2.msra.mxu0 0.0
      %2546 = vmatprep.mubr.f32.mxu0 0.0
      %2547 = vmatmul.mubr.f32.gmra.mxu0 %v2477
      %v2548 = vpop.f32.mrf.mxu0
      %v2549 = vadd.f32 0.0, %v2548
      %v2550 = vpop.f32.mrf.mxu0
      %2551 = vmatprep.mubr.f32.mxu0 0.0
      %2552 = vmatmul.mubr.f32.gmra.mxu0 %v2480
      %v2553 = vpop.f32.mrf.mxu0
      %v2554 = vadd.f32 0.0, %v2553
      %v2555 = vpop.f32.mrf.mxu0
      %2556 = vdwg.mxu0
      %v2558 = vsel %vm1341, %v884, 0
      %v2561 = vsel %vm1341, %v1020, 0
      %2563 = vmatprep.subr.mxu0 0.0
      %2564 = vmatpush1.msra.mxu0 0.0
      %2565 = vmatprep.subr.mxu0 0.0
      %2566 = vmatpush1.msra.mxu0 0.0
      %2567 = vmatprep.subr.mxu0 0.0
      %2568 = vmatpush1.msra.mxu0 0.0
      %2569 = vmatprep.subr.mxu0 0.0
      %2570 = vmatpush1.msra.mxu0 0.0
      %2571 = vmatprep.subr.mxu0 0.0
      %2572 = vmatpush1.msra.mxu0 0.0
      %2573 = vmatprep.subr.mxu0 0.0
      %2574 = vmatpush1.msra.mxu0 0.0
      %2575 = vmatprep.subr.mxu0 0.0
      %2576 = vmatpush1.msra.mxu0 0.0
      %2577 = vmatprep.subr.mxu0 0.0
      %2578 = vmatpush1.msra.mxu0 0.0
      %2579 = vmatprep.subr.mxu0 0.0
      %2580 = vmatpush1.msra.mxu0 0.0
      %2581 = vmatprep.subr.mxu0 0.0
      %2582 = vmatpush1.msra.mxu0 0.0
      %2583 = vmatprep.subr.mxu0 0.0
      %2584 = vmatpush1.msra.mxu0 0.0
      %2585 = vmatprep.subr.mxu0 0.0
      %2586 = vmatpush1.msra.mxu0 0.0
      %2587 = vmatprep.subr.mxu0 0.0
      %2588 = vmatpush1.msra.mxu0 0.0
      %2589 = vmatprep.subr.mxu0 0.0
      %2590 = vmatpush1.msra.mxu0 0.0
      %2591 = vmatprep.subr.mxu0 0.0
      %2592 = vmatpush1.msra.mxu0 %v1324
      %2593 = vmatprep.subr.mxu0 0.0
      %2594 = vmatpush1.msra.mxu0 %v1323
      %2595 = vmatprep.subr.mxu0 0.0
      %2596 = vmatpush2.msra.mxu0 0.0
      %2597 = vmatprep.subr.mxu0 0.0
      %2598 = vmatpush2.msra.mxu0 0.0
      %2599 = vmatprep.subr.mxu0 0.0
      %2600 = vmatpush2.msra.mxu0 0.0
      %2601 = vmatprep.subr.mxu0 0.0
      %2602 = vmatpush2.msra.mxu0 0.0
      %2603 = vmatprep.subr.mxu0 0.0
      %2604 = vmatpush2.msra.mxu0 0.0
      %2605 = vmatprep.subr.mxu0 0.0
      %2606 = vmatpush2.msra.mxu0 0.0
      %2607 = vmatprep.subr.mxu0 0.0
      %2608 = vmatpush2.msra.mxu0 0.0
      %2609 = vmatprep.subr.mxu0 0.0
      %2610 = vmatpush2.msra.mxu0 0.0
      %2611 = vmatprep.subr.mxu0 0.0
      %2612 = vmatpush2.msra.mxu0 0.0
      %2613 = vmatprep.subr.mxu0 0.0
      %2614 = vmatpush2.msra.mxu0 0.0
      %2615 = vmatprep.subr.mxu0 0.0
      %2616 = vmatpush2.msra.mxu0 0.0
      %2617 = vmatprep.subr.mxu0 0.0
      %2618 = vmatpush2.msra.mxu0 0.0
      %2619 = vmatprep.subr.mxu0 0.0
      %2620 = vmatpush2.msra.mxu0 0.0
      %2621 = vmatprep.subr.mxu0 0.0
      %2622 = vmatpush2.msra.mxu0 0.0
      %2623 = vmatprep.subr.mxu0 0.0
      %2624 = vmatpush2.msra.mxu0 0.0
      %2625 = vmatprep.subr.mxu0 0.0
      %2626 = vmatpush2.msra.mxu0 0.0
      %2627 = vmatprep.mubr.f32.mxu0 0.0
      %2628 = vmatmul.mubr.f32.gmra.mxu0 %v2558
      %v2629 = vpop.f32.mrf.mxu0
      %v2630 = vadd.f32 0.0, %v2629
      %v2631 = vpop.f32.mrf.mxu0
      %2632 = vmatprep.mubr.f32.mxu0 0.0
      %2633 = vmatmul.mubr.f32.gmra.mxu0 %v2561
      %v2634 = vpop.f32.mrf.mxu0
      %v2635 = vadd.f32 0.0, %v2634
      %v2636 = vpop.f32.mrf.mxu0
      %2637 = vdwg.mxu0
      %v2639 = vsel %vm1341, %v1149, 0
      %v2642 = vsel %vm1341, %v1285, 0
      %2644 = vmatprep.subr.mxu0 0.0
      %2645 = vmatpush1.msra.mxu0 0.0
      %2646 = vmatprep.subr.mxu0 0.0
      %2647 = vmatpush1.msra.mxu0 0.0
      %2648 = vmatprep.subr.mxu0 0.0
      %2649 = vmatpush1.msra.mxu0 0.0
      %2650 = vmatprep.subr.mxu0 0.0
      %2651 = vmatpush1.msra.mxu0 0.0
      %2652 = vmatprep.subr.mxu0 0.0
      %2653 = vmatpush1.msra.mxu0 0.0
      %2654 = vmatprep.subr.mxu0 0.0
      %2655 = vmatpush1.msra.mxu0 0.0
      %2656 = vmatprep.subr.mxu0 0.0
      %2657 = vmatpush1.msra.mxu0 0.0
      %2658 = vmatprep.subr.mxu0 0.0
      %2659 = vmatpush1.msra.mxu0 0.0
      %2660 = vmatprep.subr.mxu0 0.0
      %2661 = vmatpush1.msra.mxu0 0.0
      %2662 = vmatprep.subr.mxu0 0.0
      %2663 = vmatpush1.msra.mxu0 0.0
      %2664 = vmatprep.subr.mxu0 0.0
      %2665 = vmatpush1.msra.mxu0 0.0
      %2666 = vmatprep.subr.mxu0 0.0
      %2667 = vmatpush1.msra.mxu0 0.0
      %2668 = vmatprep.subr.mxu0 0.0
      %2669 = vmatpush1.msra.mxu0 0.0
      %2670 = vmatprep.subr.mxu0 0.0
      %2671 = vmatpush1.msra.mxu0 0.0
      %2672 = vmatprep.subr.mxu0 0.0
      %2673 = vmatpush1.msra.mxu0 %v1326
      %2674 = vmatprep.subr.mxu0 0.0
      %2675 = vmatpush1.msra.mxu0 %v1325
      %2676 = vmatprep.subr.mxu0 0.0
      %2677 = vmatpush2.msra.mxu0 0.0
      %2678 = vmatprep.subr.mxu0 0.0
      %2679 = vmatpush2.msra.mxu0 0.0
      %2680 = vmatprep.subr.mxu0 0.0
      %2681 = vmatpush2.msra.mxu0 0.0
      %2682 = vmatprep.subr.mxu0 0.0
      %2683 = vmatpush2.msra.mxu0 0.0
      %2684 = vmatprep.subr.mxu0 0.0
      %2685 = vmatpush2.msra.mxu0 0.0
      %2686 = vmatprep.subr.mxu0 0.0
      %2687 = vmatpush2.msra.mxu0 0.0
      %2688 = vmatprep.subr.mxu0 0.0
      %2689 = vmatpush2.msra.mxu0 0.0
      %2690 = vmatprep.subr.mxu0 0.0
      %2691 = vmatpush2.msra.mxu0 0.0
      %2692 = vmatprep.subr.mxu0 0.0
      %2693 = vmatpush2.msra.mxu0 0.0
      %2694 = vmatprep.subr.mxu0 0.0
      %2695 = vmatpush2.msra.mxu0 0.0
      %2696 = vmatprep.subr.mxu0 0.0
      %2697 = vmatpush2.msra.mxu0 0.0
      %2698 = vmatprep.subr.mxu0 0.0
      %2699 = vmatpush2.msra.mxu0 0.0
      %2700 = vmatprep.subr.mxu0 0.0
      %2701 = vmatpush2.msra.mxu0 0.0
      %2702 = vmatprep.subr.mxu0 0.0
      %2703 = vmatpush2.msra.mxu0 0.0
      %2704 = vmatprep.subr.mxu0 0.0
      %2705 = vmatpush2.msra.mxu0 0.0
      %2706 = vmatprep.subr.mxu0 0.0
      %2707 = vmatpush2.msra.mxu0 0.0
      %2708 = vmatprep.mubr.f32.mxu0 0.0
      %2709 = vmatmul.mubr.f32.gmra.mxu0 %v2639
      %v2710 = vpop.f32.mrf.mxu0
      %v2711 = vadd.f32 0.0, %v2710
      %v2712 = vpop.f32.mrf.mxu0
      %2713 = vmatprep.mubr.f32.mxu0 0.0
      %2714 = vmatmul.mubr.f32.gmra.mxu0 %v2642
      %v2715 = vpop.f32.mrf.mxu0
      %v2716 = vadd.f32 0.0, %v2715
      %v2717 = vpop.f32.mrf.mxu0
      %2718 = vdwg.mxu0
      %v2720 = vsel %vm1341, %v1150, 0
      %v2723 = vsel %vm1341, %v1286, 0
      %2725 = vmatprep.subr.mxu0 0.0
      %2726 = vmatpush1.msra.mxu0 0.0
      %2727 = vmatprep.subr.mxu0 0.0
      %2728 = vmatpush1.msra.mxu0 0.0
      %2729 = vmatprep.subr.mxu0 0.0
      %2730 = vmatpush1.msra.mxu0 0.0
      %2731 = vmatprep.subr.mxu0 0.0
      %2732 = vmatpush1.msra.mxu0 0.0
      %2733 = vmatprep.subr.mxu0 0.0
      %2734 = vmatpush1.msra.mxu0 0.0
      %2735 = vmatprep.subr.mxu0 0.0
      %2736 = vmatpush1.msra.mxu0 0.0
      %2737 = vmatprep.subr.mxu0 0.0
      %2738 = vmatpush1.msra.mxu0 0.0
      %2739 = vmatprep.subr.mxu0 0.0
      %2740 = vmatpush1.msra.mxu0 0.0
      %2741 = vmatprep.subr.mxu0 0.0
      %2742 = vmatpush1.msra.mxu0 0.0
      %2743 = vmatprep.subr.mxu0 0.0
      %2744 = vmatpush1.msra.mxu0 0.0
      %2745 = vmatprep.subr.mxu0 0.0
      %2746 = vmatpush1.msra.mxu0 0.0
      %2747 = vmatprep.subr.mxu0 0.0
      %2748 = vmatpush1.msra.mxu0 0.0
      %2749 = vmatprep.subr.mxu0 0.0
      %2750 = vmatpush1.msra.mxu0 0.0
      %2751 = vmatprep.subr.mxu0 0.0
      %2752 = vmatpush1.msra.mxu0 0.0
      %2753 = vmatprep.subr.mxu0 0.0
      %2754 = vmatpush1.msra.mxu0 %v1328
      %2755 = vmatprep.subr.mxu0 0.0
      %2756 = vmatpush1.msra.mxu0 %v1327
      %2757 = vmatprep.subr.mxu0 0.0
      %2758 = vmatpush2.msra.mxu0 0.0
      %2759 = vmatprep.subr.mxu0 0.0
      %2760 = vmatpush2.msra.mxu0 0.0
      %2761 = vmatprep.subr.mxu0 0.0
      %2762 = vmatpush2.msra.mxu0 0.0
      %2763 = vmatprep.subr.mxu0 0.0
      %2764 = vmatpush2.msra.mxu0 0.0
      %2765 = vmatprep.subr.mxu0 0.0
      %2766 = vmatpush2.msra.mxu0 0.0
      %2767 = vmatprep.subr.mxu0 0.0
      %2768 = vmatpush2.msra.mxu0 0.0
      %2769 = vmatprep.subr.mxu0 0.0
      %2770 = vmatpush2.msra.mxu0 0.0
      %2771 = vmatprep.subr.mxu0 0.0
      %2772 = vmatpush2.msra.mxu0 0.0
      %2773 = vmatprep.subr.mxu0 0.0
      %2774 = vmatpush2.msra.mxu0 0.0
      %2775 = vmatprep.subr.mxu0 0.0
      %2776 = vmatpush2.msra.mxu0 0.0
      %2777 = vmatprep.subr.mxu0 0.0
      %2778 = vmatpush2.msra.mxu0 0.0
      %2779 = vmatprep.subr.mxu0 0.0
      %2780 = vmatpush2.msra.mxu0 0.0
      %2781 = vmatprep.subr.mxu0 0.0
      %2782 = vmatpush2.msra.mxu0 0.0
      %2783 = vmatprep.subr.mxu0 0.0
      %2784 = vmatpush2.msra.mxu0 0.0
      %2785 = vmatprep.subr.mxu0 0.0
      %2786 = vmatpush2.msra.mxu0 0.0
      %2787 = vmatprep.subr.mxu0 0.0
      %2788 = vmatpush2.msra.mxu0 0.0
      %2789 = vmatprep.mubr.f32.mxu0 0.0
      %2790 = vmatmul.mubr.f32.gmra.mxu0 %v2720
      %v2791 = vpop.f32.mrf.mxu0
      %v2792 = vadd.f32 0.0, %v2791
      %v2793 = vpop.f32.mrf.mxu0
      %2794 = vmatprep.mubr.f32.mxu0 0.0
      %2795 = vmatmul.mubr.f32.gmra.mxu0 %v2723
      %v2796 = vpop.f32.mrf.mxu0
      %v2797 = vadd.f32 0.0, %v2796
      %v2798 = vpop.f32.mrf.mxu0
      %2799 = vdwg.mxu0
      %v2801 = vsel %vm1341, %v1151, 0
      %v2804 = vsel %vm1341, %v1287, 0
      %2806 = vmatprep.subr.mxu0 0.0
      %2807 = vmatpush1.msra.mxu0 0.0
      %2808 = vmatprep.subr.mxu0 0.0
      %2809 = vmatpush1.msra.mxu0 0.0
      %2810 = vmatprep.subr.mxu0 0.0
      %2811 = vmatpush1.msra.mxu0 0.0
      %2812 = vmatprep.subr.mxu0 0.0
      %2813 = vmatpush1.msra.mxu0 0.0
      %2814 = vmatprep.subr.mxu0 0.0
      %2815 = vmatpush1.msra.mxu0 0.0
      %2816 = vmatprep.subr.mxu0 0.0
      %2817 = vmatpush1.msra.mxu0 0.0
      %2818 = vmatprep.subr.mxu0 0.0
      %2819 = vmatpush1.msra.mxu0 0.0
      %2820 = vmatprep.subr.mxu0 0.0
      %2821 = vmatpush1.msra.mxu0 0.0
      %2822 = vmatprep.subr.mxu0 0.0
      %2823 = vmatpush1.msra.mxu0 0.0
      %2824 = vmatprep.subr.mxu0 0.0
      %2825 = vmatpush1.msra.mxu0 0.0
      %2826 = vmatprep.subr.mxu0 0.0
      %2827 = vmatpush1.msra.mxu0 0.0
      %2828 = vmatprep.subr.mxu0 0.0
      %2829 = vmatpush1.msra.mxu0 0.0
      %2830 = vmatprep.subr.mxu0 0.0
      %2831 = vmatpush1.msra.mxu0 0.0
      %2832 = vmatprep.subr.mxu0 0.0
      %2833 = vmatpush1.msra.mxu0 0.0
      %2834 = vmatprep.subr.mxu0 0.0
      %2835 = vmatpush1.msra.mxu0 %v1330
      %2836 = vmatprep.subr.mxu0 0.0
      %2837 = vmatpush1.msra.mxu0 %v1329
      %2838 = vmatprep.subr.mxu0 0.0
      %2839 = vmatpush2.msra.mxu0 0.0
      %2840 = vmatprep.subr.mxu0 0.0
      %2841 = vmatpush2.msra.mxu0 0.0
      %2842 = vmatprep.subr.mxu0 0.0
      %2843 = vmatpush2.msra.mxu0 0.0
      %2844 = vmatprep.subr.mxu0 0.0
      %2845 = vmatpush2.msra.mxu0 0.0
      %2846 = vmatprep.subr.mxu0 0.0
      %2847 = vmatpush2.msra.mxu0 0.0
      %2848 = vmatprep.subr.mxu0 0.0
      %2849 = vmatpush2.msra.mxu0 0.0
      %2850 = vmatprep.subr.mxu0 0.0
      %2851 = vmatpush2.msra.mxu0 0.0
      %2852 = vmatprep.subr.mxu0 0.0
      %2853 = vmatpush2.msra.mxu0 0.0
      %2854 = vmatprep.subr.mxu0 0.0
      %2855 = vmatpush2.msra.mxu0 0.0
      %2856 = vmatprep.subr.mxu0 0.0
      %2857 = vmatpush2.msra.mxu0 0.0
      %2858 = vmatprep.subr.mxu0 0.0
      %2859 = vmatpush2.msra.mxu0 0.0
      %2860 = vmatprep.subr.mxu0 0.0
      %2861 = vmatpush2.msra.mxu0 0.0
      %2862 = vmatprep.subr.mxu0 0.0
      %2863 = vmatpush2.msra.mxu0 0.0
      %2864 = vmatprep.subr.mxu0 0.0
      %2865 = vmatpush2.msra.mxu0 0.0
      %2866 = vmatprep.subr.mxu0 0.0
      %2867 = vmatpush2.msra.mxu0 0.0
      %2868 = vmatprep.subr.mxu0 0.0
      %2869 = vmatpush2.msra.mxu0 0.0
      %2870 = vmatprep.mubr.f32.mxu0 0.0
      %2871 = vmatmul.mubr.f32.gmra.mxu0 %v2801
      %v2872 = vpop.f32.mrf.mxu0
      %v2873 = vadd.f32 0.0, %v2872
      %v2874 = vpop.f32.mrf.mxu0
      %2875 = vmatprep.mubr.f32.mxu0 0.0
      %2876 = vmatmul.mubr.f32.gmra.mxu0 %v2804
      %v2877 = vpop.f32.mrf.mxu0
      %v2878 = vadd.f32 0.0, %v2877
      %v2879 = vpop.f32.mrf.mxu0
      %2880 = vdwg.mxu0
      %v2882 = vsel %vm1341, %v1152, 0
      %v2885 = vsel %vm1341, %v1288, 0
      %2887 = vmatprep.subr.mxu0 0.0
      %2888 = vmatpush1.msra.mxu0 0.0
      %2889 = vmatprep.subr.mxu0 0.0
      %2890 = vmatpush1.msra.mxu0 0.0
      %2891 = vmatprep.subr.mxu0 0.0
      %2892 = vmatpush1.msra.mxu0 0.0
      %2893 = vmatprep.subr.mxu0 0.0
      %2894 = vmatpush1.msra.mxu0 0.0
      %2895 = vmatprep.subr.mxu0 0.0
      %2896 = vmatpush1.msra.mxu0 0.0
      %2897 = vmatprep.subr.mxu0 0.0
      %2898 = vmatpush1.msra.mxu0 0.0
      %2899 = vmatprep.subr.mxu0 0.0
      %2900 = vmatpush1.msra.mxu0 0.0
      %2901 = vmatprep.subr.mxu0 0.0
      %2902 = vmatpush1.msra.mxu0 0.0
      %2903 = vmatprep.subr.mxu0 0.0
      %2904 = vmatpush1.msra.mxu0 0.0
      %2905 = vmatprep.subr.mxu0 0.0
      %2906 = vmatpush1.msra.mxu0 0.0
      %2907 = vmatprep.subr.mxu0 0.0
      %2908 = vmatpush1.msra.mxu0 0.0
      %2909 = vmatprep.subr.mxu0 0.0
      %2910 = vmatpush1.msra.mxu0 0.0
      %2911 = vmatprep.subr.mxu0 0.0
      %2912 = vmatpush1.msra.mxu0 0.0
      %2913 = vmatprep.subr.mxu0 0.0
      %2914 = vmatpush1.msra.mxu0 0.0
      %2915 = vmatprep.subr.mxu0 0.0
      %2916 = vmatpush1.msra.mxu0 %v1332
      %2917 = vmatprep.subr.mxu0 0.0
      %2918 = vmatpush1.msra.mxu0 %v1331
      %2919 = vmatprep.subr.mxu0 0.0
      %2920 = vmatpush2.msra.mxu0 0.0
      %2921 = vmatprep.subr.mxu0 0.0
      %2922 = vmatpush2.msra.mxu0 0.0
      %2923 = vmatprep.subr.mxu0 0.0
      %2924 = vmatpush2.msra.mxu0 0.0
      %2925 = vmatprep.subr.mxu0 0.0
      %2926 = vmatpush2.msra.mxu0 0.0
      %2927 = vmatprep.subr.mxu0 0.0
      %2928 = vmatpush2.msra.mxu0 0.0
      %2929 = vmatprep.subr.mxu0 0.0
      %2930 = vmatpush2.msra.mxu0 0.0
      %2931 = vmatprep.subr.mxu0 0.0
      %2932 = vmatpush2.msra.mxu0 0.0
      %2933 = vmatprep.subr.mxu0 0.0
      %2934 = vmatpush2.msra.mxu0 0.0
      %2935 = vmatprep.subr.mxu0 0.0
      %2936 = vmatpush2.msra.mxu0 0.0
      %2937 = vmatprep.subr.mxu0 0.0
      %2938 = vmatpush2.msra.mxu0 0.0
      %2939 = vmatprep.subr.mxu0 0.0
      %2940 = vmatpush2.msra.mxu0 0.0
      %2941 = vmatprep.subr.mxu0 0.0
      %2942 = vmatpush2.msra.mxu0 0.0
      %2943 = vmatprep.subr.mxu0 0.0
      %2944 = vmatpush2.msra.mxu0 0.0
      %2945 = vmatprep.subr.mxu0 0.0
      %2946 = vmatpush2.msra.mxu0 0.0
      %2947 = vmatprep.subr.mxu0 0.0
      %2948 = vmatpush2.msra.mxu0 0.0
      %2949 = vmatprep.subr.mxu0 0.0
      %2950 = vmatpush2.msra.mxu0 0.0
      %2951 = vmatprep.mubr.f32.mxu0 0.0
      %2952 = vmatmul.mubr.f32.gmra.mxu0 %v2882
      %v2953 = vpop.f32.mrf.mxu0
      %v2954 = vadd.f32 0.0, %v2953
      %v2955 = vpop.f32.mrf.mxu0
      %2956 = vmatprep.mubr.f32.mxu0 0.0
      %2957 = vmatmul.mubr.f32.gmra.mxu0 %v2885
      %v2958 = vpop.f32.mrf.mxu0
      %v2959 = vadd.f32 0.0, %v2958
      %v2960 = vpop.f32.mrf.mxu0
      %2961 = vdwg.mxu0
      %v2963 = vsel %vm1341, %v1153, 0
      %v2966 = vsel %vm1341, %v1289, 0
      %2968 = vmatprep.subr.mxu0 0.0
      %2969 = vmatpush1.msra.mxu0 0.0
      %2970 = vmatprep.subr.mxu0 0.0
      %2971 = vmatpush1.msra.mxu0 0.0
      %2972 = vmatprep.subr.mxu0 0.0
      %2973 = vmatpush1.msra.mxu0 0.0
      %2974 = vmatprep.subr.mxu0 0.0
      %2975 = vmatpush1.msra.mxu0 0.0
      %2976 = vmatprep.subr.mxu0 0.0
      %2977 = vmatpush1.msra.mxu0 0.0
      %2978 = vmatprep.subr.mxu0 0.0
      %2979 = vmatpush1.msra.mxu0 0.0
      %2980 = vmatprep.subr.mxu0 0.0
      %2981 = vmatpush1.msra.mxu0 0.0
      %2982 = vmatprep.subr.mxu0 0.0
      %2983 = vmatpush1.msra.mxu0 0.0
      %2984 = vmatprep.subr.mxu0 0.0
      %2985 = vmatpush1.msra.mxu0 0.0
      %2986 = vmatprep.subr.mxu0 0.0
      %2987 = vmatpush1.msra.mxu0 0.0
      %2988 = vmatprep.subr.mxu0 0.0
      %2989 = vmatpush1.msra.mxu0 0.0
      %2990 = vmatprep.subr.mxu0 0.0
      %2991 = vmatpush1.msra.mxu0 0.0
      %2992 = vmatprep.subr.mxu0 0.0
      %2993 = vmatpush1.msra.mxu0 0.0
      %2994 = vmatprep.subr.mxu0 0.0
      %2995 = vmatpush1.msra.mxu0 0.0
      %2996 = vmatprep.subr.mxu0 0.0
      %2997 = vmatpush1.msra.mxu0 %v1334
      %2998 = vmatprep.subr.mxu0 0.0
      %2999 = vmatpush1.msra.mxu0 %v1333
      %3000 = vmatprep.subr.mxu0 0.0
      %3001 = vmatpush2.msra.mxu0 0.0
      %3002 = vmatprep.subr.mxu0 0.0
      %3003 = vmatpush2.msra.mxu0 0.0
      %3004 = vmatprep.subr.mxu0 0.0
      %3005 = vmatpush2.msra.mxu0 0.0
      %3006 = vmatprep.subr.mxu0 0.0
      %3007 = vmatpush2.msra.mxu0 0.0
      %3008 = vmatprep.subr.mxu0 0.0
      %3009 = vmatpush2.msra.mxu0 0.0
      %3010 = vmatprep.subr.mxu0 0.0
      %3011 = vmatpush2.msra.mxu0 0.0
      %3012 = vmatprep.subr.mxu0 0.0
      %3013 = vmatpush2.msra.mxu0 0.0
      %3014 = vmatprep.subr.mxu0 0.0
      %3015 = vmatpush2.msra.mxu0 0.0
      %3016 = vmatprep.subr.mxu0 0.0
      %3017 = vmatpush2.msra.mxu0 0.0
      %3018 = vmatprep.subr.mxu0 0.0
      %3019 = vmatpush2.msra.mxu0 0.0
      %3020 = vmatprep.subr.mxu0 0.0
      %3021 = vmatpush2.msra.mxu0 0.0
      %3022 = vmatprep.subr.mxu0 0.0
      %3023 = vmatpush2.msra.mxu0 0.0
      %3024 = vmatprep.subr.mxu0 0.0
      %3025 = vmatpush2.msra.mxu0 0.0
      %3026 = vmatprep.subr.mxu0 0.0
      %3027 = vmatpush2.msra.mxu0 0.0
      %3028 = vmatprep.subr.mxu0 0.0
      %3029 = vmatpush2.msra.mxu0 0.0
      %3030 = vmatprep.subr.mxu0 0.0
      %3031 = vmatpush2.msra.mxu0 0.0
      %3032 = vmatprep.mubr.f32.mxu0 0.0
      %3033 = vmatmul.mubr.f32.gmra.mxu0 %v2963
      %v3034 = vpop.f32.mrf.mxu0
      %v3035 = vadd.f32 0.0, %v3034
      %v3036 = vpop.f32.mrf.mxu0
      %3037 = vmatprep.mubr.f32.mxu0 0.0
      %3038 = vmatmul.mubr.f32.gmra.mxu0 %v2966
      %v3039 = vpop.f32.mrf.mxu0
      %v3040 = vadd.f32 0.0, %v3039
      %v3041 = vpop.f32.mrf.mxu0
      %3042 = vdwg.mxu0
      %v3044 = vsel %vm1341, %v1154, 0
      %v3047 = vsel %vm1341, %v1290, 0
      %3049 = vmatprep.subr.mxu0 0.0
      %3050 = vmatpush1.msra.mxu0 0.0
      %3051 = vmatprep.subr.mxu0 0.0
      %3052 = vmatpush1.msra.mxu0 0.0
      %3053 = vmatprep.subr.mxu0 0.0
      %3054 = vmatpush1.msra.mxu0 0.0
      %3055 = vmatprep.subr.mxu0 0.0
      %3056 = vmatpush1.msra.mxu0 0.0
      %3057 = vmatprep.subr.mxu0 0.0
      %3058 = vmatpush1.msra.mxu0 0.0
      %3059 = vmatprep.subr.mxu0 0.0
      %3060 = vmatpush1.msra.mxu0 0.0
      %3061 = vmatprep.subr.mxu0 0.0
      %3062 = vmatpush1.msra.mxu0 0.0
      %3063 = vmatprep.subr.mxu0 0.0
      %3064 = vmatpush1.msra.mxu0 0.0
      %3065 = vmatprep.subr.mxu0 0.0
      %3066 = vmatpush1.msra.mxu0 0.0
      %3067 = vmatprep.subr.mxu0 0.0
      %3068 = vmatpush1.msra.mxu0 0.0
      %3069 = vmatprep.subr.mxu0 0.0
      %3070 = vmatpush1.msra.mxu0 0.0
      %3071 = vmatprep.subr.mxu0 0.0
      %3072 = vmatpush1.msra.mxu0 0.0
      %3073 = vmatprep.subr.mxu0 0.0
      %3074 = vmatpush1.msra.mxu0 0.0
      %3075 = vmatprep.subr.mxu0 0.0
      %3076 = vmatpush1.msra.mxu0 0.0
      %3077 = vmatprep.subr.mxu0 0.0
      %3078 = vmatpush1.msra.mxu0 %v1336
      %3079 = vmatprep.subr.mxu0 0.0
      %3080 = vmatpush1.msra.mxu0 %v1335
      %3081 = vmatprep.subr.mxu0 0.0
      %3082 = vmatpush2.msra.mxu0 0.0
      %3083 = vmatprep.subr.mxu0 0.0
      %3084 = vmatpush2.msra.mxu0 0.0
      %3085 = vmatprep.subr.mxu0 0.0
      %3086 = vmatpush2.msra.mxu0 0.0
      %3087 = vmatprep.subr.mxu0 0.0
      %3088 = vmatpush2.msra.mxu0 0.0
      %3089 = vmatprep.subr.mxu0 0.0
      %3090 = vmatpush2.msra.mxu0 0.0
      %3091 = vmatprep.subr.mxu0 0.0
      %3092 = vmatpush2.msra.mxu0 0.0
      %3093 = vmatprep.subr.mxu0 0.0
      %3094 = vmatpush2.msra.mxu0 0.0
      %3095 = vmatprep.subr.mxu0 0.0
      %3096 = vmatpush2.msra.mxu0 0.0
      %3097 = vmatprep.subr.mxu0 0.0
      %3098 = vmatpush2.msra.mxu0 0.0
      %3099 = vmatprep.subr.mxu0 0.0
      %3100 = vmatpush2.msra.mxu0 0.0
      %3101 = vmatprep.subr.mxu0 0.0
      %3102 = vmatpush2.msra.mxu0 0.0
      %3103 = vmatprep.subr.mxu0 0.0
      %3104 = vmatpush2.msra.mxu0 0.0
      %3105 = vmatprep.subr.mxu0 0.0
      %3106 = vmatpush2.msra.mxu0 0.0
      %3107 = vmatprep.subr.mxu0 0.0
      %3108 = vmatpush2.msra.mxu0 0.0
      %3109 = vmatprep.subr.mxu0 0.0
      %3110 = vmatpush2.msra.mxu0 0.0
      %3111 = vmatprep.subr.mxu0 0.0
      %3112 = vmatpush2.msra.mxu0 0.0
      %3113 = vmatprep.mubr.f32.mxu0 0.0
      %3114 = vmatmul.mubr.f32.gmra.mxu0 %v3044
      %v3115 = vpop.f32.mrf.mxu0
      %v3116 = vadd.f32 0.0, %v3115
      %v3117 = vpop.f32.mrf.mxu0
      %3118 = vmatprep.mubr.f32.mxu0 0.0
      %3119 = vmatmul.mubr.f32.gmra.mxu0 %v3047
      %v3120 = vpop.f32.mrf.mxu0
      %v3121 = vadd.f32 0.0, %v3120
      %v3122 = vpop.f32.mrf.mxu0
      %3123 = vdwg.mxu0
      %v3125 = vsel %vm1341, %v1155, 0
      %v3128 = vsel %vm1341, %v1291, 0
      %3130 = vmatprep.subr.mxu0 0.0
      %3131 = vmatpush1.msra.mxu0 0.0
      %3132 = vmatprep.subr.mxu0 0.0
      %3133 = vmatpush1.msra.mxu0 0.0
      %3134 = vmatprep.subr.mxu0 0.0
      %3135 = vmatpush1.msra.mxu0 0.0
      %3136 = vmatprep.subr.mxu0 0.0
      %3137 = vmatpush1.msra.mxu0 0.0
      %3138 = vmatprep.subr.mxu0 0.0
      %3139 = vmatpush1.msra.mxu0 0.0
      %3140 = vmatprep.subr.mxu0 0.0
      %3141 = vmatpush1.msra.mxu0 0.0
      %3142 = vmatprep.subr.mxu0 0.0
      %3143 = vmatpush1.msra.mxu0 0.0
      %3144 = vmatprep.subr.mxu0 0.0
      %3145 = vmatpush1.msra.mxu0 0.0
      %3146 = vmatprep.subr.mxu0 0.0
      %3147 = vmatpush1.msra.mxu0 0.0
      %3148 = vmatprep.subr.mxu0 0.0
      %3149 = vmatpush1.msra.mxu0 0.0
      %3150 = vmatprep.subr.mxu0 0.0
      %3151 = vmatpush1.msra.mxu0 0.0
      %3152 = vmatprep.subr.mxu0 0.0
      %3153 = vmatpush1.msra.mxu0 0.0
      %3154 = vmatprep.subr.mxu0 0.0
      %3155 = vmatpush1.msra.mxu0 0.0
      %3156 = vmatprep.subr.mxu0 0.0
      %3157 = vmatpush1.msra.mxu0 0.0
      %3158 = vmatprep.subr.mxu0 0.0
      %3159 = vmatpush1.msra.mxu0 %v1338
      %3160 = vmatprep.subr.mxu0 0.0
      %3161 = vmatpush1.msra.mxu0 %v1337
      %3162 = vmatprep.subr.mxu0 0.0
      %3163 = vmatpush2.msra.mxu0 0.0
      %3164 = vmatprep.subr.mxu0 0.0
      %3165 = vmatpush2.msra.mxu0 0.0
      %3166 = vmatprep.subr.mxu0 0.0
      %3167 = vmatpush2.msra.mxu0 0.0
      %3168 = vmatprep.subr.mxu0 0.0
      %3169 = vmatpush2.msra.mxu0 0.0
      %3170 = vmatprep.subr.mxu0 0.0
      %3171 = vmatpush2.msra.mxu0 0.0
      %3172 = vmatprep.subr.mxu0 0.0
      %3173 = vmatpush2.msra.mxu0 0.0
      %3174 = vmatprep.subr.mxu0 0.0
      %3175 = vmatpush2.msra.mxu0 0.0
      %3176 = vmatprep.subr.mxu0 0.0
      %3177 = vmatpush2.msra.mxu0 0.0
      %3178 = vmatprep.subr.mxu0 0.0
      %3179 = vmatpush2.msra.mxu0 0.0
      %3180 = vmatprep.subr.mxu0 0.0
      %3181 = vmatpush2.msra.mxu0 0.0
      %3182 = vmatprep.subr.mxu0 0.0
      %3183 = vmatpush2.msra.mxu0 0.0
      %3184 = vmatprep.subr.mxu0 0.0
      %3185 = vmatpush2.msra.mxu0 0.0
      %3186 = vmatprep.subr.mxu0 0.0
      %3187 = vmatpush2.msra.mxu0 0.0
      %3188 = vmatprep.subr.mxu0 0.0
      %3189 = vmatpush2.msra.mxu0 0.0
      %3190 = vmatprep.subr.mxu0 0.0
      %3191 = vmatpush2.msra.mxu0 0.0
      %3192 = vmatprep.subr.mxu0 0.0
      %3193 = vmatpush2.msra.mxu0 0.0
      %3194 = vmatprep.mubr.f32.mxu0 0.0
      %3195 = vmatmul.mubr.f32.gmra.mxu0 %v3125
      %v3196 = vpop.f32.mrf.mxu0
      %v3197 = vadd.f32 0.0, %v3196
      %v3198 = vpop.f32.mrf.mxu0
      %3199 = vmatprep.mubr.f32.mxu0 0.0
      %3200 = vmatmul.mubr.f32.gmra.mxu0 %v3128
      %v3201 = vpop.f32.mrf.mxu0
      %v3202 = vadd.f32 0.0, %v3201
      %v3203 = vpop.f32.mrf.mxu0
      %3204 = vdwg.mxu0
      %v3206 = vsel %vm1341, %v1156, 0
      %v3209 = vsel %vm1341, %v1292, 0
      %3211 = vmatprep.subr.mxu0 0.0
      %3212 = vmatpush1.msra.mxu0 0.0
      %3213 = vmatprep.subr.mxu0 0.0
      %3214 = vmatpush1.msra.mxu0 0.0
      %3215 = vmatprep.subr.mxu0 0.0
      %3216 = vmatpush1.msra.mxu0 0.0
      %3217 = vmatprep.subr.mxu0 0.0
      %3218 = vmatpush1.msra.mxu0 0.0
      %3219 = vmatprep.subr.mxu0 0.0
      %3220 = vmatpush1.msra.mxu0 0.0
      %3221 = vmatprep.subr.mxu0 0.0
      %3222 = vmatpush1.msra.mxu0 0.0
      %3223 = vmatprep.subr.mxu0 0.0
      %3224 = vmatpush1.msra.mxu0 0.0
      %3225 = vmatprep.subr.mxu0 0.0
      %3226 = vmatpush1.msra.mxu0 0.0
      %3227 = vmatprep.subr.mxu0 0.0
      %3228 = vmatpush1.msra.mxu0 0.0
      %3229 = vmatprep.subr.mxu0 0.0
      %3230 = vmatpush1.msra.mxu0 0.0
      %3231 = vmatprep.subr.mxu0 0.0
      %3232 = vmatpush1.msra.mxu0 0.0
      %3233 = vmatprep.subr.mxu0 0.0
      %3234 = vmatpush1.msra.mxu0 0.0
      %3235 = vmatprep.subr.mxu0 0.0
      %3236 = vmatpush1.msra.mxu0 0.0
      %3237 = vmatprep.subr.mxu0 0.0
      %3238 = vmatpush1.msra.mxu0 0.0
      %3239 = vmatprep.subr.mxu0 0.0
      %3240 = vmatpush1.msra.mxu0 %v1340
      %3241 = vmatprep.subr.mxu0 0.0
      %3242 = vmatpush1.msra.mxu0 %v1339
      %3243 = vmatprep.subr.mxu0 0.0
      %3244 = vmatpush2.msra.mxu0 0.0
      %3245 = vmatprep.subr.mxu0 0.0
      %3246 = vmatpush2.msra.mxu0 0.0
      %3247 = vmatprep.subr.mxu0 0.0
      %3248 = vmatpush2.msra.mxu0 0.0
      %3249 = vmatprep.subr.mxu0 0.0
      %3250 = vmatpush2.msra.mxu0 0.0
      %3251 = vmatprep.subr.mxu0 0.0
      %3252 = vmatpush2.msra.mxu0 0.0
      %3253 = vmatprep.subr.mxu0 0.0
      %3254 = vmatpush2.msra.mxu0 0.0
      %3255 = vmatprep.subr.mxu0 0.0
      %3256 = vmatpush2.msra.mxu0 0.0
      %3257 = vmatprep.subr.mxu0 0.0
      %3258 = vmatpush2.msra.mxu0 0.0
      %3259 = vmatprep.subr.mxu0 0.0
      %3260 = vmatpush2.msra.mxu0 0.0
      %3261 = vmatprep.subr.mxu0 0.0
      %3262 = vmatpush2.msra.mxu0 0.0
      %3263 = vmatprep.subr.mxu0 0.0
      %3264 = vmatpush2.msra.mxu0 0.0
      %3265 = vmatprep.subr.mxu0 0.0
      %3266 = vmatpush2.msra.mxu0 0.0
      %3267 = vmatprep.subr.mxu0 0.0
      %3268 = vmatpush2.msra.mxu0 0.0
      %3269 = vmatprep.subr.mxu0 0.0
      %3270 = vmatpush2.msra.mxu0 0.0
      %3271 = vmatprep.subr.mxu0 0.0
      %3272 = vmatpush2.msra.mxu0 0.0
      %3273 = vmatprep.subr.mxu0 0.0
      %3274 = vmatpush2.msra.mxu0 0.0
      %3275 = vmatprep.mubr.f32.mxu0 0.0
      %3276 = vmatmul.mubr.f32.gmra.mxu0 %v3206
      %v3277 = vpop.f32.mrf.mxu0
      %v3278 = vadd.f32 0.0, %v3277
      %v3279 = vpop.f32.mrf.mxu0
      %3280 = vmatprep.mubr.f32.mxu0 0.0
      %3281 = vmatmul.mubr.f32.gmra.mxu0 %v3209
      %v3282 = vpop.f32.mrf.mxu0
      %v3283 = vadd.f32 0.0, %v3282
      %v3284 = vpop.f32.mrf.mxu0
      %3285 = vdwg.mxu0
      %v3286 = vld [vmem:[%s314] sm:$0xff]
      %v3287 = vld [vmem:[%s314 + $0x8] sm:$0xff]
      %v3288 = vld [vmem:[%s314 + $0x10] sm:$0xff]
      %v3289 = vld [vmem:[%s314 + $0x18] sm:$0xff]
      %v3290 = vld [vmem:[%s314 + $0x20] sm:$0xff]
      %v3291 = vld [vmem:[%s314 + $0x28] sm:$0xff]
      %v3292 = vld [vmem:[%s314 + $0x30] sm:$0xff]
      %v3293 = vld [vmem:[%s314 + $0x38] sm:$0xff]
      %v3294 = vld [vmem:[%s314 + $0x40] sm:$0xff]
      %v3295 = vld [vmem:[%s314 + $0x48] sm:$0xff]
      %v3296 = vld [vmem:[%s314 + $0x50] sm:$0xff]
      %v3297 = vld [vmem:[%s314 + $0x58] sm:$0xff]
      %v3298 = vld [vmem:[%s314 + $0x60] sm:$0xff]
      %v3299 = vld [vmem:[%s314 + $0x68] sm:$0xff]
      %v3300 = vld [vmem:[%s314 + $0x70] sm:$0xff]
      %v3301 = vld [vmem:[%s314 + $0x78] sm:$0xff]
      %v3302 = vld [vmem:[%s314 + $0x80] sm:$0xff]
      %v3303 = vld [vmem:[%s314 + $0x88] sm:$0xff]
      %v3304 = vld [vmem:[%s314 + $0x90] sm:$0xff]
      %v3305 = vld [vmem:[%s314 + $0x98] sm:$0xff]
      %v3306 = vld [vmem:[%s314 + $0xa0] sm:$0xff]
      %v3307 = vld [vmem:[%s314 + $0xa8] sm:$0xff]
      %v3308 = vld [vmem:[%s314 + $0xb0] sm:$0xff]
      %v3309 = vld [vmem:[%s314 + $0xb8] sm:$0xff]
      %v3310 = vld [vmem:[%s314 + $0xc0] sm:$0xff]
      %v3311 = vld [vmem:[%s314 + $0xc8] sm:$0xff]
      %v3312 = vld [vmem:[%s314 + $0xd0] sm:$0xff]
      %v3313 = vld [vmem:[%s314 + $0xd8] sm:$0xff]
      %v3314 = vld [vmem:[%s314 + $0xe0] sm:$0xff]
      %v3315 = vld [vmem:[%s314 + $0xe8] sm:$0xff]
      %v3316 = vld [vmem:[%s314 + $0xf0] sm:$0xff]
      %v3317 = vld [vmem:[%s314 + $0xf8] sm:$0xff]
      %v3318 = vld [vmem:[%s314 + $0x100] sm:$0xff]
      %v3319 = vld [vmem:[%s314 + $0x108] sm:$0xff]
      %v3320 = vld [vmem:[%s314 + $0x110] sm:$0xff]
      %v3321 = vld [vmem:[%s314 + $0x118] sm:$0xff]
      %v3322 = vld [vmem:[%s314 + $0x120] sm:$0xff]
      %v3323 = vld [vmem:[%s314 + $0x128] sm:$0xff]
      %v3324 = vld [vmem:[%s314 + $0x130] sm:$0xff]
      %v3325 = vld [vmem:[%s314 + $0x138] sm:$0xff]
      %v3326 = vld [vmem:[%s314 + $0x140] sm:$0xff]
      %v3327 = vld [vmem:[%s314 + $0x148] sm:$0xff]
      %v3328 = vld [vmem:[%s314 + $0x150] sm:$0xff]
      %v3329 = vld [vmem:[%s314 + $0x158] sm:$0xff]
      %v3330 = vld [vmem:[%s314 + $0x160] sm:$0xff]
      %v3331 = vld [vmem:[%s314 + $0x168] sm:$0xff]
      %v3332 = vld [vmem:[%s314 + $0x170] sm:$0xff]
      %v3333 = vld [vmem:[%s314 + $0x178] sm:$0xff]
      %v3335 = vsel %vm1341, %v3286, 0
      %v3338 = vsel %vm1341, %v3287, 0
      %3340 = vmatprep.subr.mxu0 0.0
      %3341 = vmatpush1.msra.mxu0 0.0
      %3342 = vmatprep.subr.mxu0 0.0
      %3343 = vmatpush1.msra.mxu0 0.0
      %3344 = vmatprep.subr.mxu0 0.0
      %3345 = vmatpush1.msra.mxu0 0.0
      %3346 = vmatprep.subr.mxu0 0.0
      %3347 = vmatpush1.msra.mxu0 0.0
      %3348 = vmatprep.subr.mxu0 0.0
      %3349 = vmatpush1.msra.mxu0 0.0
      %3350 = vmatprep.subr.mxu0 0.0
      %3351 = vmatpush1.msra.mxu0 0.0
      %3352 = vmatprep.subr.mxu0 0.0
      %3353 = vmatpush1.msra.mxu0 0.0
      %3354 = vmatprep.subr.mxu0 0.0
      %3355 = vmatpush1.msra.mxu0 0.0
      %3356 = vmatprep.subr.mxu0 0.0
      %3357 = vmatpush1.msra.mxu0 0.0
      %3358 = vmatprep.subr.mxu0 0.0
      %3359 = vmatpush1.msra.mxu0 0.0
      %3360 = vmatprep.subr.mxu0 0.0
      %3361 = vmatpush1.msra.mxu0 0.0
      %3362 = vmatprep.subr.mxu0 0.0
      %3363 = vmatpush1.msra.mxu0 0.0
      %3364 = vmatprep.subr.mxu0 0.0
      %3365 = vmatpush1.msra.mxu0 0.0
      %3366 = vmatprep.subr.mxu0 0.0
      %3367 = vmatpush1.msra.mxu0 0.0
      %3368 = vmatprep.subr.mxu0 0.0
      %3369 = vmatpush1.msra.mxu0 %v1420
      %3370 = vmatprep.subr.mxu0 0.0
      %3371 = vmatpush1.msra.mxu0 %v1415
      %3372 = vmatprep.subr.mxu0 0.0
      %3373 = vmatpush2.msra.mxu0 0.0
      %3374 = vmatprep.subr.mxu0 0.0
      %3375 = vmatpush2.msra.mxu0 0.0
      %3376 = vmatprep.subr.mxu0 0.0
      %3377 = vmatpush2.msra.mxu0 0.0
      %3378 = vmatprep.subr.mxu0 0.0
      %3379 = vmatpush2.msra.mxu0 0.0
      %3380 = vmatprep.subr.mxu0 0.0
      %3381 = vmatpush2.msra.mxu0 0.0
      %3382 = vmatprep.subr.mxu0 0.0
      %3383 = vmatpush2.msra.mxu0 0.0
      %3384 = vmatprep.subr.mxu0 0.0
      %3385 = vmatpush2.msra.mxu0 0.0
      %3386 = vmatprep.subr.mxu0 0.0
      %3387 = vmatpush2.msra.mxu0 0.0
      %3388 = vmatprep.subr.mxu0 0.0
      %3389 = vmatpush2.msra.mxu0 0.0
      %3390 = vmatprep.subr.mxu0 0.0
      %3391 = vmatpush2.msra.mxu0 0.0
      %3392 = vmatprep.subr.mxu0 0.0
      %3393 = vmatpush2.msra.mxu0 0.0
      %3394 = vmatprep.subr.mxu0 0.0
      %3395 = vmatpush2.msra.mxu0 0.0
      %3396 = vmatprep.subr.mxu0 0.0
      %3397 = vmatpush2.msra.mxu0 0.0
      %3398 = vmatprep.subr.mxu0 0.0
      %3399 = vmatpush2.msra.mxu0 0.0
      %3400 = vmatprep.subr.mxu0 0.0
      %3401 = vmatpush2.msra.mxu0 0.0
      %3402 = vmatprep.subr.mxu0 0.0
      %3403 = vmatpush2.msra.mxu0 0.0
      %3404 = vmatprep.mubr.f32.mxu0 0.0
      %3405 = vmatmul.mubr.f32.gmra.mxu0 %v3335
      %v3406 = vpop.f32.mrf.mxu0
      %v3407 = vadd.f32 0.0, %v3406
      %v3408 = vpop.f32.mrf.mxu0
      %3409 = vmatprep.mubr.f32.mxu0 0.0
      %3410 = vmatmul.mubr.f32.gmra.mxu0 %v3338
      %v3411 = vpop.f32.mrf.mxu0
      %v3412 = vadd.f32 0.0, %v3411
      %v3413 = vpop.f32.mrf.mxu0
      %3414 = vdwg.mxu0
      %v3416 = vsel %vm1341, %v3288, 0
      %v3419 = vsel %vm1341, %v3289, 0
      %3421 = vmatprep.subr.mxu0 0.0
      %3422 = vmatpush1.msra.mxu0 0.0
      %3423 = vmatprep.subr.mxu0 0.0
      %3424 = vmatpush1.msra.mxu0 0.0
      %3425 = vmatprep.subr.mxu0 0.0
      %3426 = vmatpush1.msra.mxu0 0.0
      %3427 = vmatprep.subr.mxu0 0.0
      %3428 = vmatpush1.msra.mxu0 0.0
      %3429 = vmatprep.subr.mxu0 0.0
      %3430 = vmatpush1.msra.mxu0 0.0
      %3431 = vmatprep.subr.mxu0 0.0
      %3432 = vmatpush1.msra.mxu0 0.0
      %3433 = vmatprep.subr.mxu0 0.0
      %3434 = vmatpush1.msra.mxu0 0.0
      %3435 = vmatprep.subr.mxu0 0.0
      %3436 = vmatpush1.msra.mxu0 0.0
      %3437 = vmatprep.subr.mxu0 0.0
      %3438 = vmatpush1.msra.mxu0 0.0
      %3439 = vmatprep.subr.mxu0 0.0
      %3440 = vmatpush1.msra.mxu0 0.0
      %3441 = vmatprep.subr.mxu0 0.0
      %3442 = vmatpush1.msra.mxu0 0.0
      %3443 = vmatprep.subr.mxu0 0.0
      %3444 = vmatpush1.msra.mxu0 0.0
      %3445 = vmatprep.subr.mxu0 0.0
      %3446 = vmatpush1.msra.mxu0 0.0
      %3447 = vmatprep.subr.mxu0 0.0
      %3448 = vmatpush1.msra.mxu0 0.0
      %3449 = vmatprep.subr.mxu0 0.0
      %3450 = vmatpush1.msra.mxu0 %v1501
      %3451 = vmatprep.subr.mxu0 0.0
      %3452 = vmatpush1.msra.mxu0 %v1496
      %3453 = vmatprep.subr.mxu0 0.0
      %3454 = vmatpush2.msra.mxu0 0.0
      %3455 = vmatprep.subr.mxu0 0.0
      %3456 = vmatpush2.msra.mxu0 0.0
      %3457 = vmatprep.subr.mxu0 0.0
      %3458 = vmatpush2.msra.mxu0 0.0
      %3459 = vmatprep.subr.mxu0 0.0
      %3460 = vmatpush2.msra.mxu0 0.0
      %3461 = vmatprep.subr.mxu0 0.0
      %3462 = vmatpush2.msra.mxu0 0.0
      %3463 = vmatprep.subr.mxu0 0.0
      %3464 = vmatpush2.msra.mxu0 0.0
      %3465 = vmatprep.subr.mxu0 0.0
      %3466 = vmatpush2.msra.mxu0 0.0
      %3467 = vmatprep.subr.mxu0 0.0
      %3468 = vmatpush2.msra.mxu0 0.0
      %3469 = vmatprep.subr.mxu0 0.0
      %3470 = vmatpush2.msra.mxu0 0.0
      %3471 = vmatprep.subr.mxu0 0.0
      %3472 = vmatpush2.msra.mxu0 0.0
      %3473 = vmatprep.subr.mxu0 0.0
      %3474 = vmatpush2.msra.mxu0 0.0
      %3475 = vmatprep.subr.mxu0 0.0
      %3476 = vmatpush2.msra.mxu0 0.0
      %3477 = vmatprep.subr.mxu0 0.0
      %3478 = vmatpush2.msra.mxu0 0.0
      %3479 = vmatprep.subr.mxu0 0.0
      %3480 = vmatpush2.msra.mxu0 0.0
      %3481 = vmatprep.subr.mxu0 0.0
      %3482 = vmatpush2.msra.mxu0 0.0
      %3483 = vmatprep.subr.mxu0 0.0
      %3484 = vmatpush2.msra.mxu0 0.0
      %3485 = vmatprep.mubr.f32.mxu0 0.0
      %3486 = vmatmul.mubr.f32.gmra.mxu0 %v3416
      %v3487 = vpop.f32.mrf.mxu0
      %v3488 = vadd.f32 0.0, %v3487
      %v3489 = vpop.f32.mrf.mxu0
      %3490 = vmatprep.mubr.f32.mxu0 0.0
      %3491 = vmatmul.mubr.f32.gmra.mxu0 %v3419
      %v3492 = vpop.f32.mrf.mxu0
      %v3493 = vadd.f32 0.0, %v3492
      %v3494 = vpop.f32.mrf.mxu0
      %3495 = vdwg.mxu0
      %v3497 = vsel %vm1341, %v3290, 0
      %v3500 = vsel %vm1341, %v3291, 0
      %3502 = vmatprep.subr.mxu0 0.0
      %3503 = vmatpush1.msra.mxu0 0.0
      %3504 = vmatprep.subr.mxu0 0.0
      %3505 = vmatpush1.msra.mxu0 0.0
      %3506 = vmatprep.subr.mxu0 0.0
      %3507 = vmatpush1.msra.mxu0 0.0
      %3508 = vmatprep.subr.mxu0 0.0
      %3509 = vmatpush1.msra.mxu0 0.0
      %3510 = vmatprep.subr.mxu0 0.0
      %3511 = vmatpush1.msra.mxu0 0.0
      %3512 = vmatprep.subr.mxu0 0.0
      %3513 = vmatpush1.msra.mxu0 0.0
      %3514 = vmatprep.subr.mxu0 0.0
      %3515 = vmatpush1.msra.mxu0 0.0
      %3516 = vmatprep.subr.mxu0 0.0
      %3517 = vmatpush1.msra.mxu0 0.0
      %3518 = vmatprep.subr.mxu0 0.0
      %3519 = vmatpush1.msra.mxu0 0.0
      %3520 = vmatprep.subr.mxu0 0.0
      %3521 = vmatpush1.msra.mxu0 0.0
      %3522 = vmatprep.subr.mxu0 0.0
      %3523 = vmatpush1.msra.mxu0 0.0
      %3524 = vmatprep.subr.mxu0 0.0
      %3525 = vmatpush1.msra.mxu0 0.0
      %3526 = vmatprep.subr.mxu0 0.0
      %3527 = vmatpush1.msra.mxu0 0.0
      %3528 = vmatprep.subr.mxu0 0.0
      %3529 = vmatpush1.msra.mxu0 0.0
      %3530 = vmatprep.subr.mxu0 0.0
      %3531 = vmatpush1.msra.mxu0 %v1582
      %3532 = vmatprep.subr.mxu0 0.0
      %3533 = vmatpush1.msra.mxu0 %v1577
      %3534 = vmatprep.subr.mxu0 0.0
      %3535 = vmatpush2.msra.mxu0 0.0
      %3536 = vmatprep.subr.mxu0 0.0
      %3537 = vmatpush2.msra.mxu0 0.0
      %3538 = vmatprep.subr.mxu0 0.0
      %3539 = vmatpush2.msra.mxu0 0.0
      %3540 = vmatprep.subr.mxu0 0.0
      %3541 = vmatpush2.msra.mxu0 0.0
      %3542 = vmatprep.subr.mxu0 0.0
      %3543 = vmatpush2.msra.mxu0 0.0
      %3544 = vmatprep.subr.mxu0 0.0
      %3545 = vmatpush2.msra.mxu0 0.0
      %3546 = vmatprep.subr.mxu0 0.0
      %3547 = vmatpush2.msra.mxu0 0.0
      %3548 = vmatprep.subr.mxu0 0.0
      %3549 = vmatpush2.msra.mxu0 0.0
      %3550 = vmatprep.subr.mxu0 0.0
      %3551 = vmatpush2.msra.mxu0 0.0
      %3552 = vmatprep.subr.mxu0 0.0
      %3553 = vmatpush2.msra.mxu0 0.0
      %3554 = vmatprep.subr.mxu0 0.0
      %3555 = vmatpush2.msra.mxu0 0.0
      %3556 = vmatprep.subr.mxu0 0.0
      %3557 = vmatpush2.msra.mxu0 0.0
      %3558 = vmatprep.subr.mxu0 0.0
      %3559 = vmatpush2.msra.mxu0 0.0
      %3560 = vmatprep.subr.mxu0 0.0
      %3561 = vmatpush2.msra.mxu0 0.0
      %3562 = vmatprep.subr.mxu0 0.0
      %3563 = vmatpush2.msra.mxu0 0.0
      %3564 = vmatprep.subr.mxu0 0.0
      %3565 = vmatpush2.msra.mxu0 0.0
      %3566 = vmatprep.mubr.f32.mxu0 0.0
      %3567 = vmatmul.mubr.f32.gmra.mxu0 %v3497
      %v3568 = vpop.f32.mrf.mxu0
      %v3569 = vadd.f32 0.0, %v3568
      %v3570 = vpop.f32.mrf.mxu0
      %3571 = vmatprep.mubr.f32.mxu0 0.0
      %3572 = vmatmul.mubr.f32.gmra.mxu0 %v3500
      %v3573 = vpop.f32.mrf.mxu0
      %v3574 = vadd.f32 0.0, %v3573
      %v3575 = vpop.f32.mrf.mxu0
      %3576 = vdwg.mxu0
      %v3578 = vsel %vm1341, %v3292, 0
      %v3581 = vsel %vm1341, %v3293, 0
      %3583 = vmatprep.subr.mxu0 0.0
      %3584 = vmatpush1.msra.mxu0 0.0
      %3585 = vmatprep.subr.mxu0 0.0
      %3586 = vmatpush1.msra.mxu0 0.0
      %3587 = vmatprep.subr.mxu0 0.0
      %3588 = vmatpush1.msra.mxu0 0.0
      %3589 = vmatprep.subr.mxu0 0.0
      %3590 = vmatpush1.msra.mxu0 0.0
      %3591 = vmatprep.subr.mxu0 0.0
      %3592 = vmatpush1.msra.mxu0 0.0
      %3593 = vmatprep.subr.mxu0 0.0
      %3594 = vmatpush1.msra.mxu0 0.0
      %3595 = vmatprep.subr.mxu0 0.0
      %3596 = vmatpush1.msra.mxu0 0.0
      %3597 = vmatprep.subr.mxu0 0.0
      %3598 = vmatpush1.msra.mxu0 0.0
      %3599 = vmatprep.subr.mxu0 0.0
      %3600 = vmatpush1.msra.mxu0 0.0
      %3601 = vmatprep.subr.mxu0 0.0
      %3602 = vmatpush1.msra.mxu0 0.0
      %3603 = vmatprep.subr.mxu0 0.0
      %3604 = vmatpush1.msra.mxu0 0.0
      %3605 = vmatprep.subr.mxu0 0.0
      %3606 = vmatpush1.msra.mxu0 0.0
      %3607 = vmatprep.subr.mxu0 0.0
      %3608 = vmatpush1.msra.mxu0 0.0
      %3609 = vmatprep.subr.mxu0 0.0
      %3610 = vmatpush1.msra.mxu0 0.0
      %3611 = vmatprep.subr.mxu0 0.0
      %3612 = vmatpush1.msra.mxu0 %v1663
      %3613 = vmatprep.subr.mxu0 0.0
      %3614 = vmatpush1.msra.mxu0 %v1658
      %3615 = vmatprep.subr.mxu0 0.0
      %3616 = vmatpush2.msra.mxu0 0.0
      %3617 = vmatprep.subr.mxu0 0.0
      %3618 = vmatpush2.msra.mxu0 0.0
      %3619 = vmatprep.subr.mxu0 0.0
      %3620 = vmatpush2.msra.mxu0 0.0
      %3621 = vmatprep.subr.mxu0 0.0
      %3622 = vmatpush2.msra.mxu0 0.0
      %3623 = vmatprep.subr.mxu0 0.0
      %3624 = vmatpush2.msra.mxu0 0.0
      %3625 = vmatprep.subr.mxu0 0.0
      %3626 = vmatpush2.msra.mxu0 0.0
      %3627 = vmatprep.subr.mxu0 0.0
      %3628 = vmatpush2.msra.mxu0 0.0
      %3629 = vmatprep.subr.mxu0 0.0
      %3630 = vmatpush2.msra.mxu0 0.0
      %3631 = vmatprep.subr.mxu0 0.0
      %3632 = vmatpush2.msra.mxu0 0.0
      %3633 = vmatprep.subr.mxu0 0.0
      %3634 = vmatpush2.msra.mxu0 0.0
      %3635 = vmatprep.subr.mxu0 0.0
      %3636 = vmatpush2.msra.mxu0 0.0
      %3637 = vmatprep.subr.mxu0 0.0
      %3638 = vmatpush2.msra.mxu0 0.0
      %3639 = vmatprep.subr.mxu0 0.0
      %3640 = vmatpush2.msra.mxu0 0.0
      %3641 = vmatprep.subr.mxu0 0.0
      %3642 = vmatpush2.msra.mxu0 0.0
      %3643 = vmatprep.subr.mxu0 0.0
      %3644 = vmatpush2.msra.mxu0 0.0
      %3645 = vmatprep.subr.mxu0 0.0
      %3646 = vmatpush2.msra.mxu0 0.0
      %3647 = vmatprep.mubr.f32.mxu0 0.0
      %3648 = vmatmul.mubr.f32.gmra.mxu0 %v3578
      %v3649 = vpop.f32.mrf.mxu0
      %v3650 = vadd.f32 0.0, %v3649
      %v3651 = vpop.f32.mrf.mxu0
      %3652 = vmatprep.mubr.f32.mxu0 0.0
      %3653 = vmatmul.mubr.f32.gmra.mxu0 %v3581
      %v3654 = vpop.f32.mrf.mxu0
      %v3655 = vadd.f32 0.0, %v3654
      %v3656 = vpop.f32.mrf.mxu0
      %3657 = vdwg.mxu0
      %v3659 = vsel %vm1341, %v3294, 0
      %v3662 = vsel %vm1341, %v3295, 0
      %3664 = vmatprep.subr.mxu0 0.0
      %3665 = vmatpush1.msra.mxu0 0.0
      %3666 = vmatprep.subr.mxu0 0.0
      %3667 = vmatpush1.msra.mxu0 0.0
      %3668 = vmatprep.subr.mxu0 0.0
      %3669 = vmatpush1.msra.mxu0 0.0
      %3670 = vmatprep.subr.mxu0 0.0
      %3671 = vmatpush1.msra.mxu0 0.0
      %3672 = vmatprep.subr.mxu0 0.0
      %3673 = vmatpush1.msra.mxu0 0.0
      %3674 = vmatprep.subr.mxu0 0.0
      %3675 = vmatpush1.msra.mxu0 0.0
      %3676 = vmatprep.subr.mxu0 0.0
      %3677 = vmatpush1.msra.mxu0 0.0
      %3678 = vmatprep.subr.mxu0 0.0
      %3679 = vmatpush1.msra.mxu0 0.0
      %3680 = vmatprep.subr.mxu0 0.0
      %3681 = vmatpush1.msra.mxu0 0.0
      %3682 = vmatprep.subr.mxu0 0.0
      %3683 = vmatpush1.msra.mxu0 0.0
      %3684 = vmatprep.subr.mxu0 0.0
      %3685 = vmatpush1.msra.mxu0 0.0
      %3686 = vmatprep.subr.mxu0 0.0
      %3687 = vmatpush1.msra.mxu0 0.0
      %3688 = vmatprep.subr.mxu0 0.0
      %3689 = vmatpush1.msra.mxu0 0.0
      %3690 = vmatprep.subr.mxu0 0.0
      %3691 = vmatpush1.msra.mxu0 0.0
      %3692 = vmatprep.subr.mxu0 0.0
      %3693 = vmatpush1.msra.mxu0 %v1744
      %3694 = vmatprep.subr.mxu0 0.0
      %3695 = vmatpush1.msra.mxu0 %v1739
      %3696 = vmatprep.subr.mxu0 0.0
      %3697 = vmatpush2.msra.mxu0 0.0
      %3698 = vmatprep.subr.mxu0 0.0
      %3699 = vmatpush2.msra.mxu0 0.0
      %3700 = vmatprep.subr.mxu0 0.0
      %3701 = vmatpush2.msra.mxu0 0.0
      %3702 = vmatprep.subr.mxu0 0.0
      %3703 = vmatpush2.msra.mxu0 0.0
      %3704 = vmatprep.subr.mxu0 0.0
      %3705 = vmatpush2.msra.mxu0 0.0
      %3706 = vmatprep.subr.mxu0 0.0
      %3707 = vmatpush2.msra.mxu0 0.0
      %3708 = vmatprep.subr.mxu0 0.0
      %3709 = vmatpush2.msra.mxu0 0.0
      %3710 = vmatprep.subr.mxu0 0.0
      %3711 = vmatpush2.msra.mxu0 0.0
      %3712 = vmatprep.subr.mxu0 0.0
      %3713 = vmatpush2.msra.mxu0 0.0
      %3714 = vmatprep.subr.mxu0 0.0
      %3715 = vmatpush2.msra.mxu0 0.0
      %3716 = vmatprep.subr.mxu0 0.0
      %3717 = vmatpush2.msra.mxu0 0.0
      %3718 = vmatprep.subr.mxu0 0.0
      %3719 = vmatpush2.msra.mxu0 0.0
      %3720 = vmatprep.subr.mxu0 0.0
      %3721 = vmatpush2.msra.mxu0 0.0
      %3722 = vmatprep.subr.mxu0 0.0
      %3723 = vmatpush2.msra.mxu0 0.0
      %3724 = vmatprep.subr.mxu0 0.0
      %3725 = vmatpush2.msra.mxu0 0.0
      %3726 = vmatprep.subr.mxu0 0.0
      %3727 = vmatpush2.msra.mxu0 0.0
      %3728 = vmatprep.mubr.f32.mxu0 0.0
      %3729 = vmatmul.mubr.f32.gmra.mxu0 %v3659
      %v3730 = vpop.f32.mrf.mxu0
      %v3731 = vadd.f32 0.0, %v3730
      %v3732 = vpop.f32.mrf.mxu0
      %3733 = vmatprep.mubr.f32.mxu0 0.0
      %3734 = vmatmul.mubr.f32.gmra.mxu0 %v3662
      %v3735 = vpop.f32.mrf.mxu0
      %v3736 = vadd.f32 0.0, %v3735
      %v3737 = vpop.f32.mrf.mxu0
      %3738 = vdwg.mxu0
      %v3740 = vsel %vm1341, %v3296, 0
      %v3743 = vsel %vm1341, %v3297, 0
      %3745 = vmatprep.subr.mxu0 0.0
      %3746 = vmatpush1.msra.mxu0 0.0
      %3747 = vmatprep.subr.mxu0 0.0
      %3748 = vmatpush1.msra.mxu0 0.0
      %3749 = vmatprep.subr.mxu0 0.0
      %3750 = vmatpush1.msra.mxu0 0.0
      %3751 = vmatprep.subr.mxu0 0.0
      %3752 = vmatpush1.msra.mxu0 0.0
      %3753 = vmatprep.subr.mxu0 0.0
      %3754 = vmatpush1.msra.mxu0 0.0
      %3755 = vmatprep.subr.mxu0 0.0
      %3756 = vmatpush1.msra.mxu0 0.0
      %3757 = vmatprep.subr.mxu0 0.0
      %3758 = vmatpush1.msra.mxu0 0.0
      %3759 = vmatprep.subr.mxu0 0.0
      %3760 = vmatpush1.msra.mxu0 0.0
      %3761 = vmatprep.subr.mxu0 0.0
      %3762 = vmatpush1.msra.mxu0 0.0
      %3763 = vmatprep.subr.mxu0 0.0
      %3764 = vmatpush1.msra.mxu0 0.0
      %3765 = vmatprep.subr.mxu0 0.0
      %3766 = vmatpush1.msra.mxu0 0.0
      %3767 = vmatprep.subr.mxu0 0.0
      %3768 = vmatpush1.msra.mxu0 0.0
      %3769 = vmatprep.subr.mxu0 0.0
      %3770 = vmatpush1.msra.mxu0 0.0
      %3771 = vmatprep.subr.mxu0 0.0
      %3772 = vmatpush1.msra.mxu0 0.0
      %3773 = vmatprep.subr.mxu0 0.0
      %3774 = vmatpush1.msra.mxu0 %v1825
      %3775 = vmatprep.subr.mxu0 0.0
      %3776 = vmatpush1.msra.mxu0 %v1820
      %3777 = vmatprep.subr.mxu0 0.0
      %3778 = vmatpush2.msra.mxu0 0.0
      %3779 = vmatprep.subr.mxu0 0.0
      %3780 = vmatpush2.msra.mxu0 0.0
      %3781 = vmatprep.subr.mxu0 0.0
      %3782 = vmatpush2.msra.mxu0 0.0
      %3783 = vmatprep.subr.mxu0 0.0
      %3784 = vmatpush2.msra.mxu0 0.0
      %3785 = vmatprep.subr.mxu0 0.0
      %3786 = vmatpush2.msra.mxu0 0.0
      %3787 = vmatprep.subr.mxu0 0.0
      %3788 = vmatpush2.msra.mxu0 0.0
      %3789 = vmatprep.subr.mxu0 0.0
      %3790 = vmatpush2.msra.mxu0 0.0
      %3791 = vmatprep.subr.mxu0 0.0
      %3792 = vmatpush2.msra.mxu0 0.0
      %3793 = vmatprep.subr.mxu0 0.0
      %3794 = vmatpush2.msra.mxu0 0.0
      %3795 = vmatprep.subr.mxu0 0.0
      %3796 = vmatpush2.msra.mxu0 0.0
      %3797 = vmatprep.subr.mxu0 0.0
      %3798 = vmatpush2.msra.mxu0 0.0
      %3799 = vmatprep.subr.mxu0 0.0
      %3800 = vmatpush2.msra.mxu0 0.0
      %3801 = vmatprep.subr.mxu0 0.0
      %3802 = vmatpush2.msra.mxu0 0.0
      %3803 = vmatprep.subr.mxu0 0.0
      %3804 = vmatpush2.msra.mxu0 0.0
      %3805 = vmatprep.subr.mxu0 0.0
      %3806 = vmatpush2.msra.mxu0 0.0
      %3807 = vmatprep.subr.mxu0 0.0
      %3808 = vmatpush2.msra.mxu0 0.0
      %3809 = vmatprep.mubr.f32.mxu0 0.0
      %3810 = vmatmul.mubr.f32.gmra.mxu0 %v3740
      %v3811 = vpop.f32.mrf.mxu0
      %v3812 = vadd.f32 0.0, %v3811
      %v3813 = vpop.f32.mrf.mxu0
      %3814 = vmatprep.mubr.f32.mxu0 0.0
      %3815 = vmatmul.mubr.f32.gmra.mxu0 %v3743
      %v3816 = vpop.f32.mrf.mxu0
      %v3817 = vadd.f32 0.0, %v3816
      %v3818 = vpop.f32.mrf.mxu0
      %3819 = vdwg.mxu0
      %v3821 = vsel %vm1341, %v3298, 0
      %v3824 = vsel %vm1341, %v3299, 0
      %3826 = vmatprep.subr.mxu0 0.0
      %3827 = vmatpush1.msra.mxu0 0.0
      %3828 = vmatprep.subr.mxu0 0.0
      %3829 = vmatpush1.msra.mxu0 0.0
      %3830 = vmatprep.subr.mxu0 0.0
      %3831 = vmatpush1.msra.mxu0 0.0
      %3832 = vmatprep.subr.mxu0 0.0
      %3833 = vmatpush1.msra.mxu0 0.0
      %3834 = vmatprep.subr.mxu0 0.0
      %3835 = vmatpush1.msra.mxu0 0.0
      %3836 = vmatprep.subr.mxu0 0.0
      %3837 = vmatpush1.msra.mxu0 0.0
      %3838 = vmatprep.subr.mxu0 0.0
      %3839 = vmatpush1.msra.mxu0 0.0
      %3840 = vmatprep.subr.mxu0 0.0
      %3841 = vmatpush1.msra.mxu0 0.0
      %3842 = vmatprep.subr.mxu0 0.0
      %3843 = vmatpush1.msra.mxu0 0.0
      %3844 = vmatprep.subr.mxu0 0.0
      %3845 = vmatpush1.msra.mxu0 0.0
      %3846 = vmatprep.subr.mxu0 0.0
      %3847 = vmatpush1.msra.mxu0 0.0
      %3848 = vmatprep.subr.mxu0 0.0
      %3849 = vmatpush1.msra.mxu0 0.0
      %3850 = vmatprep.subr.mxu0 0.0
      %3851 = vmatpush1.msra.mxu0 0.0
      %3852 = vmatprep.subr.mxu0 0.0
      %3853 = vmatpush1.msra.mxu0 0.0
      %3854 = vmatprep.subr.mxu0 0.0
      %3855 = vmatpush1.msra.mxu0 %v1906
      %3856 = vmatprep.subr.mxu0 0.0
      %3857 = vmatpush1.msra.mxu0 %v1901
      %3858 = vmatprep.subr.mxu0 0.0
      %3859 = vmatpush2.msra.mxu0 0.0
      %3860 = vmatprep.subr.mxu0 0.0
      %3861 = vmatpush2.msra.mxu0 0.0
      %3862 = vmatprep.subr.mxu0 0.0
      %3863 = vmatpush2.msra.mxu0 0.0
      %3864 = vmatprep.subr.mxu0 0.0
      %3865 = vmatpush2.msra.mxu0 0.0
      %3866 = vmatprep.subr.mxu0 0.0
      %3867 = vmatpush2.msra.mxu0 0.0
      %3868 = vmatprep.subr.mxu0 0.0
      %3869 = vmatpush2.msra.mxu0 0.0
      %3870 = vmatprep.subr.mxu0 0.0
      %3871 = vmatpush2.msra.mxu0 0.0
      %3872 = vmatprep.subr.mxu0 0.0
      %3873 = vmatpush2.msra.mxu0 0.0
      %3874 = vmatprep.subr.mxu0 0.0
      %3875 = vmatpush2.msra.mxu0 0.0
      %3876 = vmatprep.subr.mxu0 0.0
      %3877 = vmatpush2.msra.mxu0 0.0
      %3878 = vmatprep.subr.mxu0 0.0
      %3879 = vmatpush2.msra.mxu0 0.0
      %3880 = vmatprep.subr.mxu0 0.0
      %3881 = vmatpush2.msra.mxu0 0.0
      %3882 = vmatprep.subr.mxu0 0.0
      %3883 = vmatpush2.msra.mxu0 0.0
      %3884 = vmatprep.subr.mxu0 0.0
      %3885 = vmatpush2.msra.mxu0 0.0
      %3886 = vmatprep.subr.mxu0 0.0
      %3887 = vmatpush2.msra.mxu0 0.0
      %3888 = vmatprep.subr.mxu0 0.0
      %3889 = vmatpush2.msra.mxu0 0.0
      %3890 = vmatprep.mubr.f32.mxu0 0.0
      %3891 = vmatmul.mubr.f32.gmra.mxu0 %v3821
      %v3892 = vpop.f32.mrf.mxu0
      %v3893 = vadd.f32 0.0, %v3892
      %v3894 = vpop.f32.mrf.mxu0
      %3895 = vmatprep.mubr.f32.mxu0 0.0
      %3896 = vmatmul.mubr.f32.gmra.mxu0 %v3824
      %v3897 = vpop.f32.mrf.mxu0
      %v3898 = vadd.f32 0.0, %v3897
      %v3899 = vpop.f32.mrf.mxu0
      %3900 = vdwg.mxu0
      %v3902 = vsel %vm1341, %v3300, 0
      %v3905 = vsel %vm1341, %v3301, 0
      %3907 = vmatprep.subr.mxu0 0.0
      %3908 = vmatpush1.msra.mxu0 0.0
      %3909 = vmatprep.subr.mxu0 0.0
      %3910 = vmatpush1.msra.mxu0 0.0
      %3911 = vmatprep.subr.mxu0 0.0
      %3912 = vmatpush1.msra.mxu0 0.0
      %3913 = vmatprep.subr.mxu0 0.0
      %3914 = vmatpush1.msra.mxu0 0.0
      %3915 = vmatprep.subr.mxu0 0.0
      %3916 = vmatpush1.msra.mxu0 0.0
      %3917 = vmatprep.subr.mxu0 0.0
      %3918 = vmatpush1.msra.mxu0 0.0
      %3919 = vmatprep.subr.mxu0 0.0
      %3920 = vmatpush1.msra.mxu0 0.0
      %3921 = vmatprep.subr.mxu0 0.0
      %3922 = vmatpush1.msra.mxu0 0.0
      %3923 = vmatprep.subr.mxu0 0.0
      %3924 = vmatpush1.msra.mxu0 0.0
      %3925 = vmatprep.subr.mxu0 0.0
      %3926 = vmatpush1.msra.mxu0 0.0
      %3927 = vmatprep.subr.mxu0 0.0
      %3928 = vmatpush1.msra.mxu0 0.0
      %3929 = vmatprep.subr.mxu0 0.0
      %3930 = vmatpush1.msra.mxu0 0.0
      %3931 = vmatprep.subr.mxu0 0.0
      %3932 = vmatpush1.msra.mxu0 0.0
      %3933 = vmatprep.subr.mxu0 0.0
      %3934 = vmatpush1.msra.mxu0 0.0
      %3935 = vmatprep.subr.mxu0 0.0
      %3936 = vmatpush1.msra.mxu0 %v1987
      %3937 = vmatprep.subr.mxu0 0.0
      %3938 = vmatpush1.msra.mxu0 %v1982
      %3939 = vmatprep.subr.mxu0 0.0
      %3940 = vmatpush2.msra.mxu0 0.0
      %3941 = vmatprep.subr.mxu0 0.0
      %3942 = vmatpush2.msra.mxu0 0.0
      %3943 = vmatprep.subr.mxu0 0.0
      %3944 = vmatpush2.msra.mxu0 0.0
      %3945 = vmatprep.subr.mxu0 0.0
      %3946 = vmatpush2.msra.mxu0 0.0
      %3947 = vmatprep.subr.mxu0 0.0
      %3948 = vmatpush2.msra.mxu0 0.0
      %3949 = vmatprep.subr.mxu0 0.0
      %3950 = vmatpush2.msra.mxu0 0.0
      %3951 = vmatprep.subr.mxu0 0.0
      %3952 = vmatpush2.msra.mxu0 0.0
      %3953 = vmatprep.subr.mxu0 0.0
      %3954 = vmatpush2.msra.mxu0 0.0
      %3955 = vmatprep.subr.mxu0 0.0
      %3956 = vmatpush2.msra.mxu0 0.0
      %3957 = vmatprep.subr.mxu0 0.0
      %3958 = vmatpush2.msra.mxu0 0.0
      %3959 = vmatprep.subr.mxu0 0.0
      %3960 = vmatpush2.msra.mxu0 0.0
      %3961 = vmatprep.subr.mxu0 0.0
      %3962 = vmatpush2.msra.mxu0 0.0
      %3963 = vmatprep.subr.mxu0 0.0
      %3964 = vmatpush2.msra.mxu0 0.0
      %3965 = vmatprep.subr.mxu0 0.0
      %3966 = vmatpush2.msra.mxu0 0.0
      %3967 = vmatprep.subr.mxu0 0.0
      %3968 = vmatpush2.msra.mxu0 0.0
      %3969 = vmatprep.subr.mxu0 0.0
      %3970 = vmatpush2.msra.mxu0 0.0
      %3971 = vmatprep.mubr.f32.mxu0 0.0
      %3972 = vmatmul.mubr.f32.gmra.mxu0 %v3902
      %v3973 = vpop.f32.mrf.mxu0
      %v3974 = vadd.f32 0.0, %v3973
      %v3975 = vpop.f32.mrf.mxu0
      %3976 = vmatprep.mubr.f32.mxu0 0.0
      %3977 = vmatmul.mubr.f32.gmra.mxu0 %v3905
      %v3978 = vpop.f32.mrf.mxu0
      %v3979 = vadd.f32 0.0, %v3978
      %v3980 = vpop.f32.mrf.mxu0
      %3981 = vdwg.mxu0
      %v3983 = vsel %vm1341, %v3302, 0
      %v3986 = vsel %vm1341, %v3303, 0
      %3988 = vmatprep.subr.mxu0 0.0
      %3989 = vmatpush1.msra.mxu0 0.0
      %3990 = vmatprep.subr.mxu0 0.0
      %3991 = vmatpush1.msra.mxu0 0.0
      %3992 = vmatprep.subr.mxu0 0.0
      %3993 = vmatpush1.msra.mxu0 0.0
      %3994 = vmatprep.subr.mxu0 0.0
      %3995 = vmatpush1.msra.mxu0 0.0
      %3996 = vmatprep.subr.mxu0 0.0
      %3997 = vmatpush1.msra.mxu0 0.0
      %3998 = vmatprep.subr.mxu0 0.0
      %3999 = vmatpush1.msra.mxu0 0.0
      %4000 = vmatprep.subr.mxu0 0.0
      %4001 = vmatpush1.msra.mxu0 0.0
      %4002 = vmatprep.subr.mxu0 0.0
      %4003 = vmatpush1.msra.mxu0 0.0
      %4004 = vmatprep.subr.mxu0 0.0
      %4005 = vmatpush1.msra.mxu0 0.0
      %4006 = vmatprep.subr.mxu0 0.0
      %4007 = vmatpush1.msra.mxu0 0.0
      %4008 = vmatprep.subr.mxu0 0.0
      %4009 = vmatpush1.msra.mxu0 0.0
      %4010 = vmatprep.subr.mxu0 0.0
      %4011 = vmatpush1.msra.mxu0 0.0
      %4012 = vmatprep.subr.mxu0 0.0
      %4013 = vmatpush1.msra.mxu0 0.0
      %4014 = vmatprep.subr.mxu0 0.0
      %4015 = vmatpush1.msra.mxu0 0.0
      %4016 = vmatprep.subr.mxu0 0.0
      %4017 = vmatpush1.msra.mxu0 %v2068
      %4018 = vmatprep.subr.mxu0 0.0
      %4019 = vmatpush1.msra.mxu0 %v2063
      %4020 = vmatprep.subr.mxu0 0.0
      %4021 = vmatpush2.msra.mxu0 0.0
      %4022 = vmatprep.subr.mxu0 0.0
      %4023 = vmatpush2.msra.mxu0 0.0
      %4024 = vmatprep.subr.mxu0 0.0
      %4025 = vmatpush2.msra.mxu0 0.0
      %4026 = vmatprep.subr.mxu0 0.0
      %4027 = vmatpush2.msra.mxu0 0.0
      %4028 = vmatprep.subr.mxu0 0.0
      %4029 = vmatpush2.msra.mxu0 0.0
      %4030 = vmatprep.subr.mxu0 0.0
      %4031 = vmatpush2.msra.mxu0 0.0
      %4032 = vmatprep.subr.mxu0 0.0
      %4033 = vmatpush2.msra.mxu0 0.0
      %4034 = vmatprep.subr.mxu0 0.0
      %4035 = vmatpush2.msra.mxu0 0.0
      %4036 = vmatprep.subr.mxu0 0.0
      %4037 = vmatpush2.msra.mxu0 0.0
      %4038 = vmatprep.subr.mxu0 0.0
      %4039 = vmatpush2.msra.mxu0 0.0
      %4040 = vmatprep.subr.mxu0 0.0
      %4041 = vmatpush2.msra.mxu0 0.0
      %4042 = vmatprep.subr.mxu0 0.0
      %4043 = vmatpush2.msra.mxu0 0.0
      %4044 = vmatprep.subr.mxu0 0.0
      %4045 = vmatpush2.msra.mxu0 0.0
      %4046 = vmatprep.subr.mxu0 0.0
      %4047 = vmatpush2.msra.mxu0 0.0
      %4048 = vmatprep.subr.mxu0 0.0
      %4049 = vmatpush2.msra.mxu0 0.0
      %4050 = vmatprep.subr.mxu0 0.0
      %4051 = vmatpush2.msra.mxu0 0.0
      %4052 = vmatprep.mubr.f32.mxu0 0.0
      %4053 = vmatmul.mubr.f32.gmra.mxu0 %v3983
      %v4054 = vpop.f32.mrf.mxu0
      %v4055 = vadd.f32 0.0, %v4054
      %v4056 = vpop.f32.mrf.mxu0
      %4057 = vmatprep.mubr.f32.mxu0 0.0
      %4058 = vmatmul.mubr.f32.gmra.mxu0 %v3986
      %v4059 = vpop.f32.mrf.mxu0
      %v4060 = vadd.f32 0.0, %v4059
      %v4061 = vpop.f32.mrf.mxu0
      %4062 = vdwg.mxu0
      %v4064 = vsel %vm1341, %v3304, 0
      %v4067 = vsel %vm1341, %v3305, 0
      %4069 = vmatprep.subr.mxu0 0.0
      %4070 = vmatpush1.msra.mxu0 0.0
      %4071 = vmatprep.subr.mxu0 0.0
      %4072 = vmatpush1.msra.mxu0 0.0
      %4073 = vmatprep.subr.mxu0 0.0
      %4074 = vmatpush1.msra.mxu0 0.0
      %4075 = vmatprep.subr.mxu0 0.0
      %4076 = vmatpush1.msra.mxu0 0.0
      %4077 = vmatprep.subr.mxu0 0.0
      %4078 = vmatpush1.msra.mxu0 0.0
      %4079 = vmatprep.subr.mxu0 0.0
      %4080 = vmatpush1.msra.mxu0 0.0
      %4081 = vmatprep.subr.mxu0 0.0
      %4082 = vmatpush1.msra.mxu0 0.0
      %4083 = vmatprep.subr.mxu0 0.0
      %4084 = vmatpush1.msra.mxu0 0.0
      %4085 = vmatprep.subr.mxu0 0.0
      %4086 = vmatpush1.msra.mxu0 0.0
      %4087 = vmatprep.subr.mxu0 0.0
      %4088 = vmatpush1.msra.mxu0 0.0
      %4089 = vmatprep.subr.mxu0 0.0
      %4090 = vmatpush1.msra.mxu0 0.0
      %4091 = vmatprep.subr.mxu0 0.0
      %4092 = vmatpush1.msra.mxu0 0.0
      %4093 = vmatprep.subr.mxu0 0.0
      %4094 = vmatpush1.msra.mxu0 0.0
      %4095 = vmatprep.subr.mxu0 0.0
      %4096 = vmatpush1.msra.mxu0 0.0
      %4097 = vmatprep.subr.mxu0 0.0
      %4098 = vmatpush1.msra.mxu0 %v2149
      %4099 = vmatprep.subr.mxu0 0.0
      %4100 = vmatpush1.msra.mxu0 %v2144
      %4101 = vmatprep.subr.mxu0 0.0
      %4102 = vmatpush2.msra.mxu0 0.0
      %4103 = vmatprep.subr.mxu0 0.0
      %4104 = vmatpush2.msra.mxu0 0.0
      %4105 = vmatprep.subr.mxu0 0.0
      %4106 = vmatpush2.msra.mxu0 0.0
      %4107 = vmatprep.subr.mxu0 0.0
      %4108 = vmatpush2.msra.mxu0 0.0
      %4109 = vmatprep.subr.mxu0 0.0
      %4110 = vmatpush2.msra.mxu0 0.0
      %4111 = vmatprep.subr.mxu0 0.0
      %4112 = vmatpush2.msra.mxu0 0.0
      %4113 = vmatprep.subr.mxu0 0.0
      %4114 = vmatpush2.msra.mxu0 0.0
      %4115 = vmatprep.subr.mxu0 0.0
      %4116 = vmatpush2.msra.mxu0 0.0
      %4117 = vmatprep.subr.mxu0 0.0
      %4118 = vmatpush2.msra.mxu0 0.0
      %4119 = vmatprep.subr.mxu0 0.0
      %4120 = vmatpush2.msra.mxu0 0.0
      %4121 = vmatprep.subr.mxu0 0.0
      %4122 = vmatpush2.msra.mxu0 0.0
      %4123 = vmatprep.subr.mxu0 0.0
      %4124 = vmatpush2.msra.mxu0 0.0
      %4125 = vmatprep.subr.mxu0 0.0
      %4126 = vmatpush2.msra.mxu0 0.0
      %4127 = vmatprep.subr.mxu0 0.0
      %4128 = vmatpush2.msra.mxu0 0.0
      %4129 = vmatprep.subr.mxu0 0.0
      %4130 = vmatpush2.msra.mxu0 0.0
      %4131 = vmatprep.subr.mxu0 0.0
      %4132 = vmatpush2.msra.mxu0 0.0
      %4133 = vmatprep.mubr.f32.mxu0 0.0
      %4134 = vmatmul.mubr.f32.gmra.mxu0 %v4064
      %v4135 = vpop.f32.mrf.mxu0
      %v4136 = vadd.f32 0.0, %v4135
      %v4137 = vpop.f32.mrf.mxu0
      %4138 = vmatprep.mubr.f32.mxu0 0.0
      %4139 = vmatmul.mubr.f32.gmra.mxu0 %v4067
      %v4140 = vpop.f32.mrf.mxu0
      %v4141 = vadd.f32 0.0, %v4140
      %v4142 = vpop.f32.mrf.mxu0
      %4143 = vdwg.mxu0
      %v4145 = vsel %vm1341, %v3306, 0
      %v4148 = vsel %vm1341, %v3307, 0
      %4150 = vmatprep.subr.mxu0 0.0
      %4151 = vmatpush1.msra.mxu0 0.0
      %4152 = vmatprep.subr.mxu0 0.0
      %4153 = vmatpush1.msra.mxu0 0.0
      %4154 = vmatprep.subr.mxu0 0.0
      %4155 = vmatpush1.msra.mxu0 0.0
      %4156 = vmatprep.subr.mxu0 0.0
      %4157 = vmatpush1.msra.mxu0 0.0
      %4158 = vmatprep.subr.mxu0 0.0
      %4159 = vmatpush1.msra.mxu0 0.0
      %4160 = vmatprep.subr.mxu0 0.0
      %4161 = vmatpush1.msra.mxu0 0.0
      %4162 = vmatprep.subr.mxu0 0.0
      %4163 = vmatpush1.msra.mxu0 0.0
      %4164 = vmatprep.subr.mxu0 0.0
      %4165 = vmatpush1.msra.mxu0 0.0
      %4166 = vmatprep.subr.mxu0 0.0
      %4167 = vmatpush1.msra.mxu0 0.0
      %4168 = vmatprep.subr.mxu0 0.0
      %4169 = vmatpush1.msra.mxu0 0.0
      %4170 = vmatprep.subr.mxu0 0.0
      %4171 = vmatpush1.msra.mxu0 0.0
      %4172 = vmatprep.subr.mxu0 0.0
      %4173 = vmatpush1.msra.mxu0 0.0
      %4174 = vmatprep.subr.mxu0 0.0
      %4175 = vmatpush1.msra.mxu0 0.0
      %4176 = vmatprep.subr.mxu0 0.0
      %4177 = vmatpush1.msra.mxu0 0.0
      %4178 = vmatprep.subr.mxu0 0.0
      %4179 = vmatpush1.msra.mxu0 %v2230
      %4180 = vmatprep.subr.mxu0 0.0
      %4181 = vmatpush1.msra.mxu0 %v2225
      %4182 = vmatprep.subr.mxu0 0.0
      %4183 = vmatpush2.msra.mxu0 0.0
      %4184 = vmatprep.subr.mxu0 0.0
      %4185 = vmatpush2.msra.mxu0 0.0
      %4186 = vmatprep.subr.mxu0 0.0
      %4187 = vmatpush2.msra.mxu0 0.0
      %4188 = vmatprep.subr.mxu0 0.0
      %4189 = vmatpush2.msra.mxu0 0.0
      %4190 = vmatprep.subr.mxu0 0.0
      %4191 = vmatpush2.msra.mxu0 0.0
      %4192 = vmatprep.subr.mxu0 0.0
      %4193 = vmatpush2.msra.mxu0 0.0
      %4194 = vmatprep.subr.mxu0 0.0
      %4195 = vmatpush2.msra.mxu0 0.0
      %4196 = vmatprep.subr.mxu0 0.0
      %4197 = vmatpush2.msra.mxu0 0.0
      %4198 = vmatprep.subr.mxu0 0.0
      %4199 = vmatpush2.msra.mxu0 0.0
      %4200 = vmatprep.subr.mxu0 0.0
      %4201 = vmatpush2.msra.mxu0 0.0
      %4202 = vmatprep.subr.mxu0 0.0
      %4203 = vmatpush2.msra.mxu0 0.0
      %4204 = vmatprep.subr.mxu0 0.0
      %4205 = vmatpush2.msra.mxu0 0.0
      %4206 = vmatprep.subr.mxu0 0.0
      %4207 = vmatpush2.msra.mxu0 0.0
      %4208 = vmatprep.subr.mxu0 0.0
      %4209 = vmatpush2.msra.mxu0 0.0
      %4210 = vmatprep.subr.mxu0 0.0
      %4211 = vmatpush2.msra.mxu0 0.0
      %4212 = vmatprep.subr.mxu0 0.0
      %4213 = vmatpush2.msra.mxu0 0.0
      %4214 = vmatprep.mubr.f32.mxu0 0.0
      %4215 = vmatmul.mubr.f32.gmra.mxu0 %v4145
      %v4216 = vpop.f32.mrf.mxu0
      %v4217 = vadd.f32 0.0, %v4216
      %v4218 = vpop.f32.mrf.mxu0
      %4219 = vmatprep.mubr.f32.mxu0 0.0
      %4220 = vmatmul.mubr.f32.gmra.mxu0 %v4148
      %v4221 = vpop.f32.mrf.mxu0
      %v4222 = vadd.f32 0.0, %v4221
      %v4223 = vpop.f32.mrf.mxu0
      %4224 = vdwg.mxu0
      %v4226 = vsel %vm1341, %v3308, 0
      %v4229 = vsel %vm1341, %v3309, 0
      %4231 = vmatprep.subr.mxu0 0.0
      %4232 = vmatpush1.msra.mxu0 0.0
      %4233 = vmatprep.subr.mxu0 0.0
      %4234 = vmatpush1.msra.mxu0 0.0
      %4235 = vmatprep.subr.mxu0 0.0
      %4236 = vmatpush1.msra.mxu0 0.0
      %4237 = vmatprep.subr.mxu0 0.0
      %4238 = vmatpush1.msra.mxu0 0.0
      %4239 = vmatprep.subr.mxu0 0.0
      %4240 = vmatpush1.msra.mxu0 0.0
      %4241 = vmatprep.subr.mxu0 0.0
      %4242 = vmatpush1.msra.mxu0 0.0
      %4243 = vmatprep.subr.mxu0 0.0
      %4244 = vmatpush1.msra.mxu0 0.0
      %4245 = vmatprep.subr.mxu0 0.0
      %4246 = vmatpush1.msra.mxu0 0.0
      %4247 = vmatprep.subr.mxu0 0.0
      %4248 = vmatpush1.msra.mxu0 0.0
      %4249 = vmatprep.subr.mxu0 0.0
      %4250 = vmatpush1.msra.mxu0 0.0
      %4251 = vmatprep.subr.mxu0 0.0
      %4252 = vmatpush1.msra.mxu0 0.0
      %4253 = vmatprep.subr.mxu0 0.0
      %4254 = vmatpush1.msra.mxu0 0.0
      %4255 = vmatprep.subr.mxu0 0.0
      %4256 = vmatpush1.msra.mxu0 0.0
      %4257 = vmatprep.subr.mxu0 0.0
      %4258 = vmatpush1.msra.mxu0 0.0
      %4259 = vmatprep.subr.mxu0 0.0
      %4260 = vmatpush1.msra.mxu0 %v2311
      %4261 = vmatprep.subr.mxu0 0.0
      %4262 = vmatpush1.msra.mxu0 %v2306
      %4263 = vmatprep.subr.mxu0 0.0
      %4264 = vmatpush2.msra.mxu0 0.0
      %4265 = vmatprep.subr.mxu0 0.0
      %4266 = vmatpush2.msra.mxu0 0.0
      %4267 = vmatprep.subr.mxu0 0.0
      %4268 = vmatpush2.msra.mxu0 0.0
      %4269 = vmatprep.subr.mxu0 0.0
      %4270 = vmatpush2.msra.mxu0 0.0
      %4271 = vmatprep.subr.mxu0 0.0
      %4272 = vmatpush2.msra.mxu0 0.0
      %4273 = vmatprep.subr.mxu0 0.0
      %4274 = vmatpush2.msra.mxu0 0.0
      %4275 = vmatprep.subr.mxu0 0.0
      %4276 = vmatpush2.msra.mxu0 0.0
      %4277 = vmatprep.subr.mxu0 0.0
      %4278 = vmatpush2.msra.mxu0 0.0
      %4279 = vmatprep.subr.mxu0 0.0
      %4280 = vmatpush2.msra.mxu0 0.0
      %4281 = vmatprep.subr.mxu0 0.0
      %4282 = vmatpush2.msra.mxu0 0.0
      %4283 = vmatprep.subr.mxu0 0.0
      %4284 = vmatpush2.msra.mxu0 0.0
      %4285 = vmatprep.subr.mxu0 0.0
      %4286 = vmatpush2.msra.mxu0 0.0
      %4287 = vmatprep.subr.mxu0 0.0
      %4288 = vmatpush2.msra.mxu0 0.0
      %4289 = vmatprep.subr.mxu0 0.0
      %4290 = vmatpush2.msra.mxu0 0.0
      %4291 = vmatprep.subr.mxu0 0.0
      %4292 = vmatpush2.msra.mxu0 0.0
      %4293 = vmatprep.subr.mxu0 0.0
      %4294 = vmatpush2.msra.mxu0 0.0
      %4295 = vmatprep.mubr.f32.mxu0 0.0
      %4296 = vmatmul.mubr.f32.gmra.mxu0 %v4226
      %v4297 = vpop.f32.mrf.mxu0
      %v4298 = vadd.f32 0.0, %v4297
      %v4299 = vpop.f32.mrf.mxu0
      %4300 = vmatprep.mubr.f32.mxu0 0.0
      %4301 = vmatmul.mubr.f32.gmra.mxu0 %v4229
      %v4302 = vpop.f32.mrf.mxu0
      %v4303 = vadd.f32 0.0, %v4302
      %v4304 = vpop.f32.mrf.mxu0
      %4305 = vdwg.mxu0
      %v4307 = vsel %vm1341, %v3310, 0
      %v4310 = vsel %vm1341, %v3311, 0
      %4312 = vmatprep.subr.mxu0 0.0
      %4313 = vmatpush1.msra.mxu0 0.0
      %4314 = vmatprep.subr.mxu0 0.0
      %4315 = vmatpush1.msra.mxu0 0.0
      %4316 = vmatprep.subr.mxu0 0.0
      %4317 = vmatpush1.msra.mxu0 0.0
      %4318 = vmatprep.subr.mxu0 0.0
      %4319 = vmatpush1.msra.mxu0 0.0
      %4320 = vmatprep.subr.mxu0 0.0
      %4321 = vmatpush1.msra.mxu0 0.0
      %4322 = vmatprep.subr.mxu0 0.0
      %4323 = vmatpush1.msra.mxu0 0.0
      %4324 = vmatprep.subr.mxu0 0.0
      %4325 = vmatpush1.msra.mxu0 0.0
      %4326 = vmatprep.subr.mxu0 0.0
      %4327 = vmatpush1.msra.mxu0 0.0
      %4328 = vmatprep.subr.mxu0 0.0
      %4329 = vmatpush1.msra.mxu0 0.0
      %4330 = vmatprep.subr.mxu0 0.0
      %4331 = vmatpush1.msra.mxu0 0.0
      %4332 = vmatprep.subr.mxu0 0.0
      %4333 = vmatpush1.msra.mxu0 0.0
      %4334 = vmatprep.subr.mxu0 0.0
      %4335 = vmatpush1.msra.mxu0 0.0
      %4336 = vmatprep.subr.mxu0 0.0
      %4337 = vmatpush1.msra.mxu0 0.0
      %4338 = vmatprep.subr.mxu0 0.0
      %4339 = vmatpush1.msra.mxu0 0.0
      %4340 = vmatprep.subr.mxu0 0.0
      %4341 = vmatpush1.msra.mxu0 %v2392
      %4342 = vmatprep.subr.mxu0 0.0
      %4343 = vmatpush1.msra.mxu0 %v2387
      %4344 = vmatprep.subr.mxu0 0.0
      %4345 = vmatpush2.msra.mxu0 0.0
      %4346 = vmatprep.subr.mxu0 0.0
      %4347 = vmatpush2.msra.mxu0 0.0
      %4348 = vmatprep.subr.mxu0 0.0
      %4349 = vmatpush2.msra.mxu0 0.0
      %4350 = vmatprep.subr.mxu0 0.0
      %4351 = vmatpush2.msra.mxu0 0.0
      %4352 = vmatprep.subr.mxu0 0.0
      %4353 = vmatpush2.msra.mxu0 0.0
      %4354 = vmatprep.subr.mxu0 0.0
      %4355 = vmatpush2.msra.mxu0 0.0
      %4356 = vmatprep.subr.mxu0 0.0
      %4357 = vmatpush2.msra.mxu0 0.0
      %4358 = vmatprep.subr.mxu0 0.0
      %4359 = vmatpush2.msra.mxu0 0.0
      %4360 = vmatprep.subr.mxu0 0.0
      %4361 = vmatpush2.msra.mxu0 0.0
      %4362 = vmatprep.subr.mxu0 0.0
      %4363 = vmatpush2.msra.mxu0 0.0
      %4364 = vmatprep.subr.mxu0 0.0
      %4365 = vmatpush2.msra.mxu0 0.0
      %4366 = vmatprep.subr.mxu0 0.0
      %4367 = vmatpush2.msra.mxu0 0.0
      %4368 = vmatprep.subr.mxu0 0.0
      %4369 = vmatpush2.msra.mxu0 0.0
      %4370 = vmatprep.subr.mxu0 0.0
      %4371 = vmatpush2.msra.mxu0 0.0
      %4372 = vmatprep.subr.mxu0 0.0
      %4373 = vmatpush2.msra.mxu0 0.0
      %4374 = vmatprep.subr.mxu0 0.0
      %4375 = vmatpush2.msra.mxu0 0.0
      %4376 = vmatprep.mubr.f32.mxu0 0.0
      %4377 = vmatmul.mubr.f32.gmra.mxu0 %v4307
      %v4378 = vpop.f32.mrf.mxu0
      %v4379 = vadd.f32 0.0, %v4378
      %v4380 = vpop.f32.mrf.mxu0
      %4381 = vmatprep.mubr.f32.mxu0 0.0
      %4382 = vmatmul.mubr.f32.gmra.mxu0 %v4310
      %v4383 = vpop.f32.mrf.mxu0
      %v4384 = vadd.f32 0.0, %v4383
      %v4385 = vpop.f32.mrf.mxu0
      %4386 = vdwg.mxu0
      %v4388 = vsel %vm1341, %v3312, 0
      %v4391 = vsel %vm1341, %v3313, 0
      %4393 = vmatprep.subr.mxu0 0.0
      %4394 = vmatpush1.msra.mxu0 0.0
      %4395 = vmatprep.subr.mxu0 0.0
      %4396 = vmatpush1.msra.mxu0 0.0
      %4397 = vmatprep.subr.mxu0 0.0
      %4398 = vmatpush1.msra.mxu0 0.0
      %4399 = vmatprep.subr.mxu0 0.0
      %4400 = vmatpush1.msra.mxu0 0.0
      %4401 = vmatprep.subr.mxu0 0.0
      %4402 = vmatpush1.msra.mxu0 0.0
      %4403 = vmatprep.subr.mxu0 0.0
      %4404 = vmatpush1.msra.mxu0 0.0
      %4405 = vmatprep.subr.mxu0 0.0
      %4406 = vmatpush1.msra.mxu0 0.0
      %4407 = vmatprep.subr.mxu0 0.0
      %4408 = vmatpush1.msra.mxu0 0.0
      %4409 = vmatprep.subr.mxu0 0.0
      %4410 = vmatpush1.msra.mxu0 0.0
      %4411 = vmatprep.subr.mxu0 0.0
      %4412 = vmatpush1.msra.mxu0 0.0
      %4413 = vmatprep.subr.mxu0 0.0
      %4414 = vmatpush1.msra.mxu0 0.0
      %4415 = vmatprep.subr.mxu0 0.0
      %4416 = vmatpush1.msra.mxu0 0.0
      %4417 = vmatprep.subr.mxu0 0.0
      %4418 = vmatpush1.msra.mxu0 0.0
      %4419 = vmatprep.subr.mxu0 0.0
      %4420 = vmatpush1.msra.mxu0 0.0
      %4421 = vmatprep.subr.mxu0 0.0
      %4422 = vmatpush1.msra.mxu0 %v2473
      %4423 = vmatprep.subr.mxu0 0.0
      %4424 = vmatpush1.msra.mxu0 %v2468
      %4425 = vmatprep.subr.mxu0 0.0
      %4426 = vmatpush2.msra.mxu0 0.0
      %4427 = vmatprep.subr.mxu0 0.0
      %4428 = vmatpush2.msra.mxu0 0.0
      %4429 = vmatprep.subr.mxu0 0.0
      %4430 = vmatpush2.msra.mxu0 0.0
      %4431 = vmatprep.subr.mxu0 0.0
      %4432 = vmatpush2.msra.mxu0 0.0
      %4433 = vmatprep.subr.mxu0 0.0
      %4434 = vmatpush2.msra.mxu0 0.0
      %4435 = vmatprep.subr.mxu0 0.0
      %4436 = vmatpush2.msra.mxu0 0.0
      %4437 = vmatprep.subr.mxu0 0.0
      %4438 = vmatpush2.msra.mxu0 0.0
      %4439 = vmatprep.subr.mxu0 0.0
      %4440 = vmatpush2.msra.mxu0 0.0
      %4441 = vmatprep.subr.mxu0 0.0
      %4442 = vmatpush2.msra.mxu0 0.0
      %4443 = vmatprep.subr.mxu0 0.0
      %4444 = vmatpush2.msra.mxu0 0.0
      %4445 = vmatprep.subr.mxu0 0.0
      %4446 = vmatpush2.msra.mxu0 0.0
      %4447 = vmatprep.subr.mxu0 0.0
      %4448 = vmatpush2.msra.mxu0 0.0
      %4449 = vmatprep.subr.mxu0 0.0
      %4450 = vmatpush2.msra.mxu0 0.0
      %4451 = vmatprep.subr.mxu0 0.0
      %4452 = vmatpush2.msra.mxu0 0.0
      %4453 = vmatprep.subr.mxu0 0.0
      %4454 = vmatpush2.msra.mxu0 0.0
      %4455 = vmatprep.subr.mxu0 0.0
      %4456 = vmatpush2.msra.mxu0 0.0
      %4457 = vmatprep.mubr.f32.mxu0 0.0
      %4458 = vmatmul.mubr.f32.gmra.mxu0 %v4388
      %v4459 = vpop.f32.mrf.mxu0
      %v4460 = vadd.f32 0.0, %v4459
      %v4461 = vpop.f32.mrf.mxu0
      %4462 = vmatprep.mubr.f32.mxu0 0.0
      %4463 = vmatmul.mubr.f32.gmra.mxu0 %v4391
      %v4464 = vpop.f32.mrf.mxu0
      %v4465 = vadd.f32 0.0, %v4464
      %v4466 = vpop.f32.mrf.mxu0
      %4467 = vdwg.mxu0
      %v4469 = vsel %vm1341, %v3314, 0
      %v4472 = vsel %vm1341, %v3315, 0
      %4474 = vmatprep.subr.mxu0 0.0
      %4475 = vmatpush1.msra.mxu0 0.0
      %4476 = vmatprep.subr.mxu0 0.0
      %4477 = vmatpush1.msra.mxu0 0.0
      %4478 = vmatprep.subr.mxu0 0.0
      %4479 = vmatpush1.msra.mxu0 0.0
      %4480 = vmatprep.subr.mxu0 0.0
      %4481 = vmatpush1.msra.mxu0 0.0
      %4482 = vmatprep.subr.mxu0 0.0
      %4483 = vmatpush1.msra.mxu0 0.0
      %4484 = vmatprep.subr.mxu0 0.0
      %4485 = vmatpush1.msra.mxu0 0.0
      %4486 = vmatprep.subr.mxu0 0.0
      %4487 = vmatpush1.msra.mxu0 0.0
      %4488 = vmatprep.subr.mxu0 0.0
      %4489 = vmatpush1.msra.mxu0 0.0
      %4490 = vmatprep.subr.mxu0 0.0
      %4491 = vmatpush1.msra.mxu0 0.0
      %4492 = vmatprep.subr.mxu0 0.0
      %4493 = vmatpush1.msra.mxu0 0.0
      %4494 = vmatprep.subr.mxu0 0.0
      %4495 = vmatpush1.msra.mxu0 0.0
      %4496 = vmatprep.subr.mxu0 0.0
      %4497 = vmatpush1.msra.mxu0 0.0
      %4498 = vmatprep.subr.mxu0 0.0
      %4499 = vmatpush1.msra.mxu0 0.0
      %4500 = vmatprep.subr.mxu0 0.0
      %4501 = vmatpush1.msra.mxu0 0.0
      %4502 = vmatprep.subr.mxu0 0.0
      %4503 = vmatpush1.msra.mxu0 %v2554
      %4504 = vmatprep.subr.mxu0 0.0
      %4505 = vmatpush1.msra.mxu0 %v2549
      %4506 = vmatprep.subr.mxu0 0.0
      %4507 = vmatpush2.msra.mxu0 0.0
      %4508 = vmatprep.subr.mxu0 0.0
      %4509 = vmatpush2.msra.mxu0 0.0
      %4510 = vmatprep.subr.mxu0 0.0
      %4511 = vmatpush2.msra.mxu0 0.0
      %4512 = vmatprep.subr.mxu0 0.0
      %4513 = vmatpush2.msra.mxu0 0.0
      %4514 = vmatprep.subr.mxu0 0.0
      %4515 = vmatpush2.msra.mxu0 0.0
      %4516 = vmatprep.subr.mxu0 0.0
      %4517 = vmatpush2.msra.mxu0 0.0
      %4518 = vmatprep.subr.mxu0 0.0
      %4519 = vmatpush2.msra.mxu0 0.0
      %4520 = vmatprep.subr.mxu0 0.0
      %4521 = vmatpush2.msra.mxu0 0.0
      %4522 = vmatprep.subr.mxu0 0.0
      %4523 = vmatpush2.msra.mxu0 0.0
      %4524 = vmatprep.subr.mxu0 0.0
      %4525 = vmatpush2.msra.mxu0 0.0
      %4526 = vmatprep.subr.mxu0 0.0
      %4527 = vmatpush2.msra.mxu0 0.0
      %4528 = vmatprep.subr.mxu0 0.0
      %4529 = vmatpush2.msra.mxu0 0.0
      %4530 = vmatprep.subr.mxu0 0.0
      %4531 = vmatpush2.msra.mxu0 0.0
      %4532 = vmatprep.subr.mxu0 0.0
      %4533 = vmatpush2.msra.mxu0 0.0
      %4534 = vmatprep.subr.mxu0 0.0
      %4535 = vmatpush2.msra.mxu0 0.0
      %4536 = vmatprep.subr.mxu0 0.0
      %4537 = vmatpush2.msra.mxu0 0.0
      %4538 = vmatprep.mubr.f32.mxu0 0.0
      %4539 = vmatmul.mubr.f32.gmra.mxu0 %v4469
      %v4540 = vpop.f32.mrf.mxu0
      %v4541 = vadd.f32 0.0, %v4540
      %v4542 = vpop.f32.mrf.mxu0
      %4543 = vmatprep.mubr.f32.mxu0 0.0
      %4544 = vmatmul.mubr.f32.gmra.mxu0 %v4472
      %v4545 = vpop.f32.mrf.mxu0
      %v4546 = vadd.f32 0.0, %v4545
      %v4547 = vpop.f32.mrf.mxu0
      %4548 = vdwg.mxu0
      %v4550 = vsel %vm1341, %v3316, 0
      %v4553 = vsel %vm1341, %v3317, 0
      %4555 = vmatprep.subr.mxu0 0.0
      %4556 = vmatpush1.msra.mxu0 0.0
      %4557 = vmatprep.subr.mxu0 0.0
      %4558 = vmatpush1.msra.mxu0 0.0
      %4559 = vmatprep.subr.mxu0 0.0
      %4560 = vmatpush1.msra.mxu0 0.0
      %4561 = vmatprep.subr.mxu0 0.0
      %4562 = vmatpush1.msra.mxu0 0.0
      %4563 = vmatprep.subr.mxu0 0.0
      %4564 = vmatpush1.msra.mxu0 0.0
      %4565 = vmatprep.subr.mxu0 0.0
      %4566 = vmatpush1.msra.mxu0 0.0
      %4567 = vmatprep.subr.mxu0 0.0
      %4568 = vmatpush1.msra.mxu0 0.0
      %4569 = vmatprep.subr.mxu0 0.0
      %4570 = vmatpush1.msra.mxu0 0.0
      %4571 = vmatprep.subr.mxu0 0.0
      %4572 = vmatpush1.msra.mxu0 0.0
      %4573 = vmatprep.subr.mxu0 0.0
      %4574 = vmatpush1.msra.mxu0 0.0
      %4575 = vmatprep.subr.mxu0 0.0
      %4576 = vmatpush1.msra.mxu0 0.0
      %4577 = vmatprep.subr.mxu0 0.0
      %4578 = vmatpush1.msra.mxu0 0.0
      %4579 = vmatprep.subr.mxu0 0.0
      %4580 = vmatpush1.msra.mxu0 0.0
      %4581 = vmatprep.subr.mxu0 0.0
      %4582 = vmatpush1.msra.mxu0 0.0
      %4583 = vmatprep.subr.mxu0 0.0
      %4584 = vmatpush1.msra.mxu0 %v2635
      %4585 = vmatprep.subr.mxu0 0.0
      %4586 = vmatpush1.msra.mxu0 %v2630
      %4587 = vmatprep.subr.mxu0 0.0
      %4588 = vmatpush2.msra.mxu0 0.0
      %4589 = vmatprep.subr.mxu0 0.0
      %4590 = vmatpush2.msra.mxu0 0.0
      %4591 = vmatprep.subr.mxu0 0.0
      %4592 = vmatpush2.msra.mxu0 0.0
      %4593 = vmatprep.subr.mxu0 0.0
      %4594 = vmatpush2.msra.mxu0 0.0
      %4595 = vmatprep.subr.mxu0 0.0
      %4596 = vmatpush2.msra.mxu0 0.0
      %4597 = vmatprep.subr.mxu0 0.0
      %4598 = vmatpush2.msra.mxu0 0.0
      %4599 = vmatprep.subr.mxu0 0.0
      %4600 = vmatpush2.msra.mxu0 0.0
      %4601 = vmatprep.subr.mxu0 0.0
      %4602 = vmatpush2.msra.mxu0 0.0
      %4603 = vmatprep.subr.mxu0 0.0
      %4604 = vmatpush2.msra.mxu0 0.0
      %4605 = vmatprep.subr.mxu0 0.0
      %4606 = vmatpush2.msra.mxu0 0.0
      %4607 = vmatprep.subr.mxu0 0.0
      %4608 = vmatpush2.msra.mxu0 0.0
      %4609 = vmatprep.subr.mxu0 0.0
      %4610 = vmatpush2.msra.mxu0 0.0
      %4611 = vmatprep.subr.mxu0 0.0
      %4612 = vmatpush2.msra.mxu0 0.0
      %4613 = vmatprep.subr.mxu0 0.0
      %4614 = vmatpush2.msra.mxu0 0.0
      %4615 = vmatprep.subr.mxu0 0.0
      %4616 = vmatpush2.msra.mxu0 0.0
      %4617 = vmatprep.subr.mxu0 0.0
      %4618 = vmatpush2.msra.mxu0 0.0
      %4619 = vmatprep.mubr.f32.mxu0 0.0
      %4620 = vmatmul.mubr.f32.gmra.mxu0 %v4550
      %v4621 = vpop.f32.mrf.mxu0
      %v4622 = vadd.f32 0.0, %v4621
      %v4623 = vpop.f32.mrf.mxu0
      %4624 = vmatprep.mubr.f32.mxu0 0.0
      %4625 = vmatmul.mubr.f32.gmra.mxu0 %v4553
      %v4626 = vpop.f32.mrf.mxu0
      %v4627 = vadd.f32 0.0, %v4626
      %v4628 = vpop.f32.mrf.mxu0
      %4629 = vdwg.mxu0
      %v4631 = vsel %vm1341, %v3318, 0
      %v4634 = vsel %vm1341, %v3319, 0
      %4636 = vmatprep.subr.mxu0 0.0
      %4637 = vmatpush1.msra.mxu0 0.0
      %4638 = vmatprep.subr.mxu0 0.0
      %4639 = vmatpush1.msra.mxu0 0.0
      %4640 = vmatprep.subr.mxu0 0.0
      %4641 = vmatpush1.msra.mxu0 0.0
      %4642 = vmatprep.subr.mxu0 0.0
      %4643 = vmatpush1.msra.mxu0 0.0
      %4644 = vmatprep.subr.mxu0 0.0
      %4645 = vmatpush1.msra.mxu0 0.0
      %4646 = vmatprep.subr.mxu0 0.0
      %4647 = vmatpush1.msra.mxu0 0.0
      %4648 = vmatprep.subr.mxu0 0.0
      %4649 = vmatpush1.msra.mxu0 0.0
      %4650 = vmatprep.subr.mxu0 0.0
      %4651 = vmatpush1.msra.mxu0 0.0
      %4652 = vmatprep.subr.mxu0 0.0
      %4653 = vmatpush1.msra.mxu0 0.0
      %4654 = vmatprep.subr.mxu0 0.0
      %4655 = vmatpush1.msra.mxu0 0.0
      %4656 = vmatprep.subr.mxu0 0.0
      %4657 = vmatpush1.msra.mxu0 0.0
      %4658 = vmatprep.subr.mxu0 0.0
      %4659 = vmatpush1.msra.mxu0 0.0
      %4660 = vmatprep.subr.mxu0 0.0
      %4661 = vmatpush1.msra.mxu0 0.0
      %4662 = vmatprep.subr.mxu0 0.0
      %4663 = vmatpush1.msra.mxu0 0.0
      %4664 = vmatprep.subr.mxu0 0.0
      %4665 = vmatpush1.msra.mxu0 %v2716
      %4666 = vmatprep.subr.mxu0 0.0
      %4667 = vmatpush1.msra.mxu0 %v2711
      %4668 = vmatprep.subr.mxu0 0.0
      %4669 = vmatpush2.msra.mxu0 0.0
      %4670 = vmatprep.subr.mxu0 0.0
      %4671 = vmatpush2.msra.mxu0 0.0
      %4672 = vmatprep.subr.mxu0 0.0
      %4673 = vmatpush2.msra.mxu0 0.0
      %4674 = vmatprep.subr.mxu0 0.0
      %4675 = vmatpush2.msra.mxu0 0.0
      %4676 = vmatprep.subr.mxu0 0.0
      %4677 = vmatpush2.msra.mxu0 0.0
      %4678 = vmatprep.subr.mxu0 0.0
      %4679 = vmatpush2.msra.mxu0 0.0
      %4680 = vmatprep.subr.mxu0 0.0
      %4681 = vmatpush2.msra.mxu0 0.0
      %4682 = vmatprep.subr.mxu0 0.0
      %4683 = vmatpush2.msra.mxu0 0.0
      %4684 = vmatprep.subr.mxu0 0.0
      %4685 = vmatpush2.msra.mxu0 0.0
      %4686 = vmatprep.subr.mxu0 0.0
      %4687 = vmatpush2.msra.mxu0 0.0
      %4688 = vmatprep.subr.mxu0 0.0
      %4689 = vmatpush2.msra.mxu0 0.0
      %4690 = vmatprep.subr.mxu0 0.0
      %4691 = vmatpush2.msra.mxu0 0.0
      %4692 = vmatprep.subr.mxu0 0.0
      %4693 = vmatpush2.msra.mxu0 0.0
      %4694 = vmatprep.subr.mxu0 0.0
      %4695 = vmatpush2.msra.mxu0 0.0
      %4696 = vmatprep.subr.mxu0 0.0
      %4697 = vmatpush2.msra.mxu0 0.0
      %4698 = vmatprep.subr.mxu0 0.0
      %4699 = vmatpush2.msra.mxu0 0.0
      %4700 = vmatprep.mubr.f32.mxu0 0.0
      %4701 = vmatmul.mubr.f32.gmra.mxu0 %v4631
      %v4702 = vpop.f32.mrf.mxu0
      %v4703 = vadd.f32 0.0, %v4702
      %v4704 = vpop.f32.mrf.mxu0
      %4705 = vmatprep.mubr.f32.mxu0 0.0
      %4706 = vmatmul.mubr.f32.gmra.mxu0 %v4634
      %v4707 = vpop.f32.mrf.mxu0
      %v4708 = vadd.f32 0.0, %v4707
      %v4709 = vpop.f32.mrf.mxu0
      %4710 = vdwg.mxu0
      %v4712 = vsel %vm1341, %v3320, 0
      %v4715 = vsel %vm1341, %v3321, 0
      %4717 = vmatprep.subr.mxu0 0.0
      %4718 = vmatpush1.msra.mxu0 0.0
      %4719 = vmatprep.subr.mxu0 0.0
      %4720 = vmatpush1.msra.mxu0 0.0
      %4721 = vmatprep.subr.mxu0 0.0
      %4722 = vmatpush1.msra.mxu0 0.0
      %4723 = vmatprep.subr.mxu0 0.0
      %4724 = vmatpush1.msra.mxu0 0.0
      %4725 = vmatprep.subr.mxu0 0.0
      %4726 = vmatpush1.msra.mxu0 0.0
      %4727 = vmatprep.subr.mxu0 0.0
      %4728 = vmatpush1.msra.mxu0 0.0
      %4729 = vmatprep.subr.mxu0 0.0
      %4730 = vmatpush1.msra.mxu0 0.0
      %4731 = vmatprep.subr.mxu0 0.0
      %4732 = vmatpush1.msra.mxu0 0.0
      %4733 = vmatprep.subr.mxu0 0.0
      %4734 = vmatpush1.msra.mxu0 0.0
      %4735 = vmatprep.subr.mxu0 0.0
      %4736 = vmatpush1.msra.mxu0 0.0
      %4737 = vmatprep.subr.mxu0 0.0
      %4738 = vmatpush1.msra.mxu0 0.0
      %4739 = vmatprep.subr.mxu0 0.0
      %4740 = vmatpush1.msra.mxu0 0.0
      %4741 = vmatprep.subr.mxu0 0.0
      %4742 = vmatpush1.msra.mxu0 0.0
      %4743 = vmatprep.subr.mxu0 0.0
      %4744 = vmatpush1.msra.mxu0 0.0
      %4745 = vmatprep.subr.mxu0 0.0
      %4746 = vmatpush1.msra.mxu0 %v2797
      %4747 = vmatprep.subr.mxu0 0.0
      %4748 = vmatpush1.msra.mxu0 %v2792
      %4749 = vmatprep.subr.mxu0 0.0
      %4750 = vmatpush2.msra.mxu0 0.0
      %4751 = vmatprep.subr.mxu0 0.0
      %4752 = vmatpush2.msra.mxu0 0.0
      %4753 = vmatprep.subr.mxu0 0.0
      %4754 = vmatpush2.msra.mxu0 0.0
      %4755 = vmatprep.subr.mxu0 0.0
      %4756 = vmatpush2.msra.mxu0 0.0
      %4757 = vmatprep.subr.mxu0 0.0
      %4758 = vmatpush2.msra.mxu0 0.0
      %4759 = vmatprep.subr.mxu0 0.0
      %4760 = vmatpush2.msra.mxu0 0.0
      %4761 = vmatprep.subr.mxu0 0.0
      %4762 = vmatpush2.msra.mxu0 0.0
      %4763 = vmatprep.subr.mxu0 0.0
      %4764 = vmatpush2.msra.mxu0 0.0
      %4765 = vmatprep.subr.mxu0 0.0
      %4766 = vmatpush2.msra.mxu0 0.0
      %4767 = vmatprep.subr.mxu0 0.0
      %4768 = vmatpush2.msra.mxu0 0.0
      %4769 = vmatprep.subr.mxu0 0.0
      %4770 = vmatpush2.msra.mxu0 0.0
      %4771 = vmatprep.subr.mxu0 0.0
      %4772 = vmatpush2.msra.mxu0 0.0
      %4773 = vmatprep.subr.mxu0 0.0
      %4774 = vmatpush2.msra.mxu0 0.0
      %4775 = vmatprep.subr.mxu0 0.0
      %4776 = vmatpush2.msra.mxu0 0.0
      %4777 = vmatprep.subr.mxu0 0.0
      %4778 = vmatpush2.msra.mxu0 0.0
      %4779 = vmatprep.subr.mxu0 0.0
      %4780 = vmatpush2.msra.mxu0 0.0
      %4781 = vmatprep.mubr.f32.mxu0 0.0
      %4782 = vmatmul.mubr.f32.gmra.mxu0 %v4712
      %v4783 = vpop.f32.mrf.mxu0
      %v4784 = vadd.f32 0.0, %v4783
      %v4785 = vpop.f32.mrf.mxu0
      %4786 = vmatprep.mubr.f32.mxu0 0.0
      %4787 = vmatmul.mubr.f32.gmra.mxu0 %v4715
      %v4788 = vpop.f32.mrf.mxu0
      %v4789 = vadd.f32 0.0, %v4788
      %v4790 = vpop.f32.mrf.mxu0
      %4791 = vdwg.mxu0
      %v4793 = vsel %vm1341, %v3322, 0
      %v4796 = vsel %vm1341, %v3323, 0
      %4798 = vmatprep.subr.mxu0 0.0
      %4799 = vmatpush1.msra.mxu0 0.0
      %4800 = vmatprep.subr.mxu0 0.0
      %4801 = vmatpush1.msra.mxu0 0.0
      %4802 = vmatprep.subr.mxu0 0.0
      %4803 = vmatpush1.msra.mxu0 0.0
      %4804 = vmatprep.subr.mxu0 0.0
      %4805 = vmatpush1.msra.mxu0 0.0
      %4806 = vmatprep.subr.mxu0 0.0
      %4807 = vmatpush1.msra.mxu0 0.0
      %4808 = vmatprep.subr.mxu0 0.0
      %4809 = vmatpush1.msra.mxu0 0.0
      %4810 = vmatprep.subr.mxu0 0.0
      %4811 = vmatpush1.msra.mxu0 0.0
      %4812 = vmatprep.subr.mxu0 0.0
      %4813 = vmatpush1.msra.mxu0 0.0
      %4814 = vmatprep.subr.mxu0 0.0
      %4815 = vmatpush1.msra.mxu0 0.0
      %4816 = vmatprep.subr.mxu0 0.0
      %4817 = vmatpush1.msra.mxu0 0.0
      %4818 = vmatprep.subr.mxu0 0.0
      %4819 = vmatpush1.msra.mxu0 0.0
      %4820 = vmatprep.subr.mxu0 0.0
      %4821 = vmatpush1.msra.mxu0 0.0
      %4822 = vmatprep.subr.mxu0 0.0
      %4823 = vmatpush1.msra.mxu0 0.0
      %4824 = vmatprep.subr.mxu0 0.0
      %4825 = vmatpush1.msra.mxu0 0.0
      %4826 = vmatprep.subr.mxu0 0.0
      %4827 = vmatpush1.msra.mxu0 %v2878
      %4828 = vmatprep.subr.mxu0 0.0
      %4829 = vmatpush1.msra.mxu0 %v2873
      %4830 = vmatprep.subr.mxu0 0.0
      %4831 = vmatpush2.msra.mxu0 0.0
      %4832 = vmatprep.subr.mxu0 0.0
      %4833 = vmatpush2.msra.mxu0 0.0
      %4834 = vmatprep.subr.mxu0 0.0
      %4835 = vmatpush2.msra.mxu0 0.0
      %4836 = vmatprep.subr.mxu0 0.0
      %4837 = vmatpush2.msra.mxu0 0.0
      %4838 = vmatprep.subr.mxu0 0.0
      %4839 = vmatpush2.msra.mxu0 0.0
      %4840 = vmatprep.subr.mxu0 0.0
      %4841 = vmatpush2.msra.mxu0 0.0
      %4842 = vmatprep.subr.mxu0 0.0
      %4843 = vmatpush2.msra.mxu0 0.0
      %4844 = vmatprep.subr.mxu0 0.0
      %4845 = vmatpush2.msra.mxu0 0.0
      %4846 = vmatprep.subr.mxu0 0.0
      %4847 = vmatpush2.msra.mxu0 0.0
      %4848 = vmatprep.subr.mxu0 0.0
      %4849 = vmatpush2.msra.mxu0 0.0
      %4850 = vmatprep.subr.mxu0 0.0
      %4851 = vmatpush2.msra.mxu0 0.0
      %4852 = vmatprep.subr.mxu0 0.0
      %4853 = vmatpush2.msra.mxu0 0.0
      %4854 = vmatprep.subr.mxu0 0.0
      %4855 = vmatpush2.msra.mxu0 0.0
      %4856 = vmatprep.subr.mxu0 0.0
      %4857 = vmatpush2.msra.mxu0 0.0
      %4858 = vmatprep.subr.mxu0 0.0
      %4859 = vmatpush2.msra.mxu0 0.0
      %4860 = vmatprep.subr.mxu0 0.0
      %4861 = vmatpush2.msra.mxu0 0.0
      %4862 = vmatprep.mubr.f32.mxu0 0.0
      %4863 = vmatmul.mubr.f32.gmra.mxu0 %v4793
      %v4864 = vpop.f32.mrf.mxu0
      %v4865 = vadd.f32 0.0, %v4864
      %v4866 = vpop.f32.mrf.mxu0
      %4867 = vmatprep.mubr.f32.mxu0 0.0
      %4868 = vmatmul.mubr.f32.gmra.mxu0 %v4796
      %v4869 = vpop.f32.mrf.mxu0
      %v4870 = vadd.f32 0.0, %v4869
      %v4871 = vpop.f32.mrf.mxu0
      %4872 = vdwg.mxu0
      %v4874 = vsel %vm1341, %v3324, 0
      %v4877 = vsel %vm1341, %v3325, 0
      %4879 = vmatprep.subr.mxu0 0.0
      %4880 = vmatpush1.msra.mxu0 0.0
      %4881 = vmatprep.subr.mxu0 0.0
      %4882 = vmatpush1.msra.mxu0 0.0
      %4883 = vmatprep.subr.mxu0 0.0
      %4884 = vmatpush1.msra.mxu0 0.0
      %4885 = vmatprep.subr.mxu0 0.0
      %4886 = vmatpush1.msra.mxu0 0.0
      %4887 = vmatprep.subr.mxu0 0.0
      %4888 = vmatpush1.msra.mxu0 0.0
      %4889 = vmatprep.subr.mxu0 0.0
      %4890 = vmatpush1.msra.mxu0 0.0
      %4891 = vmatprep.subr.mxu0 0.0
      %4892 = vmatpush1.msra.mxu0 0.0
      %4893 = vmatprep.subr.mxu0 0.0
      %4894 = vmatpush1.msra.mxu0 0.0
      %4895 = vmatprep.subr.mxu0 0.0
      %4896 = vmatpush1.msra.mxu0 0.0
      %4897 = vmatprep.subr.mxu0 0.0
      %4898 = vmatpush1.msra.mxu0 0.0
      %4899 = vmatprep.subr.mxu0 0.0
      %4900 = vmatpush1.msra.mxu0 0.0
      %4901 = vmatprep.subr.mxu0 0.0
      %4902 = vmatpush1.msra.mxu0 0.0
      %4903 = vmatprep.subr.mxu0 0.0
      %4904 = vmatpush1.msra.mxu0 0.0
      %4905 = vmatprep.subr.mxu0 0.0
      %4906 = vmatpush1.msra.mxu0 0.0
      %4907 = vmatprep.subr.mxu0 0.0
      %4908 = vmatpush1.msra.mxu0 %v2959
      %4909 = vmatprep.subr.mxu0 0.0
      %4910 = vmatpush1.msra.mxu0 %v2954
      %4911 = vmatprep.subr.mxu0 0.0
      %4912 = vmatpush2.msra.mxu0 0.0
      %4913 = vmatprep.subr.mxu0 0.0
      %4914 = vmatpush2.msra.mxu0 0.0
      %4915 = vmatprep.subr.mxu0 0.0
      %4916 = vmatpush2.msra.mxu0 0.0
      %4917 = vmatprep.subr.mxu0 0.0
      %4918 = vmatpush2.msra.mxu0 0.0
      %4919 = vmatprep.subr.mxu0 0.0
      %4920 = vmatpush2.msra.mxu0 0.0
      %4921 = vmatprep.subr.mxu0 0.0
      %4922 = vmatpush2.msra.mxu0 0.0
      %4923 = vmatprep.subr.mxu0 0.0
      %4924 = vmatpush2.msra.mxu0 0.0
      %4925 = vmatprep.subr.mxu0 0.0
      %4926 = vmatpush2.msra.mxu0 0.0
      %4927 = vmatprep.subr.mxu0 0.0
      %4928 = vmatpush2.msra.mxu0 0.0
      %4929 = vmatprep.subr.mxu0 0.0
      %4930 = vmatpush2.msra.mxu0 0.0
      %4931 = vmatprep.subr.mxu0 0.0
      %4932 = vmatpush2.msra.mxu0 0.0
      %4933 = vmatprep.subr.mxu0 0.0
      %4934 = vmatpush2.msra.mxu0 0.0
      %4935 = vmatprep.subr.mxu0 0.0
      %4936 = vmatpush2.msra.mxu0 0.0
      %4937 = vmatprep.subr.mxu0 0.0
      %4938 = vmatpush2.msra.mxu0 0.0
      %4939 = vmatprep.subr.mxu0 0.0
      %4940 = vmatpush2.msra.mxu0 0.0
      %4941 = vmatprep.subr.mxu0 0.0
      %4942 = vmatpush2.msra.mxu0 0.0
      %4943 = vmatprep.mubr.f32.mxu0 0.0
      %4944 = vmatmul.mubr.f32.gmra.mxu0 %v4874
      %v4945 = vpop.f32.mrf.mxu0
      %v4946 = vadd.f32 0.0, %v4945
      %v4947 = vpop.f32.mrf.mxu0
      %4948 = vmatprep.mubr.f32.mxu0 0.0
      %4949 = vmatmul.mubr.f32.gmra.mxu0 %v4877
      %v4950 = vpop.f32.mrf.mxu0
      %v4951 = vadd.f32 0.0, %v4950
      %v4952 = vpop.f32.mrf.mxu0
      %4953 = vdwg.mxu0
      %v4955 = vsel %vm1341, %v3326, 0
      %v4958 = vsel %vm1341, %v3327, 0
      %4960 = vmatprep.subr.mxu0 0.0
      %4961 = vmatpush1.msra.mxu0 0.0
      %4962 = vmatprep.subr.mxu0 0.0
      %4963 = vmatpush1.msra.mxu0 0.0
      %4964 = vmatprep.subr.mxu0 0.0
      %4965 = vmatpush1.msra.mxu0 0.0
      %4966 = vmatprep.subr.mxu0 0.0
      %4967 = vmatpush1.msra.mxu0 0.0
      %4968 = vmatprep.subr.mxu0 0.0
      %4969 = vmatpush1.msra.mxu0 0.0
      %4970 = vmatprep.subr.mxu0 0.0
      %4971 = vmatpush1.msra.mxu0 0.0
      %4972 = vmatprep.subr.mxu0 0.0
      %4973 = vmatpush1.msra.mxu0 0.0
      %4974 = vmatprep.subr.mxu0 0.0
      %4975 = vmatpush1.msra.mxu0 0.0
      %4976 = vmatprep.subr.mxu0 0.0
      %4977 = vmatpush1.msra.mxu0 0.0
      %4978 = vmatprep.subr.mxu0 0.0
      %4979 = vmatpush1.msra.mxu0 0.0
      %4980 = vmatprep.subr.mxu0 0.0
      %4981 = vmatpush1.msra.mxu0 0.0
      %4982 = vmatprep.subr.mxu0 0.0
      %4983 = vmatpush1.msra.mxu0 0.0
      %4984 = vmatprep.subr.mxu0 0.0
      %4985 = vmatpush1.msra.mxu0 0.0
      %4986 = vmatprep.subr.mxu0 0.0
      %4987 = vmatpush1.msra.mxu0 0.0
      %4988 = vmatprep.subr.mxu0 0.0
      %4989 = vmatpush1.msra.mxu0 %v3040
      %4990 = vmatprep.subr.mxu0 0.0
      %4991 = vmatpush1.msra.mxu0 %v3035
      %4992 = vmatprep.subr.mxu0 0.0
      %4993 = vmatpush2.msra.mxu0 0.0
      %4994 = vmatprep.subr.mxu0 0.0
      %4995 = vmatpush2.msra.mxu0 0.0
      %4996 = vmatprep.subr.mxu0 0.0
      %4997 = vmatpush2.msra.mxu0 0.0
      %4998 = vmatprep.subr.mxu0 0.0
      %4999 = vmatpush2.msra.mxu0 0.0
      %5000 = vmatprep.subr.mxu0 0.0
      %5001 = vmatpush2.msra.mxu0 0.0
      %5002 = vmatprep.subr.mxu0 0.0
      %5003 = vmatpush2.msra.mxu0 0.0
      %5004 = vmatprep.subr.mxu0 0.0
      %5005 = vmatpush2.msra.mxu0 0.0
      %5006 = vmatprep.subr.mxu0 0.0
      %5007 = vmatpush2.msra.mxu0 0.0
      %5008 = vmatprep.subr.mxu0 0.0
      %5009 = vmatpush2.msra.mxu0 0.0
      %5010 = vmatprep.subr.mxu0 0.0
      %5011 = vmatpush2.msra.mxu0 0.0
      %5012 = vmatprep.subr.mxu0 0.0
      %5013 = vmatpush2.msra.mxu0 0.0
      %5014 = vmatprep.subr.mxu0 0.0
      %5015 = vmatpush2.msra.mxu0 0.0
      %5016 = vmatprep.subr.mxu0 0.0
      %5017 = vmatpush2.msra.mxu0 0.0
      %5018 = vmatprep.subr.mxu0 0.0
      %5019 = vmatpush2.msra.mxu0 0.0
      %5020 = vmatprep.subr.mxu0 0.0
      %5021 = vmatpush2.msra.mxu0 0.0
      %5022 = vmatprep.subr.mxu0 0.0
      %5023 = vmatpush2.msra.mxu0 0.0
      %5024 = vmatprep.mubr.f32.mxu0 0.0
      %5025 = vmatmul.mubr.f32.gmra.mxu0 %v4955
      %v5026 = vpop.f32.mrf.mxu0
      %v5027 = vadd.f32 0.0, %v5026
      %v5028 = vpop.f32.mrf.mxu0
      %5029 = vmatprep.mubr.f32.mxu0 0.0
      %5030 = vmatmul.mubr.f32.gmra.mxu0 %v4958
      %v5031 = vpop.f32.mrf.mxu0
      %v5032 = vadd.f32 0.0, %v5031
      %v5033 = vpop.f32.mrf.mxu0
      %5034 = vdwg.mxu0
      %v5036 = vsel %vm1341, %v3328, 0
      %v5039 = vsel %vm1341, %v3329, 0
      %5041 = vmatprep.subr.mxu0 0.0
      %5042 = vmatpush1.msra.mxu0 0.0
      %5043 = vmatprep.subr.mxu0 0.0
      %5044 = vmatpush1.msra.mxu0 0.0
      %5045 = vmatprep.subr.mxu0 0.0
      %5046 = vmatpush1.msra.mxu0 0.0
      %5047 = vmatprep.subr.mxu0 0.0
      %5048 = vmatpush1.msra.mxu0 0.0
      %5049 = vmatprep.subr.mxu0 0.0
      %5050 = vmatpush1.msra.mxu0 0.0
      %5051 = vmatprep.subr.mxu0 0.0
      %5052 = vmatpush1.msra.mxu0 0.0
      %5053 = vmatprep.subr.mxu0 0.0
      %5054 = vmatpush1.msra.mxu0 0.0
      %5055 = vmatprep.subr.mxu0 0.0
      %5056 = vmatpush1.msra.mxu0 0.0
      %5057 = vmatprep.subr.mxu0 0.0
      %5058 = vmatpush1.msra.mxu0 0.0
      %5059 = vmatprep.subr.mxu0 0.0
      %5060 = vmatpush1.msra.mxu0 0.0
      %5061 = vmatprep.subr.mxu0 0.0
      %5062 = vmatpush1.msra.mxu0 0.0
      %5063 = vmatprep.subr.mxu0 0.0
      %5064 = vmatpush1.msra.mxu0 0.0
      %5065 = vmatprep.subr.mxu0 0.0
      %5066 = vmatpush1.msra.mxu0 0.0
      %5067 = vmatprep.subr.mxu0 0.0
      %5068 = vmatpush1.msra.mxu0 0.0
      %5069 = vmatprep.subr.mxu0 0.0
      %5070 = vmatpush1.msra.mxu0 %v3121
      %5071 = vmatprep.subr.mxu0 0.0
      %5072 = vmatpush1.msra.mxu0 %v3116
      %5073 = vmatprep.subr.mxu0 0.0
      %5074 = vmatpush2.msra.mxu0 0.0
      %5075 = vmatprep.subr.mxu0 0.0
      %5076 = vmatpush2.msra.mxu0 0.0
      %5077 = vmatprep.subr.mxu0 0.0
      %5078 = vmatpush2.msra.mxu0 0.0
      %5079 = vmatprep.subr.mxu0 0.0
      %5080 = vmatpush2.msra.mxu0 0.0
      %5081 = vmatprep.subr.mxu0 0.0
      %5082 = vmatpush2.msra.mxu0 0.0
      %5083 = vmatprep.subr.mxu0 0.0
      %5084 = vmatpush2.msra.mxu0 0.0
      %5085 = vmatprep.subr.mxu0 0.0
      %5086 = vmatpush2.msra.mxu0 0.0
      %5087 = vmatprep.subr.mxu0 0.0
      %5088 = vmatpush2.msra.mxu0 0.0
      %5089 = vmatprep.subr.mxu0 0.0
      %5090 = vmatpush2.msra.mxu0 0.0
      %5091 = vmatprep.subr.mxu0 0.0
      %5092 = vmatpush2.msra.mxu0 0.0
      %5093 = vmatprep.subr.mxu0 0.0
      %5094 = vmatpush2.msra.mxu0 0.0
      %5095 = vmatprep.subr.mxu0 0.0
      %5096 = vmatpush2.msra.mxu0 0.0
      %5097 = vmatprep.subr.mxu0 0.0
      %5098 = vmatpush2.msra.mxu0 0.0
      %5099 = vmatprep.subr.mxu0 0.0
      %5100 = vmatpush2.msra.mxu0 0.0
      %5101 = vmatprep.subr.mxu0 0.0
      %5102 = vmatpush2.msra.mxu0 0.0
      %5103 = vmatprep.subr.mxu0 0.0
      %5104 = vmatpush2.msra.mxu0 0.0
      %5105 = vmatprep.mubr.f32.mxu0 0.0
      %5106 = vmatmul.mubr.f32.gmra.mxu0 %v5036
      %v5107 = vpop.f32.mrf.mxu0
      %v5108 = vadd.f32 0.0, %v5107
      %v5109 = vpop.f32.mrf.mxu0
      %5110 = vmatprep.mubr.f32.mxu0 0.0
      %5111 = vmatmul.mubr.f32.gmra.mxu0 %v5039
      %v5112 = vpop.f32.mrf.mxu0
      %v5113 = vadd.f32 0.0, %v5112
      %v5114 = vpop.f32.mrf.mxu0
      %5115 = vdwg.mxu0
      %v5117 = vsel %vm1341, %v3330, 0
      %v5120 = vsel %vm1341, %v3331, 0
      %5122 = vmatprep.subr.mxu0 0.0
      %5123 = vmatpush1.msra.mxu0 0.0
      %5124 = vmatprep.subr.mxu0 0.0
      %5125 = vmatpush1.msra.mxu0 0.0
      %5126 = vmatprep.subr.mxu0 0.0
      %5127 = vmatpush1.msra.mxu0 0.0
      %5128 = vmatprep.subr.mxu0 0.0
      %5129 = vmatpush1.msra.mxu0 0.0
      %5130 = vmatprep.subr.mxu0 0.0
      %5131 = vmatpush1.msra.mxu0 0.0
      %5132 = vmatprep.subr.mxu0 0.0
      %5133 = vmatpush1.msra.mxu0 0.0
      %5134 = vmatprep.subr.mxu0 0.0
      %5135 = vmatpush1.msra.mxu0 0.0
      %5136 = vmatprep.subr.mxu0 0.0
      %5137 = vmatpush1.msra.mxu0 0.0
      %5138 = vmatprep.subr.mxu0 0.0
      %5139 = vmatpush1.msra.mxu0 0.0
      %5140 = vmatprep.subr.mxu0 0.0
      %5141 = vmatpush1.msra.mxu0 0.0
      %5142 = vmatprep.subr.mxu0 0.0
      %5143 = vmatpush1.msra.mxu0 0.0
      %5144 = vmatprep.subr.mxu0 0.0
      %5145 = vmatpush1.msra.mxu0 0.0
      %5146 = vmatprep.subr.mxu0 0.0
      %5147 = vmatpush1.msra.mxu0 0.0
      %5148 = vmatprep.subr.mxu0 0.0
      %5149 = vmatpush1.msra.mxu0 0.0
      %5150 = vmatprep.subr.mxu0 0.0
      %5151 = vmatpush1.msra.mxu0 %v3202
      %5152 = vmatprep.subr.mxu0 0.0
      %5153 = vmatpush1.msra.mxu0 %v3197
      %5154 = vmatprep.subr.mxu0 0.0
      %5155 = vmatpush2.msra.mxu0 0.0
      %5156 = vmatprep.subr.mxu0 0.0
      %5157 = vmatpush2.msra.mxu0 0.0
      %5158 = vmatprep.subr.mxu0 0.0
      %5159 = vmatpush2.msra.mxu0 0.0
      %5160 = vmatprep.subr.mxu0 0.0
      %5161 = vmatpush2.msra.mxu0 0.0
      %5162 = vmatprep.subr.mxu0 0.0
      %5163 = vmatpush2.msra.mxu0 0.0
      %5164 = vmatprep.subr.mxu0 0.0
      %5165 = vmatpush2.msra.mxu0 0.0
      %5166 = vmatprep.subr.mxu0 0.0
      %5167 = vmatpush2.msra.mxu0 0.0
      %5168 = vmatprep.subr.mxu0 0.0
      %5169 = vmatpush2.msra.mxu0 0.0
      %5170 = vmatprep.subr.mxu0 0.0
      %5171 = vmatpush2.msra.mxu0 0.0
      %5172 = vmatprep.subr.mxu0 0.0
      %5173 = vmatpush2.msra.mxu0 0.0
      %5174 = vmatprep.subr.mxu0 0.0
      %5175 = vmatpush2.msra.mxu0 0.0
      %5176 = vmatprep.subr.mxu0 0.0
      %5177 = vmatpush2.msra.mxu0 0.0
      %5178 = vmatprep.subr.mxu0 0.0
      %5179 = vmatpush2.msra.mxu0 0.0
      %5180 = vmatprep.subr.mxu0 0.0
      %5181 = vmatpush2.msra.mxu0 0.0
      %5182 = vmatprep.subr.mxu0 0.0
      %5183 = vmatpush2.msra.mxu0 0.0
      %5184 = vmatprep.subr.mxu0 0.0
      %5185 = vmatpush2.msra.mxu0 0.0
      %5186 = vmatprep.mubr.f32.mxu0 0.0
      %5187 = vmatmul.mubr.f32.gmra.mxu0 %v5117
      %v5188 = vpop.f32.mrf.mxu0
      %v5189 = vadd.f32 0.0, %v5188
      %v5190 = vpop.f32.mrf.mxu0
      %5191 = vmatprep.mubr.f32.mxu0 0.0
      %5192 = vmatmul.mubr.f32.gmra.mxu0 %v5120
      %v5193 = vpop.f32.mrf.mxu0
      %v5194 = vadd.f32 0.0, %v5193
      %v5195 = vpop.f32.mrf.mxu0
      %5196 = vdwg.mxu0
      %v5198 = vsel %vm1341, %v3332, 0
      %v5201 = vsel %vm1341, %v3333, 0
      %5203 = vmatprep.subr.mxu0 0.0
      %5204 = vmatpush1.msra.mxu0 0.0
      %5205 = vmatprep.subr.mxu0 0.0
      %5206 = vmatpush1.msra.mxu0 0.0
      %5207 = vmatprep.subr.mxu0 0.0
      %5208 = vmatpush1.msra.mxu0 0.0
      %5209 = vmatprep.subr.mxu0 0.0
      %5210 = vmatpush1.msra.mxu0 0.0
      %5211 = vmatprep.subr.mxu0 0.0
      %5212 = vmatpush1.msra.mxu0 0.0
      %5213 = vmatprep.subr.mxu0 0.0
      %5214 = vmatpush1.msra.mxu0 0.0
      %5215 = vmatprep.subr.mxu0 0.0
      %5216 = vmatpush1.msra.mxu0 0.0
      %5217 = vmatprep.subr.mxu0 0.0
      %5218 = vmatpush1.msra.mxu0 0.0
      %5219 = vmatprep.subr.mxu0 0.0
      %5220 = vmatpush1.msra.mxu0 0.0
      %5221 = vmatprep.subr.mxu0 0.0
      %5222 = vmatpush1.msra.mxu0 0.0
      %5223 = vmatprep.subr.mxu0 0.0
      %5224 = vmatpush1.msra.mxu0 0.0
      %5225 = vmatprep.subr.mxu0 0.0
      %5226 = vmatpush1.msra.mxu0 0.0
      %5227 = vmatprep.subr.mxu0 0.0
      %5228 = vmatpush1.msra.mxu0 0.0
      %5229 = vmatprep.subr.mxu0 0.0
      %5230 = vmatpush1.msra.mxu0 0.0
      %5231 = vmatprep.subr.mxu0 0.0
      %5232 = vmatpush1.msra.mxu0 %v3283
      %5233 = vmatprep.subr.mxu0 0.0
      %5234 = vmatpush1.msra.mxu0 %v3278
      %5235 = vmatprep.subr.mxu0 0.0
      %5236 = vmatpush2.msra.mxu0 0.0
      %5237 = vmatprep.subr.mxu0 0.0
      %5238 = vmatpush2.msra.mxu0 0.0
      %5239 = vmatprep.subr.mxu0 0.0
      %5240 = vmatpush2.msra.mxu0 0.0
      %5241 = vmatprep.subr.mxu0 0.0
      %5242 = vmatpush2.msra.mxu0 0.0
      %5243 = vmatprep.subr.mxu0 0.0
      %5244 = vmatpush2.msra.mxu0 0.0
      %5245 = vmatprep.subr.mxu0 0.0
      %5246 = vmatpush2.msra.mxu0 0.0
      %5247 = vmatprep.subr.mxu0 0.0
      %5248 = vmatpush2.msra.mxu0 0.0
      %5249 = vmatprep.subr.mxu0 0.0
      %5250 = vmatpush2.msra.mxu0 0.0
      %5251 = vmatprep.subr.mxu0 0.0
      %5252 = vmatpush2.msra.mxu0 0.0
      %5253 = vmatprep.subr.mxu0 0.0
      %5254 = vmatpush2.msra.mxu0 0.0
      %5255 = vmatprep.subr.mxu0 0.0
      %5256 = vmatpush2.msra.mxu0 0.0
      %5257 = vmatprep.subr.mxu0 0.0
      %5258 = vmatpush2.msra.mxu0 0.0
      %5259 = vmatprep.subr.mxu0 0.0
      %5260 = vmatpush2.msra.mxu0 0.0
      %5261 = vmatprep.subr.mxu0 0.0
      %5262 = vmatpush2.msra.mxu0 0.0
      %5263 = vmatprep.subr.mxu0 0.0
      %5264 = vmatpush2.msra.mxu0 0.0
      %5265 = vmatprep.subr.mxu0 0.0
      %5266 = vmatpush2.msra.mxu0 0.0
      %5267 = vmatprep.mubr.f32.mxu0 0.0
      %5268 = vmatmul.mubr.f32.gmra.mxu0 %v5198
      %v5269 = vpop.f32.mrf.mxu0
      %v5270 = vadd.f32 0.0, %v5269
      %v5271 = vpop.f32.mrf.mxu0
      %5272 = vmatprep.mubr.f32.mxu0 0.0
      %5273 = vmatmul.mubr.f32.gmra.mxu0 %v5201
      %v5274 = vpop.f32.mrf.mxu0
      %v5275 = vadd.f32 0.0, %v5274
      %v5276 = vpop.f32.mrf.mxu0
      %5277 = vdwg.mxu0
      %v5278 = vcombine.low %v3407, %v3569
      %v5279 = vcombine.high %v3407, %v3569
      %v5281 = vunpack.c.l.s4 1983009808
      %v5282 = vunpack.c.0.s8 %v5281
      %v5283 = vlaneseq
      %v5284 = vshrl.u32 %v5283, 7
      %v5285 = vsub.s32 %v5282, %v5284
      %v5286 = vrot.slane %v5278, %v5285
      %v5288 = vunpack.c.l.s4 1983009808
      %v5289 = vunpack.c.0.s8 %v5288
      %v5290 = vlaneseq
      %v5291 = vshrl.u32 %v5290, 7
      %v5292 = vsub.s32 %v5289, %v5291
      %v5293 = vrot.slane %v5279, %v5292
      %v5294 = vcombine.low %v3488, %v3650
      %v5295 = vcombine.high %v3488, %v3650
      %v5297 = vunpack.c.l.s4 1983009808
      %v5298 = vunpack.c.0.s8 %v5297
      %v5299 = vlaneseq
      %v5300 = vshrl.u32 %v5299, 7
      %v5301 = vsub.s32 %v5298, %v5300
      %v5302 = vrot.slane %v5294, %v5301
      %v5304 = vunpack.c.l.s4 1983009808
      %v5305 = vunpack.c.0.s8 %v5304
      %v5306 = vlaneseq
      %v5307 = vshrl.u32 %v5306, 7
      %v5308 = vsub.s32 %v5305, %v5307
      %v5309 = vrot.slane %v5295, %v5308
      %v5310 = vcombine.low %v3731, %v3893
      %v5311 = vcombine.high %v3731, %v3893
      %v5313 = vunpack.c.l.s4 1983009808
      %v5314 = vunpack.c.0.s8 %v5313
      %v5315 = vlaneseq
      %v5316 = vshrl.u32 %v5315, 7
      %v5317 = vsub.s32 %v5314, %v5316
      %v5318 = vrot.slane %v5310, %v5317
      %v5320 = vunpack.c.l.s4 1983009808
      %v5321 = vunpack.c.0.s8 %v5320
      %v5322 = vlaneseq
      %v5323 = vshrl.u32 %v5322, 7
      %v5324 = vsub.s32 %v5321, %v5323
      %v5325 = vrot.slane %v5311, %v5324
      %v5326 = vcombine.low %v3812, %v3974
      %v5327 = vcombine.high %v3812, %v3974
      %v5329 = vunpack.c.l.s4 1983009808
      %v5330 = vunpack.c.0.s8 %v5329
      %v5331 = vlaneseq
      %v5332 = vshrl.u32 %v5331, 7
      %v5333 = vsub.s32 %v5330, %v5332
      %v5334 = vrot.slane %v5326, %v5333
      %v5336 = vunpack.c.l.s4 1983009808
      %v5337 = vunpack.c.0.s8 %v5336
      %v5338 = vlaneseq
      %v5339 = vshrl.u32 %v5338, 7
      %v5340 = vsub.s32 %v5337, %v5339
      %v5341 = vrot.slane %v5327, %v5340
      %v5342 = vcombine.low %v5286, %v5302
      %v5343 = vcombine.high %v5286, %v5302
      %v5345 = vunpack.c.l.s4 1934713408
      %v5346 = vunpack.c.0.s8 %v5345
      %v5347 = vlaneseq
      %v5348 = vshrl.u32 %v5347, 7
      %v5349 = vsub.s32 %v5346, %v5348
      %v5350 = vrot.slane %v5342, %v5349
      %v5352 = vunpack.c.l.s4 1934713408
      %v5353 = vunpack.c.0.s8 %v5352
      %v5354 = vlaneseq
      %v5355 = vshrl.u32 %v5354, 7
      %v5356 = vsub.s32 %v5353, %v5355
      %v5357 = vrot.slane %v5343, %v5356
      %v5358 = vcombine.low %v5293, %v5309
      %v5359 = vcombine.high %v5293, %v5309
      %v5361 = vunpack.c.l.s4 1934713408
      %v5362 = vunpack.c.0.s8 %v5361
      %v5363 = vlaneseq
      %v5364 = vshrl.u32 %v5363, 7
      %v5365 = vsub.s32 %v5362, %v5364
      %v5366 = vrot.slane %v5358, %v5365
      %v5368 = vunpack.c.l.s4 1934713408
      %v5369 = vunpack.c.0.s8 %v5368
      %v5370 = vlaneseq
      %v5371 = vshrl.u32 %v5370, 7
      %v5372 = vsub.s32 %v5369, %v5371
      %v5373 = vrot.slane %v5359, %v5372
      %v5374 = vcombine.low %v5318, %v5334
      %v5375 = vcombine.high %v5318, %v5334
      %v5377 = vunpack.c.l.s4 1934713408
      %v5378 = vunpack.c.0.s8 %v5377
      %v5379 = vlaneseq
      %v5380 = vshrl.u32 %v5379, 7
      %v5381 = vsub.s32 %v5378, %v5380
      %v5382 = vrot.slane %v5374, %v5381
      %v5384 = vunpack.c.l.s4 1934713408
      %v5385 = vunpack.c.0.s8 %v5384
      %v5386 = vlaneseq
      %v5387 = vshrl.u32 %v5386, 7
      %v5388 = vsub.s32 %v5385, %v5387
      %v5389 = vrot.slane %v5375, %v5388
      %v5390 = vcombine.low %v5325, %v5341
      %v5391 = vcombine.high %v5325, %v5341
      %v5393 = vunpack.c.l.s4 1934713408
      %v5394 = vunpack.c.0.s8 %v5393
      %v5395 = vlaneseq
      %v5396 = vshrl.u32 %v5395, 7
      %v5397 = vsub.s32 %v5394, %v5396
      %v5398 = vrot.slane %v5390, %v5397
      %v5400 = vunpack.c.l.s4 1934713408
      %v5401 = vunpack.c.0.s8 %v5400
      %v5402 = vlaneseq
      %v5403 = vshrl.u32 %v5402, 7
      %v5404 = vsub.s32 %v5401, %v5403
      %v5405 = vrot.slane %v5391, %v5404
      %v5406 = vcombine.low %v5350, %v5382
      %v5407 = vcombine.high %v5350, %v5382
      %v5408 = vcombine.low %v5357, %v5389
      %v5409 = vcombine.high %v5357, %v5389
      %v5410 = vcombine.low %v5366, %v5398
      %v5411 = vcombine.high %v5366, %v5398
      %v5412 = vcombine.low %v5373, %v5405
      %v5413 = vcombine.high %v5373, %v5405
      %v5414 = vcombine.low %v4055, %v4217
      %v5415 = vcombine.high %v4055, %v4217
      %v5417 = vunpack.c.l.s4 1983009808
      %v5418 = vunpack.c.0.s8 %v5417
      %v5419 = vlaneseq
      %v5420 = vshrl.u32 %v5419, 7
      %v5421 = vsub.s32 %v5418, %v5420
      %v5422 = vrot.slane %v5414, %v5421
      %v5424 = vunpack.c.l.s4 1983009808
      %v5425 = vunpack.c.0.s8 %v5424
      %v5426 = vlaneseq
      %v5427 = vshrl.u32 %v5426, 7
      %v5428 = vsub.s32 %v5425, %v5427
      %v5429 = vrot.slane %v5415, %v5428
      %v5430 = vcombine.low %v4136, %v4298
      %v5431 = vcombine.high %v4136, %v4298
      %v5433 = vunpack.c.l.s4 1983009808
      %v5434 = vunpack.c.0.s8 %v5433
      %v5435 = vlaneseq
      %v5436 = vshrl.u32 %v5435, 7
      %v5437 = vsub.s32 %v5434, %v5436
      %v5438 = vrot.slane %v5430, %v5437
      %v5440 = vunpack.c.l.s4 1983009808
      %v5441 = vunpack.c.0.s8 %v5440
      %v5442 = vlaneseq
      %v5443 = vshrl.u32 %v5442, 7
      %v5444 = vsub.s32 %v5441, %v5443
      %v5445 = vrot.slane %v5431, %v5444
      %v5446 = vcombine.low %v4379, %v4541
      %v5447 = vcombine.high %v4379, %v4541
      %v5449 = vunpack.c.l.s4 1983009808
      %v5450 = vunpack.c.0.s8 %v5449
      %v5451 = vlaneseq
      %v5452 = vshrl.u32 %v5451, 7
      %v5453 = vsub.s32 %v5450, %v5452
      %v5454 = vrot.slane %v5446, %v5453
      %v5456 = vunpack.c.l.s4 1983009808
      %v5457 = vunpack.c.0.s8 %v5456
      %v5458 = vlaneseq
      %v5459 = vshrl.u32 %v5458, 7
      %v5460 = vsub.s32 %v5457, %v5459
      %v5461 = vrot.slane %v5447, %v5460
      %v5462 = vcombine.low %v4460, %v4622
      %v5463 = vcombine.high %v4460, %v4622
      %v5465 = vunpack.c.l.s4 1983009808
      %v5466 = vunpack.c.0.s8 %v5465
      %v5467 = vlaneseq
      %v5468 = vshrl.u32 %v5467, 7
      %v5469 = vsub.s32 %v5466, %v5468
      %v5470 = vrot.slane %v5462, %v5469
      %v5472 = vunpack.c.l.s4 1983009808
      %v5473 = vunpack.c.0.s8 %v5472
      %v5474 = vlaneseq
      %v5475 = vshrl.u32 %v5474, 7
      %v5476 = vsub.s32 %v5473, %v5475
      %v5477 = vrot.slane %v5463, %v5476
      %v5478 = vcombine.low %v5422, %v5438
      %v5479 = vcombine.high %v5422, %v5438
      %v5481 = vunpack.c.l.s4 1934713408
      %v5482 = vunpack.c.0.s8 %v5481
      %v5483 = vlaneseq
      %v5484 = vshrl.u32 %v5483, 7
      %v5485 = vsub.s32 %v5482, %v5484
      %v5486 = vrot.slane %v5478, %v5485
      %v5488 = vunpack.c.l.s4 1934713408
      %v5489 = vunpack.c.0.s8 %v5488
      %v5490 = vlaneseq
      %v5491 = vshrl.u32 %v5490, 7
      %v5492 = vsub.s32 %v5489, %v5491
      %v5493 = vrot.slane %v5479, %v5492
      %v5494 = vcombine.low %v5429, %v5445
      %v5495 = vcombine.high %v5429, %v5445
      %v5497 = vunpack.c.l.s4 1934713408
      %v5498 = vunpack.c.0.s8 %v5497
      %v5499 = vlaneseq
      %v5500 = vshrl.u32 %v5499, 7
      %v5501 = vsub.s32 %v5498, %v5500
      %v5502 = vrot.slane %v5494, %v5501
      %v5504 = vunpack.c.l.s4 1934713408
      %v5505 = vunpack.c.0.s8 %v5504
      %v5506 = vlaneseq
      %v5507 = vshrl.u32 %v5506, 7
      %v5508 = vsub.s32 %v5505, %v5507
      %v5509 = vrot.slane %v5495, %v5508
      %v5510 = vcombine.low %v5454, %v5470
      %v5511 = vcombine.high %v5454, %v5470
      %v5513 = vunpack.c.l.s4 1934713408
      %v5514 = vunpack.c.0.s8 %v5513
      %v5515 = vlaneseq
      %v5516 = vshrl.u32 %v5515, 7
      %v5517 = vsub.s32 %v5514, %v5516
      %v5518 = vrot.slane %v5510, %v5517
      %v5520 = vunpack.c.l.s4 1934713408
      %v5521 = vunpack.c.0.s8 %v5520
      %v5522 = vlaneseq
      %v5523 = vshrl.u32 %v5522, 7
      %v5524 = vsub.s32 %v5521, %v5523
      %v5525 = vrot.slane %v5511, %v5524
      %v5526 = vcombine.low %v5461, %v5477
      %v5527 = vcombine.high %v5461, %v5477
      %v5529 = vunpack.c.l.s4 1934713408
      %v5530 = vunpack.c.0.s8 %v5529
      %v5531 = vlaneseq
      %v5532 = vshrl.u32 %v5531, 7
      %v5533 = vsub.s32 %v5530, %v5532
      %v5534 = vrot.slane %v5526, %v5533
      %v5536 = vunpack.c.l.s4 1934713408
      %v5537 = vunpack.c.0.s8 %v5536
      %v5538 = vlaneseq
      %v5539 = vshrl.u32 %v5538, 7
      %v5540 = vsub.s32 %v5537, %v5539
      %v5541 = vrot.slane %v5527, %v5540
      %v5542 = vcombine.low %v5486, %v5518
      %v5543 = vcombine.high %v5486, %v5518
      %v5544 = vcombine.low %v5493, %v5525
      %v5545 = vcombine.high %v5493, %v5525
      %v5546 = vcombine.low %v5502, %v5534
      %v5547 = vcombine.high %v5502, %v5534
      %v5548 = vcombine.low %v5509, %v5541
      %v5549 = vcombine.high %v5509, %v5541
      %v5550 = vcombine.low %v4703, %v4865
      %v5551 = vcombine.high %v4703, %v4865
      %v5553 = vunpack.c.l.s4 1983009808
      %v5554 = vunpack.c.0.s8 %v5553
      %v5555 = vlaneseq
      %v5556 = vshrl.u32 %v5555, 7
      %v5557 = vsub.s32 %v5554, %v5556
      %v5558 = vrot.slane %v5550, %v5557
      %v5560 = vunpack.c.l.s4 1983009808
      %v5561 = vunpack.c.0.s8 %v5560
      %v5562 = vlaneseq
      %v5563 = vshrl.u32 %v5562, 7
      %v5564 = vsub.s32 %v5561, %v5563
      %v5565 = vrot.slane %v5551, %v5564
      %v5566 = vcombine.low %v4784, %v4946
      %v5567 = vcombine.high %v4784, %v4946
      %v5569 = vunpack.c.l.s4 1983009808
      %v5570 = vunpack.c.0.s8 %v5569
      %v5571 = vlaneseq
      %v5572 = vshrl.u32 %v5571, 7
      %v5573 = vsub.s32 %v5570, %v5572
      %v5574 = vrot.slane %v5566, %v5573
      %v5576 = vunpack.c.l.s4 1983009808
      %v5577 = vunpack.c.0.s8 %v5576
      %v5578 = vlaneseq
      %v5579 = vshrl.u32 %v5578, 7
      %v5580 = vsub.s32 %v5577, %v5579
      %v5581 = vrot.slane %v5567, %v5580
      %v5582 = vcombine.low %v5027, %v5189
      %v5583 = vcombine.high %v5027, %v5189
      %v5585 = vunpack.c.l.s4 1983009808
      %v5586 = vunpack.c.0.s8 %v5585
      %v5587 = vlaneseq
      %v5588 = vshrl.u32 %v5587, 7
      %v5589 = vsub.s32 %v5586, %v5588
      %v5590 = vrot.slane %v5582, %v5589
      %v5592 = vunpack.c.l.s4 1983009808
      %v5593 = vunpack.c.0.s8 %v5592
      %v5594 = vlaneseq
      %v5595 = vshrl.u32 %v5594, 7
      %v5596 = vsub.s32 %v5593, %v5595
      %v5597 = vrot.slane %v5583, %v5596
      %v5598 = vcombine.low %v5108, %v5270
      %v5599 = vcombine.high %v5108, %v5270
      %v5601 = vunpack.c.l.s4 1983009808
      %v5602 = vunpack.c.0.s8 %v5601
      %v5603 = vlaneseq
      %v5604 = vshrl.u32 %v5603, 7
      %v5605 = vsub.s32 %v5602, %v5604
      %v5606 = vrot.slane %v5598, %v5605
      %v5608 = vunpack.c.l.s4 1983009808
      %v5609 = vunpack.c.0.s8 %v5608
      %v5610 = vlaneseq
      %v5611 = vshrl.u32 %v5610, 7
      %v5612 = vsub.s32 %v5609, %v5611
      %v5613 = vrot.slane %v5599, %v5612
      %v5614 = vcombine.low %v5558, %v5574
      %v5615 = vcombine.high %v5558, %v5574
      %v5617 = vunpack.c.l.s4 1934713408
      %v5618 = vunpack.c.0.s8 %v5617
      %v5619 = vlaneseq
      %v5620 = vshrl.u32 %v5619, 7
      %v5621 = vsub.s32 %v5618, %v5620
      %v5622 = vrot.slane %v5614, %v5621
      %v5624 = vunpack.c.l.s4 1934713408
      %v5625 = vunpack.c.0.s8 %v5624
      %v5626 = vlaneseq
      %v5627 = vshrl.u32 %v5626, 7
      %v5628 = vsub.s32 %v5625, %v5627
      %v5629 = vrot.slane %v5615, %v5628
      %v5630 = vcombine.low %v5565, %v5581
      %v5631 = vcombine.high %v5565, %v5581
      %v5633 = vunpack.c.l.s4 1934713408
      %v5634 = vunpack.c.0.s8 %v5633
      %v5635 = vlaneseq
      %v5636 = vshrl.u32 %v5635, 7
      %v5637 = vsub.s32 %v5634, %v5636
      %v5638 = vrot.slane %v5630, %v5637
      %v5640 = vunpack.c.l.s4 1934713408
      %v5641 = vunpack.c.0.s8 %v5640
      %v5642 = vlaneseq
      %v5643 = vshrl.u32 %v5642, 7
      %v5644 = vsub.s32 %v5641, %v5643
      %v5645 = vrot.slane %v5631, %v5644
      %v5646 = vcombine.low %v5590, %v5606
      %v5647 = vcombine.high %v5590, %v5606
      %v5649 = vunpack.c.l.s4 1934713408
      %v5650 = vunpack.c.0.s8 %v5649
      %v5651 = vlaneseq
      %v5652 = vshrl.u32 %v5651, 7
      %v5653 = vsub.s32 %v5650, %v5652
      %v5654 = vrot.slane %v5646, %v5653
      %v5656 = vunpack.c.l.s4 1934713408
      %v5657 = vunpack.c.0.s8 %v5656
      %v5658 = vlaneseq
      %v5659 = vshrl.u32 %v5658, 7
      %v5660 = vsub.s32 %v5657, %v5659
      %v5661 = vrot.slane %v5647, %v5660
      %v5662 = vcombine.low %v5597, %v5613
      %v5663 = vcombine.high %v5597, %v5613
      %v5665 = vunpack.c.l.s4 1934713408
      %v5666 = vunpack.c.0.s8 %v5665
      %v5667 = vlaneseq
      %v5668 = vshrl.u32 %v5667, 7
      %v5669 = vsub.s32 %v5666, %v5668
      %v5670 = vrot.slane %v5662, %v5669
      %v5672 = vunpack.c.l.s4 1934713408
      %v5673 = vunpack.c.0.s8 %v5672
      %v5674 = vlaneseq
      %v5675 = vshrl.u32 %v5674, 7
      %v5676 = vsub.s32 %v5673, %v5675
      %v5677 = vrot.slane %v5663, %v5676
      %v5678 = vcombine.low %v5622, %v5654
      %v5679 = vcombine.high %v5622, %v5654
      %v5680 = vcombine.low %v5629, %v5661
      %v5681 = vcombine.high %v5629, %v5661
      %v5682 = vcombine.low %v5638, %v5670
      %v5683 = vcombine.high %v5638, %v5670
      %v5684 = vcombine.low %v5645, %v5677
      %v5685 = vcombine.high %v5645, %v5677
      %v5686 = vcombine.low %v3412, %v3574
      %v5687 = vcombine.high %v3412, %v3574
      %v5689 = vunpack.c.l.s4 1983009808
      %v5690 = vunpack.c.0.s8 %v5689
      %v5691 = vlaneseq
      %v5692 = vshrl.u32 %v5691, 7
      %v5693 = vsub.s32 %v5690, %v5692
      %v5694 = vrot.slane %v5686, %v5693
      %v5696 = vunpack.c.l.s4 1983009808
      %v5697 = vunpack.c.0.s8 %v5696
      %v5698 = vlaneseq
      %v5699 = vshrl.u32 %v5698, 7
      %v5700 = vsub.s32 %v5697, %v5699
      %v5701 = vrot.slane %v5687, %v5700
      %v5702 = vcombine.low %v3493, %v3655
      %v5703 = vcombine.high %v3493, %v3655
      %v5705 = vunpack.c.l.s4 1983009808
      %v5706 = vunpack.c.0.s8 %v5705
      %v5707 = vlaneseq
      %v5708 = vshrl.u32 %v5707, 7
      %v5709 = vsub.s32 %v5706, %v5708
      %v5710 = vrot.slane %v5702, %v5709
      %v5712 = vunpack.c.l.s4 1983009808
      %v5713 = vunpack.c.0.s8 %v5712
      %v5714 = vlaneseq
      %v5715 = vshrl.u32 %v5714, 7
      %v5716 = vsub.s32 %v5713, %v5715
      %v5717 = vrot.slane %v5703, %v5716
      %v5718 = vcombine.low %v3736, %v3898
      %v5719 = vcombine.high %v3736, %v3898
      %v5721 = vunpack.c.l.s4 1983009808
      %v5722 = vunpack.c.0.s8 %v5721
      %v5723 = vlaneseq
      %v5724 = vshrl.u32 %v5723, 7
      %v5725 = vsub.s32 %v5722, %v5724
      %v5726 = vrot.slane %v5718, %v5725
      %v5728 = vunpack.c.l.s4 1983009808
      %v5729 = vunpack.c.0.s8 %v5728
      %v5730 = vlaneseq
      %v5731 = vshrl.u32 %v5730, 7
      %v5732 = vsub.s32 %v5729, %v5731
      %v5733 = vrot.slane %v5719, %v5732
      %v5734 = vcombine.low %v3817, %v3979
      %v5735 = vcombine.high %v3817, %v3979
      %v5737 = vunpack.c.l.s4 1983009808
      %v5738 = vunpack.c.0.s8 %v5737
      %v5739 = vlaneseq
      %v5740 = vshrl.u32 %v5739, 7
      %v5741 = vsub.s32 %v5738, %v5740
      %v5742 = vrot.slane %v5734, %v5741
      %v5744 = vunpack.c.l.s4 1983009808
      %v5745 = vunpack.c.0.s8 %v5744
      %v5746 = vlaneseq
      %v5747 = vshrl.u32 %v5746, 7
      %v5748 = vsub.s32 %v5745, %v5747
      %v5749 = vrot.slane %v5735, %v5748
      %v5750 = vcombine.low %v5694, %v5710
      %v5751 = vcombine.high %v5694, %v5710
      %v5753 = vunpack.c.l.s4 1934713408
      %v5754 = vunpack.c.0.s8 %v5753
      %v5755 = vlaneseq
      %v5756 = vshrl.u32 %v5755, 7
      %v5757 = vsub.s32 %v5754, %v5756
      %v5758 = vrot.slane %v5750, %v5757
      %v5760 = vunpack.c.l.s4 1934713408
      %v5761 = vunpack.c.0.s8 %v5760
      %v5762 = vlaneseq
      %v5763 = vshrl.u32 %v5762, 7
      %v5764 = vsub.s32 %v5761, %v5763
      %v5765 = vrot.slane %v5751, %v5764
      %v5766 = vcombine.low %v5701, %v5717
      %v5767 = vcombine.high %v5701, %v5717
      %v5769 = vunpack.c.l.s4 1934713408
      %v5770 = vunpack.c.0.s8 %v5769
      %v5771 = vlaneseq
      %v5772 = vshrl.u32 %v5771, 7
      %v5773 = vsub.s32 %v5770, %v5772
      %v5774 = vrot.slane %v5766, %v5773
      %v5776 = vunpack.c.l.s4 1934713408
      %v5777 = vunpack.c.0.s8 %v5776
      %v5778 = vlaneseq
      %v5779 = vshrl.u32 %v5778, 7
      %v5780 = vsub.s32 %v5777, %v5779
      %v5781 = vrot.slane %v5767, %v5780
      %v5782 = vcombine.low %v5726, %v5742
      %v5783 = vcombine.high %v5726, %v5742
      %v5785 = vunpack.c.l.s4 1934713408
      %v5786 = vunpack.c.0.s8 %v5785
      %v5787 = vlaneseq
      %v5788 = vshrl.u32 %v5787, 7
      %v5789 = vsub.s32 %v5786, %v5788
      %v5790 = vrot.slane %v5782, %v5789
      %v5792 = vunpack.c.l.s4 1934713408
      %v5793 = vunpack.c.0.s8 %v5792
      %v5794 = vlaneseq
      %v5795 = vshrl.u32 %v5794, 7
      %v5796 = vsub.s32 %v5793, %v5795
      %v5797 = vrot.slane %v5783, %v5796
      %v5798 = vcombine.low %v5733, %v5749
      %v5799 = vcombine.high %v5733, %v5749
      %v5801 = vunpack.c.l.s4 1934713408
      %v5802 = vunpack.c.0.s8 %v5801
      %v5803 = vlaneseq
      %v5804 = vshrl.u32 %v5803, 7
      %v5805 = vsub.s32 %v5802, %v5804
      %v5806 = vrot.slane %v5798, %v5805
      %v5808 = vunpack.c.l.s4 1934713408
      %v5809 = vunpack.c.0.s8 %v5808
      %v5810 = vlaneseq
      %v5811 = vshrl.u32 %v5810, 7
      %v5812 = vsub.s32 %v5809, %v5811
      %v5813 = vrot.slane %v5799, %v5812
      %v5814 = vcombine.low %v5758, %v5790
      %v5815 = vcombine.high %v5758, %v5790
      %v5816 = vcombine.low %v5765, %v5797
      %v5817 = vcombine.high %v5765, %v5797
      %v5818 = vcombine.low %v5774, %v5806
      %v5819 = vcombine.high %v5774, %v5806
      %v5820 = vcombine.low %v5781, %v5813
      %v5821 = vcombine.high %v5781, %v5813
      %v5822 = vcombine.low %v4060, %v4222
      %v5823 = vcombine.high %v4060, %v4222
      %v5825 = vunpack.c.l.s4 1983009808
      %v5826 = vunpack.c.0.s8 %v5825
      %v5827 = vlaneseq
      %v5828 = vshrl.u32 %v5827, 7
      %v5829 = vsub.s32 %v5826, %v5828
      %v5830 = vrot.slane %v5822, %v5829
      %v5832 = vunpack.c.l.s4 1983009808
      %v5833 = vunpack.c.0.s8 %v5832
      %v5834 = vlaneseq
      %v5835 = vshrl.u32 %v5834, 7
      %v5836 = vsub.s32 %v5833, %v5835
      %v5837 = vrot.slane %v5823, %v5836
      %v5838 = vcombine.low %v4141, %v4303
      %v5839 = vcombine.high %v4141, %v4303
      %v5841 = vunpack.c.l.s4 1983009808
      %v5842 = vunpack.c.0.s8 %v5841
      %v5843 = vlaneseq
      %v5844 = vshrl.u32 %v5843, 7
      %v5845 = vsub.s32 %v5842, %v5844
      %v5846 = vrot.slane %v5838, %v5845
      %v5848 = vunpack.c.l.s4 1983009808
      %v5849 = vunpack.c.0.s8 %v5848
      %v5850 = vlaneseq
      %v5851 = vshrl.u32 %v5850, 7
      %v5852 = vsub.s32 %v5849, %v5851
      %v5853 = vrot.slane %v5839, %v5852
      %v5854 = vcombine.low %v4384, %v4546
      %v5855 = vcombine.high %v4384, %v4546
      %v5857 = vunpack.c.l.s4 1983009808
      %v5858 = vunpack.c.0.s8 %v5857
      %v5859 = vlaneseq
      %v5860 = vshrl.u32 %v5859, 7
      %v5861 = vsub.s32 %v5858, %v5860
      %v5862 = vrot.slane %v5854, %v5861
      %v5864 = vunpack.c.l.s4 1983009808
      %v5865 = vunpack.c.0.s8 %v5864
      %v5866 = vlaneseq
      %v5867 = vshrl.u32 %v5866, 7
      %v5868 = vsub.s32 %v5865, %v5867
      %v5869 = vrot.slane %v5855, %v5868
      %v5870 = vcombine.low %v4465, %v4627
      %v5871 = vcombine.high %v4465, %v4627
      %v5873 = vunpack.c.l.s4 1983009808
      %v5874 = vunpack.c.0.s8 %v5873
      %v5875 = vlaneseq
      %v5876 = vshrl.u32 %v5875, 7
      %v5877 = vsub.s32 %v5874, %v5876
      %v5878 = vrot.slane %v5870, %v5877
      %v5880 = vunpack.c.l.s4 1983009808
      %v5881 = vunpack.c.0.s8 %v5880
      %v5882 = vlaneseq
      %v5883 = vshrl.u32 %v5882, 7
      %v5884 = vsub.s32 %v5881, %v5883
      %v5885 = vrot.slane %v5871, %v5884
      %v5886 = vcombine.low %v5830, %v5846
      %v5887 = vcombine.high %v5830, %v5846
      %v5889 = vunpack.c.l.s4 1934713408
      %v5890 = vunpack.c.0.s8 %v5889
      %v5891 = vlaneseq
      %v5892 = vshrl.u32 %v5891, 7
      %v5893 = vsub.s32 %v5890, %v5892
      %v5894 = vrot.slane %v5886, %v5893
      %v5896 = vunpack.c.l.s4 1934713408
      %v5897 = vunpack.c.0.s8 %v5896
      %v5898 = vlaneseq
      %v5899 = vshrl.u32 %v5898, 7
      %v5900 = vsub.s32 %v5897, %v5899
      %v5901 = vrot.slane %v5887, %v5900
      %v5902 = vcombine.low %v5837, %v5853
      %v5903 = vcombine.high %v5837, %v5853
      %v5905 = vunpack.c.l.s4 1934713408
      %v5906 = vunpack.c.0.s8 %v5905
      %v5907 = vlaneseq
      %v5908 = vshrl.u32 %v5907, 7
      %v5909 = vsub.s32 %v5906, %v5908
      %v5910 = vrot.slane %v5902, %v5909
      %v5912 = vunpack.c.l.s4 1934713408
      %v5913 = vunpack.c.0.s8 %v5912
      %v5914 = vlaneseq
      %v5915 = vshrl.u32 %v5914, 7
      %v5916 = vsub.s32 %v5913, %v5915
      %v5917 = vrot.slane %v5903, %v5916
      %v5918 = vcombine.low %v5862, %v5878
      %v5919 = vcombine.high %v5862, %v5878
      %v5921 = vunpack.c.l.s4 1934713408
      %v5922 = vunpack.c.0.s8 %v5921
      %v5923 = vlaneseq
      %v5924 = vshrl.u32 %v5923, 7
      %v5925 = vsub.s32 %v5922, %v5924
      %v5926 = vrot.slane %v5918, %v5925
      %v5928 = vunpack.c.l.s4 1934713408
      %v5929 = vunpack.c.0.s8 %v5928
      %v5930 = vlaneseq
      %v5931 = vshrl.u32 %v5930, 7
      %v5932 = vsub.s32 %v5929, %v5931
      %v5933 = vrot.slane %v5919, %v5932
      %v5934 = vcombine.low %v5869, %v5885
      %v5935 = vcombine.high %v5869, %v5885
      %v5937 = vunpack.c.l.s4 1934713408
      %v5938 = vunpack.c.0.s8 %v5937
      %v5939 = vlaneseq
      %v5940 = vshrl.u32 %v5939, 7
      %v5941 = vsub.s32 %v5938, %v5940
      %v5942 = vrot.slane %v5934, %v5941
      %v5944 = vunpack.c.l.s4 1934713408
      %v5945 = vunpack.c.0.s8 %v5944
      %v5946 = vlaneseq
      %v5947 = vshrl.u32 %v5946, 7
      %v5948 = vsub.s32 %v5945, %v5947
      %v5949 = vrot.slane %v5935, %v5948
      %v5950 = vcombine.low %v5894, %v5926
      %v5951 = vcombine.high %v5894, %v5926
      %v5952 = vcombine.low %v5901, %v5933
      %v5953 = vcombine.high %v5901, %v5933
      %v5954 = vcombine.low %v5910, %v5942
      %v5955 = vcombine.high %v5910, %v5942
      %v5956 = vcombine.low %v5917, %v5949
      %v5957 = vcombine.high %v5917, %v5949
      %v5958 = vcombine.low %v4708, %v4870
      %v5959 = vcombine.high %v4708, %v4870
      %v5961 = vunpack.c.l.s4 1983009808
      %v5962 = vunpack.c.0.s8 %v5961
      %v5963 = vlaneseq
      %v5964 = vshrl.u32 %v5963, 7
      %v5965 = vsub.s32 %v5962, %v5964
      %v5966 = vrot.slane %v5958, %v5965
      %v5968 = vunpack.c.l.s4 1983009808
      %v5969 = vunpack.c.0.s8 %v5968
      %v5970 = vlaneseq
      %v5971 = vshrl.u32 %v5970, 7
      %v5972 = vsub.s32 %v5969, %v5971
      %v5973 = vrot.slane %v5959, %v5972
      %v5974 = vcombine.low %v4789, %v4951
      %v5975 = vcombine.high %v4789, %v4951
      %v5977 = vunpack.c.l.s4 1983009808
      %v5978 = vunpack.c.0.s8 %v5977
      %v5979 = vlaneseq
      %v5980 = vshrl.u32 %v5979, 7
      %v5981 = vsub.s32 %v5978, %v5980
      %v5982 = vrot.slane %v5974, %v5981
      %v5984 = vunpack.c.l.s4 1983009808
      %v5985 = vunpack.c.0.s8 %v5984
      %v5986 = vlaneseq
      %v5987 = vshrl.u32 %v5986, 7
      %v5988 = vsub.s32 %v5985, %v5987
      %v5989 = vrot.slane %v5975, %v5988
      %v5990 = vcombine.low %v5032, %v5194
      %v5991 = vcombine.high %v5032, %v5194
      %v5993 = vunpack.c.l.s4 1983009808
      %v5994 = vunpack.c.0.s8 %v5993
      %v5995 = vlaneseq
      %v5996 = vshrl.u32 %v5995, 7
      %v5997 = vsub.s32 %v5994, %v5996
      %v5998 = vrot.slane %v5990, %v5997
      %v6000 = vunpack.c.l.s4 1983009808
      %v6001 = vunpack.c.0.s8 %v6000
      %v6002 = vlaneseq
      %v6003 = vshrl.u32 %v6002, 7
      %v6004 = vsub.s32 %v6001, %v6003
      %v6005 = vrot.slane %v5991, %v6004
      %v6006 = vcombine.low %v5113, %v5275
      %v6007 = vcombine.high %v5113, %v5275
      %v6009 = vunpack.c.l.s4 1983009808
      %v6010 = vunpack.c.0.s8 %v6009
      %v6011 = vlaneseq
      %v6012 = vshrl.u32 %v6011, 7
      %v6013 = vsub.s32 %v6010, %v6012
      %v6014 = vrot.slane %v6006, %v6013
      %v6016 = vunpack.c.l.s4 1983009808
      %v6017 = vunpack.c.0.s8 %v6016
      %v6018 = vlaneseq
      %v6019 = vshrl.u32 %v6018, 7
      %v6020 = vsub.s32 %v6017, %v6019
      %v6021 = vrot.slane %v6007, %v6020
      %v6022 = vcombine.low %v5966, %v5982
      %v6023 = vcombine.high %v5966, %v5982
      %v6025 = vunpack.c.l.s4 1934713408
      %v6026 = vunpack.c.0.s8 %v6025
      %v6027 = vlaneseq
      %v6028 = vshrl.u32 %v6027, 7
      %v6029 = vsub.s32 %v6026, %v6028
      %v6030 = vrot.slane %v6022, %v6029
      %v6032 = vunpack.c.l.s4 1934713408
      %v6033 = vunpack.c.0.s8 %v6032
      %v6034 = vlaneseq
      %v6035 = vshrl.u32 %v6034, 7
      %v6036 = vsub.s32 %v6033, %v6035
      %v6037 = vrot.slane %v6023, %v6036
      %v6038 = vcombine.low %v5973, %v5989
      %v6039 = vcombine.high %v5973, %v5989
      %v6041 = vunpack.c.l.s4 1934713408
      %v6042 = vunpack.c.0.s8 %v6041
      %v6043 = vlaneseq
      %v6044 = vshrl.u32 %v6043, 7
      %v6045 = vsub.s32 %v6042, %v6044
      %v6046 = vrot.slane %v6038, %v6045
      %v6048 = vunpack.c.l.s4 1934713408
      %v6049 = vunpack.c.0.s8 %v6048
      %v6050 = vlaneseq
      %v6051 = vshrl.u32 %v6050, 7
      %v6052 = vsub.s32 %v6049, %v6051
      %v6053 = vrot.slane %v6039, %v6052
      %v6054 = vcombine.low %v5998, %v6014
      %v6055 = vcombine.high %v5998, %v6014
      %v6057 = vunpack.c.l.s4 1934713408
      %v6058 = vunpack.c.0.s8 %v6057
      %v6059 = vlaneseq
      %v6060 = vshrl.u32 %v6059, 7
      %v6061 = vsub.s32 %v6058, %v6060
      %v6062 = vrot.slane %v6054, %v6061
      %v6064 = vunpack.c.l.s4 1934713408
      %v6065 = vunpack.c.0.s8 %v6064
      %v6066 = vlaneseq
      %v6067 = vshrl.u32 %v6066, 7
      %v6068 = vsub.s32 %v6065, %v6067
      %v6069 = vrot.slane %v6055, %v6068
      %v6070 = vcombine.low %v6005, %v6021
      %v6071 = vcombine.high %v6005, %v6021
      %v6073 = vunpack.c.l.s4 1934713408
      %v6074 = vunpack.c.0.s8 %v6073
      %v6075 = vlaneseq
      %v6076 = vshrl.u32 %v6075, 7
      %v6077 = vsub.s32 %v6074, %v6076
      %v6078 = vrot.slane %v6070, %v6077
      %v6080 = vunpack.c.l.s4 1934713408
      %v6081 = vunpack.c.0.s8 %v6080
      %v6082 = vlaneseq
      %v6083 = vshrl.u32 %v6082, 7
      %v6084 = vsub.s32 %v6081, %v6083
      %v6085 = vrot.slane %v6071, %v6084
      %v6086 = vcombine.low %v6030, %v6062
      %v6087 = vcombine.high %v6030, %v6062
      %v6088 = vcombine.low %v6037, %v6069
      %v6089 = vcombine.high %v6037, %v6069
      %v6090 = vcombine.low %v6046, %v6078
      %v6091 = vcombine.high %v6046, %v6078
      %v6092 = vcombine.low %v6053, %v6085
      %v6093 = vcombine.high %v6053, %v6085
      %6097 = vrot.lane.b32.xlu0 %v5407, 16
      %v6098 = vpop.permute.xlu0 %6097
      %6099 = vrot.lane.b32.xlu0 %v5543, 16
      %v6100 = vpop.permute.xlu0 %6099
      %6101 = vrot.lane.b32.xlu0 %v5679, 16
      %v6102 = vpop.permute.xlu0 %6101
      %6109 = vrot.lane.b32.xlu0 %v5408, 32
      %v6110 = vpop.permute.xlu0 %6109
      %6111 = vrot.lane.b32.xlu0 %v5544, 32
      %v6112 = vpop.permute.xlu0 %6111
      %6113 = vrot.lane.b32.xlu0 %v5680, 32
      %v6114 = vpop.permute.xlu0 %6113
      %6121 = vrot.lane.b32.xlu0 %v5409, 48
      %v6122 = vpop.permute.xlu0 %6121
      %6123 = vrot.lane.b32.xlu0 %v5545, 48
      %v6124 = vpop.permute.xlu0 %6123
      %6125 = vrot.lane.b32.xlu0 %v5681, 48
      %v6126 = vpop.permute.xlu0 %6125
      %6133 = vrot.lane.b32.xlu0 %v5410, 64
      %v6134 = vpop.permute.xlu0 %6133
      %6135 = vrot.lane.b32.xlu0 %v5546, 64
      %v6136 = vpop.permute.xlu0 %6135
      %6137 = vrot.lane.b32.xlu0 %v5682, 64
      %v6138 = vpop.permute.xlu0 %6137
      %6145 = vrot.lane.b32.xlu0 %v5411, 80
      %v6146 = vpop.permute.xlu0 %6145
      %6147 = vrot.lane.b32.xlu0 %v5547, 80
      %v6148 = vpop.permute.xlu0 %6147
      %6149 = vrot.lane.b32.xlu0 %v5683, 80
      %v6150 = vpop.permute.xlu0 %6149
      %6157 = vrot.lane.b32.xlu0 %v5412, 96
      %v6158 = vpop.permute.xlu0 %6157
      %6159 = vrot.lane.b32.xlu0 %v5548, 96
      %v6160 = vpop.permute.xlu0 %6159
      %6161 = vrot.lane.b32.xlu0 %v5684, 96
      %v6162 = vpop.permute.xlu0 %6161
      %6169 = vrot.lane.b32.xlu0 %v5413, 112
      %v6170 = vpop.permute.xlu0 %6169
      %6171 = vrot.lane.b32.xlu0 %v5549, 112
      %v6172 = vpop.permute.xlu0 %6171
      %6173 = vrot.lane.b32.xlu0 %v5685, 112
      %v6174 = vpop.permute.xlu0 %6173
      %6181 = vrot.lane.b32.xlu0 %v5815, 16
      %v6182 = vpop.permute.xlu0 %6181
      %6183 = vrot.lane.b32.xlu0 %v5951, 16
      %v6184 = vpop.permute.xlu0 %6183
      %6185 = vrot.lane.b32.xlu0 %v6087, 16
      %v6186 = vpop.permute.xlu0 %6185
      %6193 = vrot.lane.b32.xlu0 %v5816, 32
      %v6194 = vpop.permute.xlu0 %6193
      %6195 = vrot.lane.b32.xlu0 %v5952, 32
      %v6196 = vpop.permute.xlu0 %6195
      %6197 = vrot.lane.b32.xlu0 %v6088, 32
      %v6198 = vpop.permute.xlu0 %6197
      %6205 = vrot.lane.b32.xlu0 %v5817, 48
      %v6206 = vpop.permute.xlu0 %6205
      %6207 = vrot.lane.b32.xlu0 %v5953, 48
      %v6208 = vpop.permute.xlu0 %6207
      %6209 = vrot.lane.b32.xlu0 %v6089, 48
      %v6210 = vpop.permute.xlu0 %6209
      %6217 = vrot.lane.b32.xlu0 %v5818, 64
      %v6218 = vpop.permute.xlu0 %6217
      %6219 = vrot.lane.b32.xlu0 %v5954, 64
      %v6220 = vpop.permute.xlu0 %6219
      %6221 = vrot.lane.b32.xlu0 %v6090, 64
      %v6222 = vpop.permute.xlu0 %6221
      %6229 = vrot.lane.b32.xlu0 %v5819, 80
      %v6230 = vpop.permute.xlu0 %6229
      %6231 = vrot.lane.b32.xlu0 %v5955, 80
      %v6232 = vpop.permute.xlu0 %6231
      %6233 = vrot.lane.b32.xlu0 %v6091, 80
      %v6234 = vpop.permute.xlu0 %6233
      %6241 = vrot.lane.b32.xlu0 %v5820, 96
      %v6242 = vpop.permute.xlu0 %6241
      %6243 = vrot.lane.b32.xlu0 %v5956, 96
      %v6244 = vpop.permute.xlu0 %6243
      %6245 = vrot.lane.b32.xlu0 %v6092, 96
      %v6246 = vpop.permute.xlu0 %6245
      %6253 = vrot.lane.b32.xlu0 %v5821, 112
      %v6254 = vpop.permute.xlu0 %6253
      %6255 = vrot.lane.b32.xlu0 %v5957, 112
      %v6256 = vpop.permute.xlu0 %6255
      %6257 = vrot.lane.b32.xlu0 %v6093, 112
      %v6258 = vpop.permute.xlu0 %6257
      %v6262 = vsel %vm1341, %v5406, %v6098
      %v6263 = vsel %vm1341, %v5542, %v6100
      %v6264 = vsel %vm1341, %v5678, %v6102
      %vm6265 = vcmask 261120
      %v6266 = vsel %vm6265, %v6262, %v6110
      %v6267 = vsel %vm6265, %v6263, %v6112
      %v6268 = vsel %vm6265, %v6264, %v6114
      %vm6269 = vcmask 392192
      %v6270 = vsel %vm6269, %v6266, %v6122
      %v6271 = vsel %vm6269, %v6267, %v6124
      %v6272 = vsel %vm6269, %v6268, %v6126
      %vm6273 = vcmask 523264
      %v6274 = vsel %vm6273, %v6270, %v6134
      %v6275 = vsel %vm6273, %v6271, %v6136
      %v6276 = vsel %vm6273, %v6272, %v6138
      %vm6277 = vcmask 654336
      %v6278 = vsel %vm6277, %v6274, %v6146
      %v6279 = vsel %vm6277, %v6275, %v6148
      %v6280 = vsel %vm6277, %v6276, %v6150
      %vm6281 = vcmask 785408
      %v6282 = vsel %vm6281, %v6278, %v6158
      %v6283 = vsel %vm6281, %v6279, %v6160
      %v6284 = vsel %vm6281, %v6280, %v6162
      %vm6285 = vcmask 916480
      %v6286 = vsel %vm6285, %v6282, %v6170
      %v6287 = vsel %vm6285, %v6283, %v6172
      %v6288 = vsel %vm6285, %v6284, %v6174
      %v6289 = vsel %vm1341, %v5814, %v6182
      %v6290 = vsel %vm1341, %v5950, %v6184
      %v6291 = vsel %vm1341, %v6086, %v6186
      %v6292 = vsel %vm6265, %v6289, %v6194
      %v6293 = vsel %vm6265, %v6290, %v6196
      %v6294 = vsel %vm6265, %v6291, %v6198
      %v6295 = vsel %vm6269, %v6292, %v6206
      %v6296 = vsel %vm6269, %v6293, %v6208
      %v6297 = vsel %vm6269, %v6294, %v6210
      %v6298 = vsel %vm6273, %v6295, %v6218
      %v6299 = vsel %vm6273, %v6296, %v6220
      %v6300 = vsel %vm6273, %v6297, %v6222
      %v6301 = vsel %vm6277, %v6298, %v6230
      %v6302 = vsel %vm6277, %v6299, %v6232
      %v6303 = vsel %vm6277, %v6300, %v6234
      %v6304 = vsel %vm6281, %v6301, %v6242
      %v6305 = vsel %vm6281, %v6302, %v6244
      %v6306 = vsel %vm6281, %v6303, %v6246
      %v6307 = vsel %vm6285, %v6304, %v6254
      %v6308 = vsel %vm6285, %v6305, %v6256
      %v6309 = vsel %vm6285, %v6306, %v6258
      %v6310 = vmul.f32 %v339, 0.01
      %v6311 = vmul.f32 %v340, 0.01
      %v6312 = vmul.f32 %v341, 0.01
      %v6313 = vmul.f32 %v342, 0.01
      %v6314 = vmul.f32 %v343, 0.01
      %v6315 = vmul.f32 %v344, 0.01
      %v6316 = vadd.f32 %v330, %v6310
      %v6317 = vadd.f32 %v331, %v6311
      %v6318 = vadd.f32 %v332, %v6312
      %v6319 = vadd.f32 %v333, %v6313
      %v6320 = vadd.f32 %v334, %v6314
      %v6321 = vadd.f32 %v335, %v6315
      %v6322 = vmax.f32 %v6316, 0.0
      %v6323 = vmax.f32 %v6317, 0.0
      %v6324 = vmax.f32 %v6318, 0.0
      %v6325 = vmax.f32 %v6319, 0.0
      %v6326 = vmax.f32 %v6320, 0.0
      %v6327 = vmax.f32 %v6321, 0.0
      %v6328 = vmin.f32 %v6322, 1.0
      %v6329 = vmin.f32 %v6323, 1.0
      %v6330 = vmin.f32 %v6324, 1.0
      %v6331 = vmin.f32 %v6325, 1.0
      %v6332 = vmin.f32 %v6326, 1.0
      %v6333 = vmin.f32 %v6327, 1.0
      %vm6334 = vcmp.ge.f32.partialorder %v339, 0.0
      %vm6335 = vcmp.ge.f32.partialorder %v340, 0.0
      %vm6336 = vcmp.ge.f32.partialorder %v341, 0.0
      %vm6337 = vcmp.ge.f32.partialorder %v342, 0.0
      %vm6338 = vcmp.ge.f32.partialorder %v343, 0.0
      %vm6339 = vcmp.ge.f32.partialorder %v344, 0.0
      %v6340 = vsel %vm6334, %v339, %v330
      %v6341 = vsel %vm6335, %v340, %v331
      %v6342 = vsel %vm6336, %v341, %v332
      %v6343 = vsel %vm6337, %v342, %v333
      %v6344 = vsel %vm6338, %v343, %v334
      %v6345 = vsel %vm6339, %v344, %v335
      %vm6346 = vcmp.eq.s32.totalorder %v336, 1
      %vm6347 = vcmp.eq.s32.totalorder %v337, 1
      %vm6348 = vcmp.eq.s32.totalorder %v338, 1
      %v6349 = vsel %vm6346, 1, 0
      %v6350 = vsel %vm6347, 1, 0
      %v6351 = vsel %vm6348, 1, 0
      %6352 = vset.pattern.permute.xlu0 0
      %6353 = vperm.xlu0 %6352, %v6349
      %v6354 = vpop.permute.xlu0 %6353
      %6355 = vset.pattern.permute.xlu0 0
      %6356 = vperm.xlu0 %6355, %v6350
      %v6357 = vpop.permute.xlu0 %6356
      %6358 = vset.pattern.permute.xlu0 0
      %6359 = vperm.xlu0 %6358, %v6351
      %v6360 = vpop.permute.xlu0 %6359
      %vm6361 = vcmp.eq.s32.totalorder %v6354, 1
      %vm6362 = vcmp.eq.s32.totalorder %v6357, 1
      %vm6363 = vcmp.eq.s32.totalorder %v6360, 1
      %v6364 = vsel %vm6361, %v6286, %v330
      %v6365 = vsel %vm6361, %v6307, %v331
      %v6366 = vsel %vm6362, %v6287, %v332
      %v6367 = vsel %vm6362, %v6308, %v333
      %v6368 = vsel %vm6363, %v6288, %v334
      %v6369 = vsel %vm6363, %v6309, %v335
      %vm6370 = vcmp.eq.s32.totalorder %v336, 2
      %vm6371 = vcmp.eq.s32.totalorder %v337, 2
      %vm6372 = vcmp.eq.s32.totalorder %v338, 2
      %v6373 = vsel %vm6370, 1, 0
      %v6374 = vsel %vm6371, 1, 0
      %v6375 = vsel %vm6372, 1, 0
      %6376 = vset.pattern.permute.xlu0 0
      %6377 = vperm.xlu0 %6376, %v6373
      %v6378 = vpop.permute.xlu0 %6377
      %6379 = vset.pattern.permute.xlu0 0
      %6380 = vperm.xlu0 %6379, %v6374
      %v6381 = vpop.permute.xlu0 %6380
      %6382 = vset.pattern.permute.xlu0 0
      %6383 = vperm.xlu0 %6382, %v6375
      %v6384 = vpop.permute.xlu0 %6383
      %vm6385 = vcmp.eq.s32.totalorder %v6378, 1
      %vm6386 = vcmp.eq.s32.totalorder %v6381, 1
      %vm6387 = vcmp.eq.s32.totalorder %v6384, 1
      %v6388 = vsel %vm6385, %v6328, %v6364
      %v6389 = vsel %vm6385, %v6329, %v6365
      %v6390 = vsel %vm6386, %v6330, %v6366
      %v6391 = vsel %vm6386, %v6331, %v6367
      %v6392 = vsel %vm6387, %v6332, %v6368
      %v6393 = vsel %vm6387, %v6333, %v6369
      %vm6394 = vcmp.eq.s32.totalorder %v336, 3
      %vm6395 = vcmp.eq.s32.totalorder %v337, 3
      %vm6396 = vcmp.eq.s32.totalorder %v338, 3
      %v6397 = vsel %vm6394, 1, 0
      %v6398 = vsel %vm6395, 1, 0
      %v6399 = vsel %vm6396, 1, 0
      %6400 = vset.pattern.permute.xlu0 0
      %6401 = vperm.xlu0 %6400, %v6397
      %v6402 = vpop.permute.xlu0 %6401
      %6403 = vset.pattern.permute.xlu0 0
      %6404 = vperm.xlu0 %6403, %v6398
      %v6405 = vpop.permute.xlu0 %6404
      %6406 = vset.pattern.permute.xlu0 0
      %6407 = vperm.xlu0 %6406, %v6399
      %v6408 = vpop.permute.xlu0 %6407
      %vm6409 = vcmp.eq.s32.totalorder %v6402, 1
      %vm6410 = vcmp.eq.s32.totalorder %v6405, 1
      %vm6411 = vcmp.eq.s32.totalorder %v6408, 1
      %v6412 = vsel %vm6409, %v6340, %v6388
      %v6413 = vsel %vm6409, %v6341, %v6389
      %v6414 = vsel %vm6410, %v6342, %v6390
      %v6415 = vsel %vm6410, %v6343, %v6391
      %v6416 = vsel %vm6411, %v6344, %v6392
      %v6417 = vsel %vm6411, %v6345, %v6393
      %6418 = vst [vmem:[%s328] sm:$0xff] %v6412
      %6419 = vst [vmem:[%s328 + $0x8] sm:$0xff] %v6413
      %6420 = vst [vmem:[%s328 + $0x10] sm:$0xff] %v6414
      %6421 = vst [vmem:[%s328 + $0x18] sm:$0xff] %v6415
      %6422 = vst [vmem:[%s328 + $0x20] sm:$0xff] %v6416
      %6423 = vst [vmem:[%s328 + $0x28] sm:$0xff] %v6417
      %s6424 = smul.u32 3, %s16
      %p6425 = scmp.lt.s32.totalorder %s6424, 5
      %s6426 = scalar_select %p6425, %s6424, 5
      %s6427 = smul.addr %s6426, 2
      %s6428 = smul.addr %s6427, 8
      %s6429 = scalar_lea.vmem %s5, %s6428
      // Predicated region
      $region41: #{_mixed_noise_apply.3} parent=39 // pred_check
        %p6430 = pneg %p164
      $region42: #{_mixed_noise_apply.3} parent=39 // pred_check_branch
        %6432 = sbr.rel (%p6430) target = $region44
      $region43: #{_mixed_noise_apply.3} parent=39 // pred_region
        %s6433 = smul.u32 3, %s16
      $region44: #{_mixed_noise_apply.3} parent=39 // pred_fallthru
        _
    $region40: #{_mixed_noise_apply.3} parent=5 // pred_fallthru
      _
    %p6434 = scmp.le.s32.totalorder 2, %s11
    // Predicated region
    $region45: #{_mixed_noise_apply.3} parent=5 // pred_check
      %p6435 = pneg %p6434
    $region46: #{_mixed_noise_apply.3} parent=5 // pred_check_branch
      %6437 = sbr.rel (%p6435) target = $region48
    $region47: #{_mixed_noise_apply.3} parent=5 // pred_region
      %s6438 = ssub.s32 %s11, 2
      // Predicated region
      $region49: #{_mixed_noise_apply.3} parent=47 // pred_check
        %p6439 = pneg %p170
      $region50: #{_mixed_noise_apply.3} parent=47 // pred_check_branch
        %6441 = sbr.rel (%p6439) target = $region52
      $region51: #{_mixed_noise_apply.3} parent=47 // pred_region
        %s6442 = smul.u32 3, %s17
        %p6443 = scmp.lt.s32.totalorder %s6442, 5
        %s6444 = scalar_select %p6443, %s6442, 5
        %s6445 = smul.addr %s6444, 2
        %s6446 = smul.addr %s6445, 8
        %s6447 = scalar_lea.vmem %s5, %s6446
      $region52: #{_mixed_noise_apply.3} parent=47 // pred_fallthru
        _
    $region48: #{_mixed_noise_apply.3} parent=5 // pred_fallthru
      _
  $region6: #{_mixed_noise_apply.3} parent=0 // loop_footer
    %s15 = sadd.s32 1, %s11
  $region7: #{_mixed_noise_apply.3} parent=0 // loop_footer_branch
    %10 = sbr.rel target = $region3
  $region8: #{_mixed_noise_apply.3} parent=0 // loop_exit
    _

</llo_original>
